<compile_context>
chip_gen: v6e
topology: v6e:2x2x1
jax: 0.10.0
libtpu: 0.0.40
codegen_flags: <defaults>
</compile_context>

<pallas_src>
import functools

import numpy as np
import jax
import jax.numpy as jnp
from jax.experimental import pallas as pl
from jax.experimental.pallas import tpu as pltpu

LANES = 128                     # lane padding for the FINAL output slab only
# Fixed architecture constants of the module.
K1, S1 = 8, 4
K2, S2 = 4, 2
K3, S3 = 3, 1
C1, C2, C3 = 32, 64, 64


# ---------------------------------------------------------------------------
# Fused Pallas kernel (built per static config: batch / spatial / n_actions)
# ---------------------------------------------------------------------------
def _make_fused_kernel(N, OH1, OW1, OH2, OW2, n_actions):
    R1 = N * OH1 * OW1          # conv1 output rows (BN1 sample count)
    R2 = N * OH2 * OW2          # conv2 output rows (BN2 sample count)
    half1 = R1 // 2             # odd-parity rows start here in the h1 scratch
    img1 = OH1 * OW1 // 2       # rows per image inside one parity half
    row1 = OW1 // 2             # rows per spatial row inside one parity half
    npos3 = K3 * K3             # conv3 kernel positions (== OH2*OW2, 1x1 output)

    def bn_relu(y, n_rows, g, b):
        # Training-mode BatchNorm (biased variance), centered two-pass statistics.
        inv = 1.0 / n_rows
        mean = jnp.sum(y, axis=0, keepdims=True) * inv
        d = y - mean
        var = jnp.sum(d * d, axis=0, keepdims=True) * inv
        return jnp.maximum(d * jax.lax.rsqrt(var + 1e-5) * g + b, 0.0)

    def kernel(p1_ref, w1_ref, g1_ref, b1_ref, g2_ref, b2_ref, g3_ref, b3_ref,
               bh1_ref, bh2_ref, w2_hbm, w3_hbm, wh1_hbm, wh2_hbm,
               o_ref,
               h1_ref, w2_v, w3_v, wh1_v, wh2_v, sem):
        cdt = w1_ref.dtype                       # matmul operand dtype (bf16 or f32)

        # Kick off the later weights' HBM->VMEM DMAs; they overlap conv1's compute.
        copies = [pltpu.make_async_copy(w2_hbm, w2_v, sem.at[0]),
                  pltpu.make_async_copy(w3_hbm, w3_v, sem.at[1]),
                  pltpu.make_async_copy(wh1_hbm, wh1_v, sem.at[2]),
                  pltpu.make_async_copy(wh2_hbm, wh2_v, sem.at[3])]
        for c in copies:
            c.start()

        # ---- conv1: host-built (parity-ordered) im2col patches -> matmul + BN + ReLU.
        y1 = jnp.dot(p1_ref[...], w1_ref[...], preferred_element_type=jnp.float32)
        h1_ref[...] = bn_relu(y1, R1, g1_ref[...], b1_ref[...])

        # ---- conv2: in-kernel im2col.  Because h1 rows are split by column parity and
        # the stride is 2, the OW2 output columns of one (n, oi, ki, kj) map to OW2
        # CONSECUTIVE rows of the parity half selected by kj.
        copies[0].wait()
        w2 = w2_v[...]
        blocks = []
        for n in range(N):
            for oi in range(OH2):
                pieces = []
                for ki in range(K2):
                    for kj in range(K2):
                        start = ((kj % 2) * half1 + n * img1
                                 + (S2 * oi + ki) * row1 + kj // 2)
                        pieces.append(h1_ref[pl.ds(start, OW2), :])      # [OW2, C1]
                patch = jnp.concatenate(pieces, axis=1).astype(cdt)      # [OW2, K2*K2*C1]
                blocks.append(jnp.dot(patch, w2,
                                      preferred_element_type=jnp.float32))
        y2 = jnp.concatenate(blocks, axis=0)                             # [R2, C2]
        h2 = bn_relu(y2, R2, g2_ref[...], b2_ref[...])

        # ---- conv3 (1x1 spatial output): its patch for image n is ALL of h2[n],
        # flattened in (ki, kj, c) order == h2's own (oi, oj, c) row order.
        copies[1].wait()
        rows = []
        for n in range(N):
            rows.append(jnp.concatenate(
                [h2[n * OH2 * OW2 + p: n * OH2 * OW2 + p + 1, :]
                 for p in range(npos3)], axis=1))                        # [1, 9*C2]
        p3 = jnp.concatenate(rows, axis=0).astype(cdt)                   # [N, 576]
        y3 = jnp.dot(p3, w3_v[...], preferred_element_type=jnp.float32)
        flat = bn_relu(y3, N, g3_ref[...], b3_ref[...])                  # [N, C3] == FC in

        # ---- dueling head: merged fc1 (adv||val) and block-diag fc2, padded to 128 lanes.
        copies[2].wait()
        h = jnp.maximum(
            jnp.dot(flat.astype(cdt), wh1_v[...],
                    preferred_element_type=jnp.float32) + bh1_ref[...], 0.0)
        copies[3].wait()
        z = jnp.dot(h.astype(cdt), wh2_v[...],
                    preferred_element_type=jnp.float32) + bh2_ref[...]
        adv_mean = jnp.sum(z[:, :n_actions], axis=1, keepdims=True) * (1.0 / n_actions)
        val = z[:, n_actions:n_actions + 1]
        # Lane-dense [N, 128] store; cols [:n_actions] hold Q(s, a), rest is don't-care.
        o_ref[...] = z + (val - adv_mean)

    return kernel


# ---------------------------------------------------------------------------
# Host-side glue
# ---------------------------------------------------------------------------
def _pad_axis(a, size, axis):
    pad = size - a.shape[axis]
    if pad <= 0:
        return a
    cfg = [(0, 0)] * a.ndim
    cfg[axis] = (0, pad)
    return jnp.pad(a, cfg)


def _im2col_parity(x, k, s):
    """x: [N, H, W, C] -> conv1 patches with rows ordered (col-parity, n, oh, ow//2).

    Patch columns are ordered (kh, kw, c).  The parity split is what makes the
    in-kernel conv2 im2col a contiguous row gather.
    """
    n, h, w, c = x.shape
    oh = (h - k) // s + 1
    ow = (w - k) // s + 1
    assert ow % 2 == 0, "parity-split im2col needs an even conv1 output width"
    cols = []
    for i in range(k):
        for j in range(k):
            cols.append(x[:, i:i + s * oh:s, j:j + s * ow:s, :])
    p = jnp.stack(cols, axis=3).reshape(n, oh, ow, k * k * c)
    even = p[:, :, 0::2, :].reshape(n * oh * (ow // 2), k * k * c)
    odd = p[:, :, 1::2, :].reshape(n * oh * (ow // 2), k * k * c)
    return jnp.concatenate([even, odd], axis=0), oh, ow


def dueling_dqn_forward(packed, x, n_actions):
    """x: [N, C, H, W] (PyTorch NCHW).  Returns Q-values [N, n_actions]."""
    cdt = packed["w1"].dtype
    x = jnp.transpose(x, (0, 2, 3, 1)).astype(cdt)     # NCHW -> NHWC once, compute dtype
    n = x.shape[0]

    p1, oh1, ow1 = _im2col_parity(x, K1, S1)
    oh2, ow2 = (oh1 - K2) // S2 + 1, (ow1 - K2) // S2 + 1
    oh3, ow3 = (oh2 - K3) // S3 + 1, (ow2 - K3) // S3 + 1
    assert oh3 == 1 and ow3 == 1, "fused conv3+head assumes a 1x1 conv3 output"

    kernel = _make_fused_kernel(n, oh1, ow1, oh2, ow2, n_actions)
    vmem = pl.BlockSpec(memory_space=pltpu.MemorySpace.VMEM)
    hbm = pl.BlockSpec(memory_space=pl.ANY)             # staged manually in-kernel

    q = pl.pallas_call(
        kernel,
        out_shape=jax.ShapeDtypeStruct((n, LANES), jnp.float32),
        in_specs=[vmem] * 10 + [hbm] * 4,
        out_specs=vmem,
        scratch_shapes=[
            pltpu.VMEM((n * oh1 * ow1, C1), jnp.float32),   # conv1 output (parity rows)
            pltpu.VMEM(packed["w2"].shape, cdt),            # staged weights
            pltpu.VMEM(packed["w3"].shape, cdt),
            pltpu.VMEM(packed["wh1"].shape, cdt),
            pltpu.VMEM(packed["wh2"].shape, cdt),
            pltpu.SemaphoreType.DMA((4,)),
        ],
    )(p1, packed["w1"], packed["g1"], packed["be1"],
      packed["g2"], packed["be2"], packed["g3"], packed["be3"],
      packed["bh1"], packed["bh2"],
      packed["w2"], packed["w3"], packed["wh1"], packed["wh2"])
    return q[:, :n_actions]


# ---------------------------------------------------------------------------
# Parameter packing (done once).  No channel padding on contraction dims; only
# the head's OUTPUT is padded to 128 lanes.  Conv biases are dropped on purpose:
# training-mode BatchNorm's mean subtraction cancels any per-channel constant.
# ---------------------------------------------------------------------------
def pack_params(raw, n_actions, weight_dtype=jnp.bfloat16):
    wd = weight_dtype

    def pack_conv(w):                                   # OIHW -> [KH*KW*Cin, Cout]
        o, i, kh, kw = w.shape
        return jnp.transpose(w, (2, 3, 1, 0)).reshape(kh * kw * i, o).astype(wd)

    def bnvec(v):
        return v.reshape(1, -1).astype(jnp.float32)

    a = n_actions
    # Dueling head, merged: fc1 outputs concatenated, fc2 block-diagonal.
    wh1 = jnp.concatenate([raw["wa1"], raw["wv1"]], axis=1).astype(wd)        # [64, 1024]
    bh1 = jnp.concatenate([raw["ba1"], raw["bv1"]], axis=1)                   # [1, 1024]
    top = jnp.concatenate([raw["wa2"], jnp.zeros((512, 1), jnp.float32)], axis=1)
    bot = jnp.concatenate([jnp.zeros((512, a), jnp.float32), raw["wv2"]], axis=1)
    wh2 = _pad_axis(jnp.concatenate([top, bot], axis=0), LANES, 1).astype(wd)  # [1024, 128]
    bh2 = _pad_axis(jnp.concatenate([raw["ba2"], raw["bv2"]], axis=1), LANES, 1)

    return dict(
        w1=pack_conv(raw["w1"]), g1=bnvec(raw["g1"]), be1=bnvec(raw["be1"]),
        w2=pack_conv(raw["w2"]), g2=bnvec(raw["g2"]), be2=bnvec(raw["be2"]),
        w3=pack_conv(raw["w3"]), g3=bnvec(raw["g3"]), be3=bnvec(raw["be3"]),
        wh1=wh1, bh1=bh1, wh2=wh2, bh2=bh2,
    )


# ---------------------------------------------------------------------------
# Deterministic parameter init (torch-style layouts for the reference)
# ---------------------------------------------------------------------------
def init_params(key, in_channels, n_actions, conv_out_size):
    ks = jax.random.split(key, 20)

    def u(k, shape, fan_in):
        bound = 1.0 / np.sqrt(fan_in)
        return jax.random.uniform(k, shape, jnp.float32, -bound, bound)

    def bn(kg, kb, c):
        # Non-trivial gamma/beta so the affine path is exercised by the test.
        return (jax.random.uniform(kg, (c,), jnp.float32, 0.5, 1.5),
                jax.random.uniform(kb, (c,), jnp.float32, -0.5, 0.5))

    g1, be1 = bn(ks[14], ks[15], C1)
    g2, be2 = bn(ks[16], ks[17], C2)
    g3, be3 = bn(ks[18], ks[19], C3)
    return dict(
        w1=u(ks[0], (C1, in_channels, K1, K1), in_channels * K1 * K1),
        b1=u(ks[1], (C1,), in_channels * K1 * K1), g1=g1, be1=be1,
        w2=u(ks[2], (C2, C1, K2, K2), C1 * K2 * K2),
        b2=u(ks[3], (C2,), C1 * K2 * K2), g2=g2, be2=be2,
        w3=u(ks[4], (C3, C2, K3, K3), C2 * K3 * K3),
        b3=u(ks[5], (C3,), C2 * K3 * K3), g3=g3, be3=be3,
        # FC weights stored [in, out] (transposed vs torch) with [1, out] biases.
        wa1=u(ks[6], (conv_out_size, 512), conv_out_size),
        ba1=u(ks[7], (1, 512), conv_out_size),
        wa2=u(ks[8], (512, n_actions), 512),
        ba2=u(ks[9], (1, n_actions), 512),
        wv1=u(ks[10], (conv_out_size, 512), conv_out_size),
        bv1=u(ks[11], (1, 512), conv_out_size),
        wv2=u(ks[12], (512, 1), 512),
        bv2=u(ks[13], (1, 1), 512),
    )


# ---------------------------------------------------------------------------
# Pure-JAX f32 reference (includes conv bias AND BN affine, unlike the kernel:
# matching validates both the bias-cancellation and the affine path)
# ---------------------------------------------------------------------------
def reference_forward(raw, x):
    def conv_bn_relu(x, w, b, g, be, stride):
        y = jax.lax.conv_general_dilated(
            x, w, (stride, stride), "VALID",
            dimension_numbers=("NCHW", "OIHW", "NCHW"))
        y = y + b[None, :, None, None]
        mean = jnp.mean(y, axis=(0, 2, 3), keepdims=True)
        var = jnp.mean((y - mean) ** 2, axis=(0, 2, 3), keepdims=True)
        y = (y - mean) * jax.lax.rsqrt(var + 1e-5)
        y = y * g[None, :, None, None] + be[None, :, None, None]
        return jnp.maximum(y, 0.0)

    h = conv_bn_relu(x, raw["w1"], raw["b1"], raw["g1"], raw["be1"], S1)
    h = conv_bn_relu(h, raw["w2"], raw["b2"], raw["g2"], raw["be2"], S2)
    h = conv_bn_relu(h, raw["w3"], raw["b3"], raw["g3"], raw["be3"], S3)
    flat = h.reshape(x.shape[0], -1)
    ha = jnp.maximum(flat @ raw["wa1"] + raw["ba1"], 0.0)
    adv = ha @ raw["wa2"] + raw["ba2"]
    hv = jnp.maximum(flat @ raw["wv1"] + raw["bv1"], 0.0)
    val = hv @ raw["wv2"] + raw["bv2"]
    return val + adv - jnp.mean(adv, axis=1, keepdims=True)


if __name__ == "__main__":
    # Conv stack (k8/s4, k4/s2, k3/s1) needs spatial >= 36; use C=4, H=W=36 so conv3's
    # output is 1x1 and conv_out_size = 64.
    channels, spatial, n_actions = 4, 36, 6
    o1 = (spatial - K1) // S1 + 1            # 8
    o2 = (o1 - K2) // S2 + 1                 # 3
    o3 = (o2 - K3) // S3 + 1                 # 1
    conv_out_size = C3 * o3 * o3             # 64

    key = jax.random.PRNGKey(0)
    kx1, kx2, kp = jax.random.split(key, 3)
    raw = init_params(kp, channels, n_actions, conv_out_size)
    fwd = jax.jit(functools.partial(dueling_dqn_forward, n_actions=n_actions))

    # 1) f32 weights, batch 2: tight check of the fused kernel's math.
    x2 = jax.random.normal(kx1, (2, channels, spatial, spatial), jnp.float32)
    q2 = jax.block_until_ready(fwd(pack_params(raw, n_actions, jnp.float32), x2))
    assert q2.shape == (2, n_actions)
    np.testing.assert_allclose(np.asarray(q2), np.asarray(reference_forward(raw, x2)),
                               rtol=1e-3, atol=1e-3)

    # 2) bf16 weights (the perf configuration from the review), batch 4: looser check.
    #    Batch 4 rather than 2 because conv3's BatchNorm only sees N samples (1x1
    #    spatial); at N=2 the normalized outputs collapse to exactly +/-gamma and the
    #    f32-vs-bf16 comparison degenerates into a sign lottery (a modeling artifact of
    #    the original module, not a kernel issue).
    x4 = jax.random.normal(kx2, (4, channels, spatial, spatial), jnp.float32)
    q4 = jax.block_until_ready(fwd(pack_params(raw, n_actions, jnp.bfloat16), x4))
    assert q4.shape == (4, n_actions)
    np.testing.assert_allclose(np.asarray(q4), np.asarray(reference_forward(raw, x4)),
                               rtol=5e-2, atol=5e-2)

    print("KERNEL_OK")
</pallas_src>

<mosaic_0001>
module attributes {stable_mosaic.version = 11 : i64} {
  func.func @kernel(%arg0: memref<128x256xf32, #tpu.memory_space<vmem>>, %arg1: memref<256x32xf32, #tpu.memory_space<vmem>>, %arg2: memref<1x32xf32, #tpu.memory_space<vmem>>, %arg3: memref<1x32xf32, #tpu.memory_space<vmem>>, %arg4: memref<1x64xf32, #tpu.memory_space<vmem>>, %arg5: memref<1x64xf32, #tpu.memory_space<vmem>>, %arg6: memref<1x64xf32, #tpu.memory_space<vmem>>, %arg7: memref<1x64xf32, #tpu.memory_space<vmem>>, %arg8: memref<1x1024xf32, #tpu.memory_space<vmem>>, %arg9: memref<1x128xf32, #tpu.memory_space<vmem>>, %arg10: memref<512x64xf32, #tpu.memory_space<any>>, %arg11: memref<576x64xf32, #tpu.memory_space<any>>, %arg12: memref<64x1024xf32, #tpu.memory_space<any>>, %arg13: memref<1024x128xf32, #tpu.memory_space<any>>, %arg14: memref<2x128xf32, #tpu.memory_space<vmem>>, %arg15: memref<128x32xf32, #tpu.memory_space<vmem>>, %arg16: memref<512x64xf32, #tpu.memory_space<vmem>>, %arg17: memref<576x64xf32, #tpu.memory_space<vmem>>, %arg18: memref<64x1024xf32, #tpu.memory_space<vmem>>, %arg19: memref<1024x128xf32, #tpu.memory_space<vmem>>, %arg20: memref<4x!tpu.dma_semaphore, #tpu.memory_space<semaphore_mem>>) attributes {dimension_semantics = [], scalar_prefetch = 0 : i64, scratch_operands = 6 : i64, tpu.core_type = #tpu.core_type<tc>} {
    %c0_i32 = arith.constant 0 : i32
    %0 = tpu.memref_slice %arg20[%c0_i32] : memref<4x!tpu.dma_semaphore, #tpu.memory_space<semaphore_mem>> -> memref<1x!tpu.dma_semaphore, #tpu.memory_space<semaphore_mem>>
    %1 = tpu.memref_squeeze %0 : memref<1x!tpu.dma_semaphore, #tpu.memory_space<semaphore_mem>> -> memref<!tpu.dma_semaphore, #tpu.memory_space<semaphore_mem>>
    tpu.enqueue_dma source(%arg10 : memref<512x64xf32, #tpu.memory_space<any>>) target(%arg16 : memref<512x64xf32, #tpu.memory_space<vmem>>) target_semaphore(%1 : memref<!tpu.dma_semaphore, #tpu.memory_space<semaphore_mem>>)
    %c1_i32 = arith.constant 1 : i32
    %2 = tpu.memref_slice %arg20[%c1_i32] : memref<4x!tpu.dma_semaphore, #tpu.memory_space<semaphore_mem>> -> memref<1x!tpu.dma_semaphore, #tpu.memory_space<semaphore_mem>>
    %3 = tpu.memref_squeeze %2 : memref<1x!tpu.dma_semaphore, #tpu.memory_space<semaphore_mem>> -> memref<!tpu.dma_semaphore, #tpu.memory_space<semaphore_mem>>
    tpu.enqueue_dma source(%arg11 : memref<576x64xf32, #tpu.memory_space<any>>) target(%arg17 : memref<576x64xf32, #tpu.memory_space<vmem>>) target_semaphore(%3 : memref<!tpu.dma_semaphore, #tpu.memory_space<semaphore_mem>>)
    %c2_i32 = arith.constant 2 : i32
    %4 = tpu.memref_slice %arg20[%c2_i32] : memref<4x!tpu.dma_semaphore, #tpu.memory_space<semaphore_mem>> -> memref<1x!tpu.dma_semaphore, #tpu.memory_space<semaphore_mem>>
    %5 = tpu.memref_squeeze %4 : memref<1x!tpu.dma_semaphore, #tpu.memory_space<semaphore_mem>> -> memref<!tpu.dma_semaphore, #tpu.memory_space<semaphore_mem>>
    tpu.enqueue_dma source(%arg12 : memref<64x1024xf32, #tpu.memory_space<any>>) target(%arg18 : memref<64x1024xf32, #tpu.memory_space<vmem>>) target_semaphore(%5 : memref<!tpu.dma_semaphore, #tpu.memory_space<semaphore_mem>>)
    %c3_i32 = arith.constant 3 : i32
    %6 = tpu.memref_slice %arg20[%c3_i32] : memref<4x!tpu.dma_semaphore, #tpu.memory_space<semaphore_mem>> -> memref<1x!tpu.dma_semaphore, #tpu.memory_space<semaphore_mem>>
    %7 = tpu.memref_squeeze %6 : memref<1x!tpu.dma_semaphore, #tpu.memory_space<semaphore_mem>> -> memref<!tpu.dma_semaphore, #tpu.memory_space<semaphore_mem>>
    tpu.enqueue_dma source(%arg13 : memref<1024x128xf32, #tpu.memory_space<any>>) target(%arg19 : memref<1024x128xf32, #tpu.memory_space<vmem>>) target_semaphore(%7 : memref<!tpu.dma_semaphore, #tpu.memory_space<semaphore_mem>>)
    %c0 = arith.constant 0 : index
    %c0_0 = arith.constant 0 : index
    %8 = vector.load %arg0[%c0, %c0_0] : memref<128x256xf32, #tpu.memory_space<vmem>>, vector<128x256xf32>
    %c0_1 = arith.constant 0 : index
    %c0_2 = arith.constant 0 : index
    %9 = vector.load %arg1[%c0_1, %c0_2] : memref<256x32xf32, #tpu.memory_space<vmem>>, vector<256x32xf32>
    %cst = arith.constant dense<0.000000e+00> : vector<128x32xf32>
    %10 = tpu.matmul %8, %9, %cst {dimension_numbers = #tpu.dot_dimension_numbers<[1], [0], [0], [1], [0, 0, 1, 1], [], []>} : vector<128x256xf32>, vector<256x32xf32>, vector<128x32xf32> -> vector<128x32xf32>
    %c0_3 = arith.constant 0 : index
    %c0_4 = arith.constant 0 : index
    %11 = vector.load %arg2[%c0_3, %c0_4] : memref<1x32xf32, #tpu.memory_space<vmem>>, vector<1x32xf32>
    %c0_5 = arith.constant 0 : index
    %c0_6 = arith.constant 0 : index
    %12 = vector.load %arg3[%c0_5, %c0_6] : memref<1x32xf32, #tpu.memory_space<vmem>>, vector<1x32xf32>
    %cst_7 = arith.constant dense<0.000000e+00> : vector<32xf32>
    %13 = vector.multi_reduction <add>, %10, %cst_7 [0] : vector<128x32xf32> to vector<32xf32>
    %14 = vector.shape_cast %13 : vector<32xf32> to vector<1x32xf32>
    %cst_8 = arith.constant 7.812500e-03 : f32
    %15 = vector.broadcast %cst_8 : f32 to vector<1x32xf32>
    %16 = arith.mulf %14, %15 : vector<1x32xf32>
    %17 = vector.broadcast %16 : vector<1x32xf32> to vector<128x32xf32>
    %18 = arith.subf %10, %17 : vector<128x32xf32>
    %19 = arith.mulf %18, %18 : vector<128x32xf32>
    %cst_9 = arith.constant dense<0.000000e+00> : vector<32xf32>
    %20 = vector.multi_reduction <add>, %19, %cst_9 [0] : vector<128x32xf32> to vector<32xf32>
    %21 = vector.shape_cast %20 : vector<32xf32> to vector<1x32xf32>
    %cst_10 = arith.constant 7.812500e-03 : f32
    %22 = vector.broadcast %cst_10 : f32 to vector<1x32xf32>
    %23 = arith.mulf %21, %22 : vector<1x32xf32>
    %cst_11 = arith.constant 9.99999974E-6 : f32
    %24 = vector.broadcast %cst_11 : f32 to vector<1x32xf32>
    %25 = arith.addf %23, %24 : vector<1x32xf32>
    %26 = math.rsqrt %25 : vector<1x32xf32>
    %27 = vector.broadcast %26 : vector<1x32xf32> to vector<128x32xf32>
    %28 = arith.mulf %18, %27 : vector<128x32xf32>
    %29 = vector.broadcast %11 : vector<1x32xf32> to vector<128x32xf32>
    %30 = arith.mulf %28, %29 : vector<128x32xf32>
    %31 = vector.broadcast %12 : vector<1x32xf32> to vector<128x32xf32>
    %32 = arith.addf %30, %31 : vector<128x32xf32>
    %cst_12 = arith.constant 0.000000e+00 : f32
    %33 = vector.broadcast %cst_12 : f32 to vector<128x32xf32>
    %34 = arith.maximumf %32, %33 : vector<128x32xf32>
    %c0_13 = arith.constant 0 : index
    %c0_14 = arith.constant 0 : index
    %35 = vector.load %arg15[%c0_13, %c0_14] : memref<128x32xf32, #tpu.memory_space<vmem>>, vector<128x32xf32>
    tpu.vector_store %arg15[%c0_13, %c0_14], %34 {strides = array<i32>} : memref<128x32xf32, #tpu.memory_space<vmem>>, vector<128x32xf32>,
    %c0_i32_15 = arith.constant 0 : i32
    %36 = tpu.memref_slice %arg20[%c0_i32_15] : memref<4x!tpu.dma_semaphore, #tpu.memory_space<semaphore_mem>> -> memref<1x!tpu.dma_semaphore, #tpu.memory_space<semaphore_mem>>
    %37 = tpu.memref_squeeze %36 : memref<1x!tpu.dma_semaphore, #tpu.memory_space<semaphore_mem>> -> memref<!tpu.dma_semaphore, #tpu.memory_space<semaphore_mem>>
    tpu.wait_dma2 semaphore(%37 : memref<!tpu.dma_semaphore, #tpu.memory_space<semaphore_mem>>) src(%arg10 : memref<512x64xf32, #tpu.memory_space<any>>) dst(%arg16 : memref<512x64xf32, #tpu.memory_space<vmem>>)
    %c0_16 = arith.constant 0 : index
    %c0_17 = arith.constant 0 : index
    %38 = vector.load %arg16[%c0_16, %c0_17] : memref<512x64xf32, #tpu.memory_space<vmem>>, vector<512x64xf32>
    %c0_18 = arith.constant 0 : index
    %c0_19 = arith.constant 0 : index
    %39 = vector.load %arg15[%c0_18, %c0_19] : memref<128x32xf32, #tpu.memory_space<vmem>>, vector<3x32xf32>
    %c64 = arith.constant 64 : index
    %c0_20 = arith.constant 0 : index
    %40 = vector.load %arg15[%c64, %c0_20] : memref<128x32xf32, #tpu.memory_space<vmem>>, vector<3x32xf32>
    %c1 = arith.constant 1 : index
    %c0_21 = arith.constant 0 : index
    %41 = vector.load %arg15[%c1, %c0_21] : memref<128x32xf32, #tpu.memory_space<vmem>>, vector<3x32xf32>
    %c65 = arith.constant 65 : index
    %c0_22 = arith.constant 0 : index
    %42 = vector.load %arg15[%c65, %c0_22] : memref<128x32xf32, #tpu.memory_space<vmem>>, vector<3x32xf32>
    %c4 = arith.constant 4 : index
    %c0_23 = arith.constant 0 : index
    %43 = vector.load %arg15[%c4, %c0_23] : memref<128x32xf32, #tpu.memory_space<vmem>>, vector<3x32xf32>
    %c68 = arith.constant 68 : index
    %c0_24 = arith.constant 0 : index
    %44 = vector.load %arg15[%c68, %c0_24] : memref<128x32xf32, #tpu.memory_space<vmem>>, vector<3x32xf32>
    %c5 = arith.constant 5 : index
    %c0_25 = arith.constant 0 : index
    %45 = vector.load %arg15[%c5, %c0_25] : memref<128x32xf32, #tpu.memory_space<vmem>>, vector<3x32xf32>
    %c69 = arith.constant 69 : index
    %c0_26 = arith.constant 0 : index
    %46 = vector.load %arg15[%c69, %c0_26] : memref<128x32xf32, #tpu.memory_space<vmem>>, vector<3x32xf32>
    %c8 = arith.constant 8 : index
    %c0_27 = arith.constant 0 : index
    %47 = vector.load %arg15[%c8, %c0_27] : memref<128x32xf32, #tpu.memory_space<vmem>>, vector<3x32xf32>
    %c72 = arith.constant 72 : index
    %c0_28 = arith.constant 0 : index
    %48 = vector.load %arg15[%c72, %c0_28] : memref<128x32xf32, #tpu.memory_space<vmem>>, vector<3x32xf32>
    %c9 = arith.constant 9 : index
    %c0_29 = arith.constant 0 : index
    %49 = vector.load %arg15[%c9, %c0_29] : memref<128x32xf32, #tpu.memory_space<vmem>>, vector<3x32xf32>
    %c73 = arith.constant 73 : index
    %c0_30 = arith.constant 0 : index
    %50 = vector.load %arg15[%c73, %c0_30] : memref<128x32xf32, #tpu.memory_space<vmem>>, vector<3x32xf32>
    %c12 = arith.constant 12 : index
    %c0_31 = arith.constant 0 : index
    %51 = vector.load %arg15[%c12, %c0_31] : memref<128x32xf32, #tpu.memory_space<vmem>>, vector<3x32xf32>
    %c76 = arith.constant 76 : index
    %c0_32 = arith.constant 0 : index
    %52 = vector.load %arg15[%c76, %c0_32] : memref<128x32xf32, #tpu.memory_space<vmem>>, vector<3x32xf32>
    %c13 = arith.constant 13 : index
    %c0_33 = arith.constant 0 : index
    %53 = vector.load %arg15[%c13, %c0_33] : memref<128x32xf32, #tpu.memory_space<vmem>>, vector<3x32xf32>
    %c77 = arith.constant 77 : index
    %c0_34 = arith.constant 0 : index
    %54 = vector.load %arg15[%c77, %c0_34] : memref<128x32xf32, #tpu.memory_space<vmem>>, vector<3x32xf32>
    %55 = tpu.concatenate %39, %40, %41, %42, %43, %44, %45, %46, %47, %48, %49, %50, %51, %52, %53, %54 in 1 : vector<3x32xf32>, vector<3x32xf32>, vector<3x32xf32>, vector<3x32xf32>, vector<3x32xf32>, vector<3x32xf32>, vector<3x32xf32>, vector<3x32xf32>, vector<3x32xf32>, vector<3x32xf32>, vector<3x32xf32>, vector<3x32xf32>, vector<3x32xf32>, vector<3x32xf32>, vector<3x32xf32>, vector<3x32xf32> -> vector<3x512xf32>
    %cst_35 = arith.constant dense<0.000000e+00> : vector<3x64xf32>
    %56 = tpu.matmul %55, %38, %cst_35 {dimension_numbers = #tpu.dot_dimension_numbers<[1], [0], [0], [1], [0, 0, 1, 1], [], []>} : vector<3x512xf32>, vector<512x64xf32>, vector<3x64xf32> -> vector<3x64xf32>
    %c8_36 = arith.constant 8 : index
    %c0_37 = arith.constant 0 : index
    %57 = vector.load %arg15[%c8_36, %c0_37] : memref<128x32xf32, #tpu.memory_space<vmem>>, vector<3x32xf32>
    %c72_38 = arith.constant 72 : index
    %c0_39 = arith.constant 0 : index
    %58 = vector.load %arg15[%c72_38, %c0_39] : memref<128x32xf32, #tpu.memory_space<vmem>>, vector<3x32xf32>
    %c9_40 = arith.constant 9 : index
    %c0_41 = arith.constant 0 : index
    %59 = vector.load %arg15[%c9_40, %c0_41] : memref<128x32xf32, #tpu.memory_space<vmem>>, vector<3x32xf32>
    %c73_42 = arith.constant 73 : index
    %c0_43 = arith.constant 0 : index
    %60 = vector.load %arg15[%c73_42, %c0_43] : memref<128x32xf32, #tpu.memory_space<vmem>>, vector<3x32xf32>
    %c12_44 = arith.constant 12 : index
    %c0_45 = arith.constant 0 : index
    %61 = vector.load %arg15[%c12_44, %c0_45] : memref<128x32xf32, #tpu.memory_space<vmem>>, vector<3x32xf32>
    %c76_46 = arith.constant 76 : index
    %c0_47 = arith.constant 0 : index
    %62 = vector.load %arg15[%c76_46, %c0_47] : memref<128x32xf32, #tpu.memory_space<vmem>>, vector<3x32xf32>
    %c13_48 = arith.constant 13 : index
    %c0_49 = arith.constant 0 : index
    %63 = vector.load %arg15[%c13_48, %c0_49] : memref<128x32xf32, #tpu.memory_space<vmem>>, vector<3x32xf32>
    %c77_50 = arith.constant 77 : index
    %c0_51 = arith.constant 0 : index
    %64 = vector.load %arg15[%c77_50, %c0_51] : memref<128x32xf32, #tpu.memory_space<vmem>>, vector<3x32xf32>
    %c16 = arith.constant 16 : index
    %c0_52 = arith.constant 0 : index
    %65 = vector.load %arg15[%c16, %c0_52] : memref<128x32xf32, #tpu.memory_space<vmem>>, vector<3x32xf32>
    %c80 = arith.constant 80 : index
    %c0_53 = arith.constant 0 : index
    %66 = vector.load %arg15[%c80, %c0_53] : memref<128x32xf32, #tpu.memory_space<vmem>>, vector<3x32xf32>
    %c17 = arith.constant 17 : index
    %c0_54 = arith.constant 0 : index
    %67 = vector.load %arg15[%c17, %c0_54] : memref<128x32xf32, #tpu.memory_space<vmem>>, vector<3x32xf32>
    %c81 = arith.constant 81 : index
    %c0_55 = arith.constant 0 : index
    %68 = vector.load %arg15[%c81, %c0_55] : memref<128x32xf32, #tpu.memory_space<vmem>>, vector<3x32xf32>
    %c20 = arith.constant 20 : index
    %c0_56 = arith.constant 0 : index
    %69 = vector.load %arg15[%c20, %c0_56] : memref<128x32xf32, #tpu.memory_space<vmem>>, vector<3x32xf32>
    %c84 = arith.constant 84 : index
    %c0_57 = arith.constant 0 : index
    %70 = vector.load %arg15[%c84, %c0_57] : memref<128x32xf32, #tpu.memory_space<vmem>>, vector<3x32xf32>
    %c21 = arith.constant 21 : index
    %c0_58 = arith.constant 0 : index
    %71 = vector.load %arg15[%c21, %c0_58] : memref<128x32xf32, #tpu.memory_space<vmem>>, vector<3x32xf32>
    %c85 = arith.constant 85 : index
    %c0_59 = arith.constant 0 : index
    %72 = vector.load %arg15[%c85, %c0_59] : memref<128x32xf32, #tpu.memory_space<vmem>>, vector<3x32xf32>
    %73 = tpu.concatenate %57, %58, %59, %60, %61, %62, %63, %64, %65, %66, %67, %68, %69, %70, %71, %72 in 1 : vector<3x32xf32>, vector<3x32xf32>, vector<3x32xf32>, vector<3x32xf32>, vector<3x32xf32>, vector<3x32xf32>, vector<3x32xf32>, vector<3x32xf32>, vector<3x32xf32>, vector<3x32xf32>, vector<3x32xf32>, vector<3x32xf32>, vector<3x32xf32>, vector<3x32xf32>, vector<3x32xf32>, vector<3x32xf32> -> vector<3x512xf32>
    %cst_60 = arith.constant dense<0.000000e+00> : vector<3x64xf32>
    %74 = tpu.matmul %73, %38, %cst_60 {dimension_numbers = #tpu.dot_dimension_numbers<[1], [0], [0], [1], [0, 0, 1, 1], [], []>} : vector<3x512xf32>, vector<512x64xf32>, vector<3x64xf32> -> vector<3x64xf32>
    %c16_61 = arith.constant 16 : index
    %c0_62 = arith.constant 0 : index
    %75 = vector.load %arg15[%c16_61, %c0_62] : memref<128x32xf32, #tpu.memory_space<vmem>>, vector<3x32xf32>
    %c80_63 = arith.constant 80 : index
    %c0_64 = arith.constant 0 : index
    %76 = vector.load %arg15[%c80_63, %c0_64] : memref<128x32xf32, #tpu.memory_space<vmem>>, vector<3x32xf32>
    %c17_65 = arith.constant 17 : index
    %c0_66 = arith.constant 0 : index
    %77 = vector.load %arg15[%c17_65, %c0_66] : memref<128x32xf32, #tpu.memory_space<vmem>>, vector<3x32xf32>
    %c81_67 = arith.constant 81 : index
    %c0_68 = arith.constant 0 : index
    %78 = vector.load %arg15[%c81_67, %c0_68] : memref<128x32xf32, #tpu.memory_space<vmem>>, vector<3x32xf32>
    %c20_69 = arith.constant 20 : index
    %c0_70 = arith.constant 0 : index
    %79 = vector.load %arg15[%c20_69, %c0_70] : memref<128x32xf32, #tpu.memory_space<vmem>>, vector<3x32xf32>
    %c84_71 = arith.constant 84 : index
    %c0_72 = arith.constant 0 : index
    %80 = vector.load %arg15[%c84_71, %c0_72] : memref<128x32xf32, #tpu.memory_space<vmem>>, vector<3x32xf32>
    %c21_73 = arith.constant 21 : index
    %c0_74 = arith.constant 0 : index
    %81 = vector.load %arg15[%c21_73, %c0_74] : memref<128x32xf32, #tpu.memory_space<vmem>>, vector<3x32xf32>
    %c85_75 = arith.constant 85 : index
    %c0_76 = arith.constant 0 : index
    %82 = vector.load %arg15[%c85_75, %c0_76] : memref<128x32xf32, #tpu.memory_space<vmem>>, vector<3x32xf32>
    %c24 = arith.constant 24 : index
    %c0_77 = arith.constant 0 : index
    %83 = vector.load %arg15[%c24, %c0_77] : memref<128x32xf32, #tpu.memory_space<vmem>>, vector<3x32xf32>
    %c88 = arith.constant 88 : index
    %c0_78 = arith.constant 0 : index
    %84 = vector.load %arg15[%c88, %c0_78] : memref<128x32xf32, #tpu.memory_space<vmem>>, vector<3x32xf32>
    %c25 = arith.constant 25 : index
    %c0_79 = arith.constant 0 : index
    %85 = vector.load %arg15[%c25, %c0_79] : memref<128x32xf32, #tpu.memory_space<vmem>>, vector<3x32xf32>
    %c89 = arith.constant 89 : index
    %c0_80 = arith.constant 0 : index
    %86 = vector.load %arg15[%c89, %c0_80] : memref<128x32xf32, #tpu.memory_space<vmem>>, vector<3x32xf32>
    %c28 = arith.constant 28 : index
    %c0_81 = arith.constant 0 : index
    %87 = vector.load %arg15[%c28, %c0_81] : memref<128x32xf32, #tpu.memory_space<vmem>>, vector<3x32xf32>
    %c92 = arith.constant 92 : index
    %c0_82 = arith.constant 0 : index
    %88 = vector.load %arg15[%c92, %c0_82] : memref<128x32xf32, #tpu.memory_space<vmem>>, vector<3x32xf32>
    %c29 = arith.constant 29 : index
    %c0_83 = arith.constant 0 : index
    %89 = vector.load %arg15[%c29, %c0_83] : memref<128x32xf32, #tpu.memory_space<vmem>>, vector<3x32xf32>
    %c93 = arith.constant 93 : index
    %c0_84 = arith.constant 0 : index
    %90 = vector.load %arg15[%c93, %c0_84] : memref<128x32xf32, #tpu.memory_space<vmem>>, vector<3x32xf32>
    %91 = tpu.concatenate %75, %76, %77, %78, %79, %80, %81, %82, %83, %84, %85, %86, %87, %88, %89, %90 in 1 : vector<3x32xf32>, vector<3x32xf32>, vector<3x32xf32>, vector<3x32xf32>, vector<3x32xf32>, vector<3x32xf32>, vector<3x32xf32>, vector<3x32xf32>, vector<3x32xf32>, vector<3x32xf32>, vector<3x32xf32>, vector<3x32xf32>, vector<3x32xf32>, vector<3x32xf32>, vector<3x32xf32>, vector<3x32xf32> -> vector<3x512xf32>
    %cst_85 = arith.constant dense<0.000000e+00> : vector<3x64xf32>
    %92 = tpu.matmul %91, %38, %cst_85 {dimension_numbers = #tpu.dot_dimension_numbers<[1], [0], [0], [1], [0, 0, 1, 1], [], []>} : vector<3x512xf32>, vector<512x64xf32>, vector<3x64xf32> -> vector<3x64xf32>
    %c32 = arith.constant 32 : index
    %c0_86 = arith.constant 0 : index
    %93 = vector.load %arg15[%c32, %c0_86] : memref<128x32xf32, #tpu.memory_space<vmem>>, vector<3x32xf32>
    %c96 = arith.constant 96 : index
    %c0_87 = arith.constant 0 : index
    %94 = vector.load %arg15[%c96, %c0_87] : memref<128x32xf32, #tpu.memory_space<vmem>>, vector<3x32xf32>
    %c33 = arith.constant 33 : index
    %c0_88 = arith.constant 0 : index
    %95 = vector.load %arg15[%c33, %c0_88] : memref<128x32xf32, #tpu.memory_space<vmem>>, vector<3x32xf32>
    %c97 = arith.constant 97 : index
    %c0_89 = arith.constant 0 : index
    %96 = vector.load %arg15[%c97, %c0_89] : memref<128x32xf32, #tpu.memory_space<vmem>>, vector<3x32xf32>
    %c36 = arith.constant 36 : index
    %c0_90 = arith.constant 0 : index
    %97 = vector.load %arg15[%c36, %c0_90] : memref<128x32xf32, #tpu.memory_space<vmem>>, vector<3x32xf32>
    %c100 = arith.constant 100 : index
    %c0_91 = arith.constant 0 : index
    %98 = vector.load %arg15[%c100, %c0_91] : memref<128x32xf32, #tpu.memory_space<vmem>>, vector<3x32xf32>
    %c37 = arith.constant 37 : index
    %c0_92 = arith.constant 0 : index
    %99 = vector.load %arg15[%c37, %c0_92] : memref<128x32xf32, #tpu.memory_space<vmem>>, vector<3x32xf32>
    %c101 = arith.constant 101 : index
    %c0_93 = arith.constant 0 : index
    %100 = vector.load %arg15[%c101, %c0_93] : memref<128x32xf32, #tpu.memory_space<vmem>>, vector<3x32xf32>
    %c40 = arith.constant 40 : index
    %c0_94 = arith.constant 0 : index
    %101 = vector.load %arg15[%c40, %c0_94] : memref<128x32xf32, #tpu.memory_space<vmem>>, vector<3x32xf32>
    %c104 = arith.constant 104 : index
    %c0_95 = arith.constant 0 : index
    %102 = vector.load %arg15[%c104, %c0_95] : memref<128x32xf32, #tpu.memory_space<vmem>>, vector<3x32xf32>
    %c41 = arith.constant 41 : index
    %c0_96 = arith.constant 0 : index
    %103 = vector.load %arg15[%c41, %c0_96] : memref<128x32xf32, #tpu.memory_space<vmem>>, vector<3x32xf32>
    %c105 = arith.constant 105 : index
    %c0_97 = arith.constant 0 : index
    %104 = vector.load %arg15[%c105, %c0_97] : memref<128x32xf32, #tpu.memory_space<vmem>>, vector<3x32xf32>
    %c44 = arith.constant 44 : index
    %c0_98 = arith.constant 0 : index
    %105 = vector.load %arg15[%c44, %c0_98] : memref<128x32xf32, #tpu.memory_space<vmem>>, vector<3x32xf32>
    %c108 = arith.constant 108 : index
    %c0_99 = arith.constant 0 : index
    %106 = vector.load %arg15[%c108, %c0_99] : memref<128x32xf32, #tpu.memory_space<vmem>>, vector<3x32xf32>
    %c45 = arith.constant 45 : index
    %c0_100 = arith.constant 0 : index
    %107 = vector.load %arg15[%c45, %c0_100] : memref<128x32xf32, #tpu.memory_space<vmem>>, vector<3x32xf32>
    %c109 = arith.constant 109 : index
    %c0_101 = arith.constant 0 : index
    %108 = vector.load %arg15[%c109, %c0_101] : memref<128x32xf32, #tpu.memory_space<vmem>>, vector<3x32xf32>
    %109 = tpu.concatenate %93, %94, %95, %96, %97, %98, %99, %100, %101, %102, %103, %104, %105, %106, %107, %108 in 1 : vector<3x32xf32>, vector<3x32xf32>, vector<3x32xf32>, vector<3x32xf32>, vector<3x32xf32>, vector<3x32xf32>, vector<3x32xf32>, vector<3x32xf32>, vector<3x32xf32>, vector<3x32xf32>, vector<3x32xf32>, vector<3x32xf32>, vector<3x32xf32>, vector<3x32xf32>, vector<3x32xf32>, vector<3x32xf32> -> vector<3x512xf32>
    %cst_102 = arith.constant dense<0.000000e+00> : vector<3x64xf32>
    %110 = tpu.matmul %109, %38, %cst_102 {dimension_numbers = #tpu.dot_dimension_numbers<[1], [0], [0], [1], [0, 0, 1, 1], [], []>} : vector<3x512xf32>, vector<512x64xf32>, vector<3x64xf32> -> vector<3x64xf32>
    %c40_103 = arith.constant 40 : index
    %c0_104 = arith.constant 0 : index
    %111 = vector.load %arg15[%c40_103, %c0_104] : memref<128x32xf32, #tpu.memory_space<vmem>>, vector<3x32xf32>
    %c104_105 = arith.constant 104 : index
    %c0_106 = arith.constant 0 : index
    %112 = vector.load %arg15[%c104_105, %c0_106] : memref<128x32xf32, #tpu.memory_space<vmem>>, vector<3x32xf32>
    %c41_107 = arith.constant 41 : index
    %c0_108 = arith.constant 0 : index
    %113 = vector.load %arg15[%c41_107, %c0_108] : memref<128x32xf32, #tpu.memory_space<vmem>>, vector<3x32xf32>
    %c105_109 = arith.constant 105 : index
    %c0_110 = arith.constant 0 : index
    %114 = vector.load %arg15[%c105_109, %c0_110] : memref<128x32xf32, #tpu.memory_space<vmem>>, vector<3x32xf32>
    %c44_111 = arith.constant 44 : index
    %c0_112 = arith.constant 0 : index
    %115 = vector.load %arg15[%c44_111, %c0_112] : memref<128x32xf32, #tpu.memory_space<vmem>>, vector<3x32xf32>
    %c108_113 = arith.constant 108 : index
    %c0_114 = arith.constant 0 : index
    %116 = vector.load %arg15[%c108_113, %c0_114] : memref<128x32xf32, #tpu.memory_space<vmem>>, vector<3x32xf32>
    %c45_115 = arith.constant 45 : index
    %c0_116 = arith.constant 0 : index
    %117 = vector.load %arg15[%c45_115, %c0_116] : memref<128x32xf32, #tpu.memory_space<vmem>>, vector<3x32xf32>
    %c109_117 = arith.constant 109 : index
    %c0_118 = arith.constant 0 : index
    %118 = vector.load %arg15[%c109_117, %c0_118] : memref<128x32xf32, #tpu.memory_space<vmem>>, vector<3x32xf32>
    %c48 = arith.constant 48 : index
    %c0_119 = arith.constant 0 : index
    %119 = vector.load %arg15[%c48, %c0_119] : memref<128x32xf32, #tpu.memory_space<vmem>>, vector<3x32xf32>
    %c112 = arith.constant 112 : index
    %c0_120 = arith.constant 0 : index
    %120 = vector.load %arg15[%c112, %c0_120] : memref<128x32xf32, #tpu.memory_space<vmem>>, vector<3x32xf32>
    %c49 = arith.constant 49 : index
    %c0_121 = arith.constant 0 : index
    %121 = vector.load %arg15[%c49, %c0_121] : memref<128x32xf32, #tpu.memory_space<vmem>>, vector<3x32xf32>
    %c113 = arith.constant 113 : index
    %c0_122 = arith.constant 0 : index
    %122 = vector.load %arg15[%c113, %c0_122] : memref<128x32xf32, #tpu.memory_space<vmem>>, vector<3x32xf32>
    %c52 = arith.constant 52 : index
    %c0_123 = arith.constant 0 : index
    %123 = vector.load %arg15[%c52, %c0_123] : memref<128x32xf32, #tpu.memory_space<vmem>>, vector<3x32xf32>
    %c116 = arith.constant 116 : index
    %c0_124 = arith.constant 0 : index
    %124 = vector.load %arg15[%c116, %c0_124] : memref<128x32xf32, #tpu.memory_space<vmem>>, vector<3x32xf32>
    %c53 = arith.constant 53 : index
    %c0_125 = arith.constant 0 : index
    %125 = vector.load %arg15[%c53, %c0_125] : memref<128x32xf32, #tpu.memory_space<vmem>>, vector<3x32xf32>
    %c117 = arith.constant 117 : index
    %c0_126 = arith.constant 0 : index
    %126 = vector.load %arg15[%c117, %c0_126] : memref<128x32xf32, #tpu.memory_space<vmem>>, vector<3x32xf32>
    %127 = tpu.concatenate %111, %112, %113, %114, %115, %116, %117, %118, %119, %120, %121, %122, %123, %124, %125, %126 in 1 : vector<3x32xf32>, vector<3x32xf32>, vector<3x32xf32>, vector<3x32xf32>, vector<3x32xf32>, vector<3x32xf32>, vector<3x32xf32>, vector<3x32xf32>, vector<3x32xf32>, vector<3x32xf32>, vector<3x32xf32>, vector<3x32xf32>, vector<3x32xf32>, vector<3x32xf32>, vector<3x32xf32>, vector<3x32xf32> -> vector<3x512xf32>
    %cst_127 = arith.constant dense<0.000000e+00> : vector<3x64xf32>
    %128 = tpu.matmul %127, %38, %cst_127 {dimension_numbers = #tpu.dot_dimension_numbers<[1], [0], [0], [1], [0, 0, 1, 1], [], []>} : vector<3x512xf32>, vector<512x64xf32>, vector<3x64xf32> -> vector<3x64xf32>
    %c48_128 = arith.constant 48 : index
    %c0_129 = arith.constant 0 : index
    %129 = vector.load %arg15[%c48_128, %c0_129] : memref<128x32xf32, #tpu.memory_space<vmem>>, vector<3x32xf32>
    %c112_130 = arith.constant 112 : index
    %c0_131 = arith.constant 0 : index
    %130 = vector.load %arg15[%c112_130, %c0_131] : memref<128x32xf32, #tpu.memory_space<vmem>>, vector<3x32xf32>
    %c49_132 = arith.constant 49 : index
    %c0_133 = arith.constant 0 : index
    %131 = vector.load %arg15[%c49_132, %c0_133] : memref<128x32xf32, #tpu.memory_space<vmem>>, vector<3x32xf32>
    %c113_134 = arith.constant 113 : index
    %c0_135 = arith.constant 0 : index
    %132 = vector.load %arg15[%c113_134, %c0_135] : memref<128x32xf32, #tpu.memory_space<vmem>>, vector<3x32xf32>
    %c52_136 = arith.constant 52 : index
    %c0_137 = arith.constant 0 : index
    %133 = vector.load %arg15[%c52_136, %c0_137] : memref<128x32xf32, #tpu.memory_space<vmem>>, vector<3x32xf32>
    %c116_138 = arith.constant 116 : index
    %c0_139 = arith.constant 0 : index
    %134 = vector.load %arg15[%c116_138, %c0_139] : memref<128x32xf32, #tpu.memory_space<vmem>>, vector<3x32xf32>
    %c53_140 = arith.constant 53 : index
    %c0_141 = arith.constant 0 : index
    %135 = vector.load %arg15[%c53_140, %c0_141] : memref<128x32xf32, #tpu.memory_space<vmem>>, vector<3x32xf32>
    %c117_142 = arith.constant 117 : index
    %c0_143 = arith.constant 0 : index
    %136 = vector.load %arg15[%c117_142, %c0_143] : memref<128x32xf32, #tpu.memory_space<vmem>>, vector<3x32xf32>
    %c56 = arith.constant 56 : index
    %c0_144 = arith.constant 0 : index
    %137 = vector.load %arg15[%c56, %c0_144] : memref<128x32xf32, #tpu.memory_space<vmem>>, vector<3x32xf32>
    %c120 = arith.constant 120 : index
    %c0_145 = arith.constant 0 : index
    %138 = vector.load %arg15[%c120, %c0_145] : memref<128x32xf32, #tpu.memory_space<vmem>>, vector<3x32xf32>
    %c57 = arith.constant 57 : index
    %c0_146 = arith.constant 0 : index
    %139 = vector.load %arg15[%c57, %c0_146] : memref<128x32xf32, #tpu.memory_space<vmem>>, vector<3x32xf32>
    %c121 = arith.constant 121 : index
    %c0_147 = arith.constant 0 : index
    %140 = vector.load %arg15[%c121, %c0_147] : memref<128x32xf32, #tpu.memory_space<vmem>>, vector<3x32xf32>
    %c60 = arith.constant 60 : index
    %c0_148 = arith.constant 0 : index
    %141 = vector.load %arg15[%c60, %c0_148] : memref<128x32xf32, #tpu.memory_space<vmem>>, vector<3x32xf32>
    %c124 = arith.constant 124 : index
    %c0_149 = arith.constant 0 : index
    %142 = vector.load %arg15[%c124, %c0_149] : memref<128x32xf32, #tpu.memory_space<vmem>>, vector<3x32xf32>
    %c61 = arith.constant 61 : index
    %c0_150 = arith.constant 0 : index
    %143 = vector.load %arg15[%c61, %c0_150] : memref<128x32xf32, #tpu.memory_space<vmem>>, vector<3x32xf32>
    %c125 = arith.constant 125 : index
    %c0_151 = arith.constant 0 : index
    %144 = vector.load %arg15[%c125, %c0_151] : memref<128x32xf32, #tpu.memory_space<vmem>>, vector<3x32xf32>
    %145 = tpu.concatenate %129, %130, %131, %132, %133, %134, %135, %136, %137, %138, %139, %140, %141, %142, %143, %144 in 1 : vector<3x32xf32>, vector<3x32xf32>, vector<3x32xf32>, vector<3x32xf32>, vector<3x32xf32>, vector<3x32xf32>, vector<3x32xf32>, vector<3x32xf32>, vector<3x32xf32>, vector<3x32xf32>, vector<3x32xf32>, vector<3x32xf32>, vector<3x32xf32>, vector<3x32xf32>, vector<3x32xf32>, vector<3x32xf32> -> vector<3x512xf32>
    %cst_152 = arith.constant dense<0.000000e+00> : vector<3x64xf32>
    %146 = tpu.matmul %145, %38, %cst_152 {dimension_numbers = #tpu.dot_dimension_numbers<[1], [0], [0], [1], [0, 0, 1, 1], [], []>} : vector<3x512xf32>, vector<512x64xf32>, vector<3x64xf32> -> vector<3x64xf32>
    %147 = tpu.concatenate %56, %74, %92, %110, %128, %146 in 0 : vector<3x64xf32>, vector<3x64xf32>, vector<3x64xf32>, vector<3x64xf32>, vector<3x64xf32>, vector<3x64xf32> -> vector<18x64xf32>
    %c0_153 = arith.constant 0 : index
    %c0_154 = arith.constant 0 : index
    %148 = vector.load %arg4[%c0_153, %c0_154] : memref<1x64xf32, #tpu.memory_space<vmem>>, vector<1x64xf32>
    %c0_155 = arith.constant 0 : index
    %c0_156 = arith.constant 0 : index
    %149 = vector.load %arg5[%c0_155, %c0_156] : memref<1x64xf32, #tpu.memory_space<vmem>>, vector<1x64xf32>
    %cst_157 = arith.constant dense<0.000000e+00> : vector<64xf32>
    %150 = vector.multi_reduction <add>, %147, %cst_157 [0] : vector<18x64xf32> to vector<64xf32>
    %151 = vector.shape_cast %150 : vector<64xf32> to vector<1x64xf32>
    %cst_158 = arith.constant 0.055555556 : f32
    %152 = vector.broadcast %cst_158 : f32 to vector<1x64xf32>
    %153 = arith.mulf %151, %152 : vector<1x64xf32>
    %154 = vector.broadcast %153 : vector<1x64xf32> to vector<18x64xf32>
    %155 = arith.subf %147, %154 : vector<18x64xf32>
    %156 = arith.mulf %155, %155 : vector<18x64xf32>
    %cst_159 = arith.constant dense<0.000000e+00> : vector<64xf32>
    %157 = vector.multi_reduction <add>, %156, %cst_159 [0] : vector<18x64xf32> to vector<64xf32>
    %158 = vector.shape_cast %157 : vector<64xf32> to vector<1x64xf32>
    %cst_160 = arith.constant 0.055555556 : f32
    %159 = vector.broadcast %cst_160 : f32 to vector<1x64xf32>
    %160 = arith.mulf %158, %159 : vector<1x64xf32>
    %cst_161 = arith.constant 9.99999974E-6 : f32
    %161 = vector.broadcast %cst_161 : f32 to vector<1x64xf32>
    %162 = arith.addf %160, %161 : vector<1x64xf32>
    %163 = math.rsqrt %162 : vector<1x64xf32>
    %164 = vector.broadcast %163 : vector<1x64xf32> to vector<18x64xf32>
    %165 = arith.mulf %155, %164 : vector<18x64xf32>
    %166 = vector.broadcast %148 : vector<1x64xf32> to vector<18x64xf32>
    %167 = arith.mulf %165, %166 : vector<18x64xf32>
    %168 = vector.broadcast %149 : vector<1x64xf32> to vector<18x64xf32>
    %169 = arith.addf %167, %168 : vector<18x64xf32>
    %cst_162 = arith.constant 0.000000e+00 : f32
    %170 = vector.broadcast %cst_162 : f32 to vector<18x64xf32>
    %171 = arith.maximumf %169, %170 : vector<18x64xf32>
    %c1_i32_163 = arith.constant 1 : i32
    %172 = tpu.memref_slice %arg20[%c1_i32_163] : memref<4x!tpu.dma_semaphore, #tpu.memory_space<semaphore_mem>> -> memref<1x!tpu.dma_semaphore, #tpu.memory_space<semaphore_mem>>
    %173 = tpu.memref_squeeze %172 : memref<1x!tpu.dma_semaphore, #tpu.memory_space<semaphore_mem>> -> memref<!tpu.dma_semaphore, #tpu.memory_space<semaphore_mem>>
    tpu.wait_dma2 semaphore(%173 : memref<!tpu.dma_semaphore, #tpu.memory_space<semaphore_mem>>) src(%arg11 : memref<576x64xf32, #tpu.memory_space<any>>) dst(%arg17 : memref<576x64xf32, #tpu.memory_space<vmem>>)
    %174 = vector.extract_strided_slice %171 {offsets = [0, 0], sizes = [1, 64], strides = [1, 1]} : vector<18x64xf32> to vector<1x64xf32>
    %175 = vector.extract_strided_slice %171 {offsets = [1, 0], sizes = [1, 64], strides = [1, 1]} : vector<18x64xf32> to vector<1x64xf32>
    %176 = vector.extract_strided_slice %171 {offsets = [2, 0], sizes = [1, 64], strides = [1, 1]} : vector<18x64xf32> to vector<1x64xf32>
    %177 = vector.extract_strided_slice %171 {offsets = [3, 0], sizes = [1, 64], strides = [1, 1]} : vector<18x64xf32> to vector<1x64xf32>
    %178 = vector.extract_strided_slice %171 {offsets = [4, 0], sizes = [1, 64], strides = [1, 1]} : vector<18x64xf32> to vector<1x64xf32>
    %179 = vector.extract_strided_slice %171 {offsets = [5, 0], sizes = [1, 64], strides = [1, 1]} : vector<18x64xf32> to vector<1x64xf32>
    %180 = vector.extract_strided_slice %171 {offsets = [6, 0], sizes = [1, 64], strides = [1, 1]} : vector<18x64xf32> to vector<1x64xf32>
    %181 = vector.extract_strided_slice %171 {offsets = [7, 0], sizes = [1, 64], strides = [1, 1]} : vector<18x64xf32> to vector<1x64xf32>
    %182 = vector.extract_strided_slice %171 {offsets = [8, 0], sizes = [1, 64], strides = [1, 1]} : vector<18x64xf32> to vector<1x64xf32>
    %183 = tpu.concatenate %174, %175, %176, %177, %178, %179, %180, %181, %182 in 1 : vector<1x64xf32>, vector<1x64xf32>, vector<1x64xf32>, vector<1x64xf32>, vector<1x64xf32>, vector<1x64xf32>, vector<1x64xf32>, vector<1x64xf32>, vector<1x64xf32> -> vector<1x576xf32>
    %184 = vector.extract_strided_slice %171 {offsets = [9, 0], sizes = [1, 64], strides = [1, 1]} : vector<18x64xf32> to vector<1x64xf32>
    %185 = vector.extract_strided_slice %171 {offsets = [10, 0], sizes = [1, 64], strides = [1, 1]} : vector<18x64xf32> to vector<1x64xf32>
    %186 = vector.extract_strided_slice %171 {offsets = [11, 0], sizes = [1, 64], strides = [1, 1]} : vector<18x64xf32> to vector<1x64xf32>
    %187 = vector.extract_strided_slice %171 {offsets = [12, 0], sizes = [1, 64], strides = [1, 1]} : vector<18x64xf32> to vector<1x64xf32>
    %188 = vector.extract_strided_slice %171 {offsets = [13, 0], sizes = [1, 64], strides = [1, 1]} : vector<18x64xf32> to vector<1x64xf32>
    %189 = vector.extract_strided_slice %171 {offsets = [14, 0], sizes = [1, 64], strides = [1, 1]} : vector<18x64xf32> to vector<1x64xf32>
    %190 = vector.extract_strided_slice %171 {offsets = [15, 0], sizes = [1, 64], strides = [1, 1]} : vector<18x64xf32> to vector<1x64xf32>
    %191 = vector.extract_strided_slice %171 {offsets = [16, 0], sizes = [1, 64], strides = [1, 1]} : vector<18x64xf32> to vector<1x64xf32>
    %192 = vector.extract_strided_slice %171 {offsets = [17, 0], sizes = [1, 64], strides = [1, 1]} : vector<18x64xf32> to vector<1x64xf32>
    %193 = tpu.concatenate %184, %185, %186, %187, %188, %189, %190, %191, %192 in 1 : vector<1x64xf32>, vector<1x64xf32>, vector<1x64xf32>, vector<1x64xf32>, vector<1x64xf32>, vector<1x64xf32>, vector<1x64xf32>, vector<1x64xf32>, vector<1x64xf32> -> vector<1x576xf32>
    %194 = tpu.concatenate %183, %193 in 0 : vector<1x576xf32>, vector<1x576xf32> -> vector<2x576xf32>
    %c0_164 = arith.constant 0 : index
    %c0_165 = arith.constant 0 : index
    %195 = vector.load %arg17[%c0_164, %c0_165] : memref<576x64xf32, #tpu.memory_space<vmem>>, vector<576x64xf32>
    %cst_166 = arith.constant dense<0.000000e+00> : vector<2x64xf32>
    %196 = tpu.matmul %194, %195, %cst_166 {dimension_numbers = #tpu.dot_dimension_numbers<[1], [0], [0], [1], [0, 0, 1, 1], [], []>} : vector<2x576xf32>, vector<576x64xf32>, vector<2x64xf32> -> vector<2x64xf32>
    %c0_167 = arith.constant 0 : index
    %c0_168 = arith.constant 0 : index
    %197 = vector.load %arg6[%c0_167, %c0_168] : memref<1x64xf32, #tpu.memory_space<vmem>>, vector<1x64xf32>
    %c0_169 = arith.constant 0 : index
    %c0_170 = arith.constant 0 : index
    %198 = vector.load %arg7[%c0_169, %c0_170] : memref<1x64xf32, #tpu.memory_space<vmem>>, vector<1x64xf32>
    %cst_171 = arith.constant dense<0.000000e+00> : vector<64xf32>
    %199 = vector.multi_reduction <add>, %196, %cst_171 [0] : vector<2x64xf32> to vector<64xf32>
    %200 = vector.shape_cast %199 : vector<64xf32> to vector<1x64xf32>
    %cst_172 = arith.constant 5.000000e-01 : f32
    %201 = vector.broadcast %cst_172 : f32 to vector<1x64xf32>
    %202 = arith.mulf %200, %201 : vector<1x64xf32>
    %203 = vector.broadcast %202 : vector<1x64xf32> to vector<2x64xf32>
    %204 = arith.subf %196, %203 : vector<2x64xf32>
    %205 = arith.mulf %204, %204 : vector<2x64xf32>
    %cst_173 = arith.constant dense<0.000000e+00> : vector<64xf32>
    %206 = vector.multi_reduction <add>, %205, %cst_173 [0] : vector<2x64xf32> to vector<64xf32>
    %207 = vector.shape_cast %206 : vector<64xf32> to vector<1x64xf32>
    %cst_174 = arith.constant 5.000000e-01 : f32
    %208 = vector.broadcast %cst_174 : f32 to vector<1x64xf32>
    %209 = arith.mulf %207, %208 : vector<1x64xf32>
    %cst_175 = arith.constant 9.99999974E-6 : f32
    %210 = vector.broadcast %cst_175 : f32 to vector<1x64xf32>
    %211 = arith.addf %209, %210 : vector<1x64xf32>
    %212 = math.rsqrt %211 : vector<1x64xf32>
    %213 = vector.broadcast %212 : vector<1x64xf32> to vector<2x64xf32>
    %214 = arith.mulf %204, %213 : vector<2x64xf32>
    %215 = vector.broadcast %197 : vector<1x64xf32> to vector<2x64xf32>
    %216 = arith.mulf %214, %215 : vector<2x64xf32>
    %217 = vector.broadcast %198 : vector<1x64xf32> to vector<2x64xf32>
    %218 = arith.addf %216, %217 : vector<2x64xf32>
    %cst_176 = arith.constant 0.000000e+00 : f32
    %219 = vector.broadcast %cst_176 : f32 to vector<2x64xf32>
    %220 = arith.maximumf %218, %219 : vector<2x64xf32>
    %c2_i32_177 = arith.constant 2 : i32
    %221 = tpu.memref_slice %arg20[%c2_i32_177] : memref<4x!tpu.dma_semaphore, #tpu.memory_space<semaphore_mem>> -> memref<1x!tpu.dma_semaphore, #tpu.memory_space<semaphore_mem>>
    %222 = tpu.memref_squeeze %221 : memref<1x!tpu.dma_semaphore, #tpu.memory_space<semaphore_mem>> -> memref<!tpu.dma_semaphore, #tpu.memory_space<semaphore_mem>>
    tpu.wait_dma2 semaphore(%222 : memref<!tpu.dma_semaphore, #tpu.memory_space<semaphore_mem>>) src(%arg12 : memref<64x1024xf32, #tpu.memory_space<any>>) dst(%arg18 : memref<64x1024xf32, #tpu.memory_space<vmem>>)
    %c0_178 = arith.constant 0 : index
    %c0_179 = arith.constant 0 : index
    %223 = vector.load %arg18[%c0_178, %c0_179] : memref<64x1024xf32, #tpu.memory_space<vmem>>, vector<64x1024xf32>
    %cst_180 = arith.constant dense<0.000000e+00> : vector<2x1024xf32>
    %224 = tpu.matmul %220, %223, %cst_180 {dimension_numbers = #tpu.dot_dimension_numbers<[1], [0], [0], [1], [0, 0, 1, 1], [], []>} : vector<2x64xf32>, vector<64x1024xf32>, vector<2x1024xf32> -> vector<2x1024xf32>
    %c0_181 = arith.constant 0 : index
    %c0_182 = arith.constant 0 : index
    %225 = vector.load %arg8[%c0_181, %c0_182] : memref<1x1024xf32, #tpu.memory_space<vmem>>, vector<1x1024xf32>
    %226 = vector.broadcast %225 : vector<1x1024xf32> to vector<2x1024xf32>
    %227 = arith.addf %224, %226 : vector<2x1024xf32>
    %cst_183 = arith.constant 0.000000e+00 : f32
    %228 = vector.broadcast %cst_183 : f32 to vector<2x1024xf32>
    %229 = arith.maximumf %227, %228 : vector<2x1024xf32>
    %c3_i32_184 = arith.constant 3 : i32
    %230 = tpu.memref_slice %arg20[%c3_i32_184] : memref<4x!tpu.dma_semaphore, #tpu.memory_space<semaphore_mem>> -> memref<1x!tpu.dma_semaphore, #tpu.memory_space<semaphore_mem>>
    %231 = tpu.memref_squeeze %230 : memref<1x!tpu.dma_semaphore, #tpu.memory_space<semaphore_mem>> -> memref<!tpu.dma_semaphore, #tpu.memory_space<semaphore_mem>>
    tpu.wait_dma2 semaphore(%231 : memref<!tpu.dma_semaphore, #tpu.memory_space<semaphore_mem>>) src(%arg13 : memref<1024x128xf32, #tpu.memory_space<any>>) dst(%arg19 : memref<1024x128xf32, #tpu.memory_space<vmem>>)
    %c0_185 = arith.constant 0 : index
    %c0_186 = arith.constant 0 : index
    %232 = vector.load %arg19[%c0_185, %c0_186] : memref<1024x128xf32, #tpu.memory_space<vmem>>, vector<1024x128xf32>
    %cst_187 = arith.constant dense<0.000000e+00> : vector<2x128xf32>
    %233 = tpu.matmul %229, %232, %cst_187 {dimension_numbers = #tpu.dot_dimension_numbers<[1], [0], [0], [1], [0, 0, 1, 1], [], []>} : vector<2x1024xf32>, vector<1024x128xf32>, vector<2x128xf32> -> vector<2x128xf32>
    %c0_188 = arith.constant 0 : index
    %c0_189 = arith.constant 0 : index
    %234 = vector.load %arg9[%c0_188, %c0_189] : memref<1x128xf32, #tpu.memory_space<vmem>>, vector<1x128xf32>
    %235 = vector.broadcast %234 : vector<1x128xf32> to vector<2x128xf32>
    %236 = arith.addf %233, %235 : vector<2x128xf32>
    %237 = vector.extract_strided_slice %236 {offsets = [0, 0], sizes = [2, 6], strides = [1, 1]} : vector<2x128xf32> to vector<2x6xf32>
    %cst_190 = arith.constant dense<0.000000e+00> : vector<2xf32>
    %238 = vector.multi_reduction <add>, %237, %cst_190 [1] : vector<2x6xf32> to vector<2xf32>
    %239 = vector.shape_cast %238 : vector<2xf32> to vector<2x1xf32>
    %cst_191 = arith.constant 0.166666672 : f32
    %240 = vector.broadcast %cst_191 : f32 to vector<2x1xf32>
    %241 = arith.mulf %239, %240 : vector<2x1xf32>
    %242 = vector.extract_strided_slice %236 {offsets = [0, 6], sizes = [2, 1], strides = [1, 1]} : vector<2x128xf32> to vector<2x1xf32>
    %243 = arith.subf %242, %241 : vector<2x1xf32>
    %244 = vector.broadcast %243 : vector<2x1xf32> to vector<2x128xf32>
    %245 = arith.addf %236, %244 : vector<2x128xf32>
    %c0_192 = arith.constant 0 : index
    %c0_193 = arith.constant 0 : index
    %246 = vector.load %arg14[%c0_192, %c0_193] : memref<2x128xf32, #tpu.memory_space<vmem>>, vector<2x128xf32>
    tpu.vector_store %arg14[%c0_192, %c0_193], %245 {strides = array<i32>} : memref<2x128xf32, #tpu.memory_space<vmem>>, vector<2x128xf32>,
    return
  }
}

</mosaic_0001>

<llo_original>
// kernel: dueling_dqn_forward.1
$region0: #{dueling_dqn_forward.1}
  #allocation0 [shape = 'u32[]', space=smem, size = 0x4, offset = 0x4, fixed_abs, tag = 'smem constant byte address 0x4 - core index']
  #allocation1 [shape = 'u32[144,128]{1,0:T(1,128)}', space=vmem, size = 0x12000, scoped, tag = 'internal scratch']
  #allocation2 [shape = 'f32[128,32]{1,0:T(8,128)}', space=vmem, size = 0x10000, scoped, tag = 'scratch operand']
  #allocation3 [shape = 'f32[512,64]{1,0:T(8,128)}', space=vmem, size = 0x40000, scoped, tag = 'scratch operand']
  #allocation4 [shape = 'f32[576,64]{1,0:T(8,128)}', space=vmem, size = 0x48000, scoped, tag = 'scratch operand']
  #allocation5 [shape = 'f32[64,1024]{1,0:T(8,128)}', space=vmem, size = 0x40000, scoped, tag = 'scratch operand']
  #allocation6 [shape = 'f32[1024,128]{1,0:T(8,128)}', space=vmem, size = 0x80000, scoped, tag = 'scratch operand']
  #allocation7 [shape = 's32[4]{0}', space=sflag, size = 0x10, scoped, tag = 'scratch operand']
  #allocation10 [shape = 's32[]', space=sflag, size = 0x4, offset = 0, fixed_abs, tag = 'sflag constant byte address 0x0 - dummy sync flag']
  #allocation11 [shape = 's32[]', space=sflag, size = 0x4, offset = 0, fixed_abs, tag = 'sflag constant byte address 0x0 - dummy sync flag']
  #allocation12 [shape = 's32[]', space=sflag, size = 0x4, offset = 0, fixed_abs, tag = 'sflag constant byte address 0x0 - dummy sync flag']
  #allocation13 [shape = 's32[]', space=sflag, size = 0x4, offset = 0, fixed_abs, tag = 'sflag constant byte address 0x0 - dummy sync flag']
  %s0 = inlined_call_operand.vmem [shape: f32[128,256], index: 0, kind: input, shape index: {}]
  %s1 = inlined_call_operand.vmem [shape: f32[256,32], index: 1, kind: input, shape index: {}]
  %s2 = inlined_call_operand.vmem [shape: f32[1,32], index: 2, kind: input, shape index: {}]
  %s3 = inlined_call_operand.vmem [shape: f32[1,32], index: 3, kind: input, shape index: {}]
  %s4 = inlined_call_operand.vmem [shape: f32[1,64], index: 4, kind: input, shape index: {}]
  %s5 = inlined_call_operand.vmem [shape: f32[1,64], index: 5, kind: input, shape index: {}]
  %s6 = inlined_call_operand.vmem [shape: f32[1,64], index: 6, kind: input, shape index: {}]
  %s7 = inlined_call_operand.vmem [shape: f32[1,64], index: 7, kind: input, shape index: {}]
  %s8 = inlined_call_operand.vmem [shape: f32[1,1024], index: 8, kind: input, shape index: {}]
  %s9 = inlined_call_operand.vmem [shape: f32[1,128], index: 9, kind: input, shape index: {}]
  %s10 = inlined_call_operand.vmem [shape: f32[512,64], index: 10, kind: input, shape index: {}]
  %s11 = inlined_call_operand.vmem [shape: f32[576,64], index: 11, kind: input, shape index: {}]
  %s12 = inlined_call_operand.vmem [shape: f32[64,1024], index: 12, kind: input, shape index: {}]
  %s13 = inlined_call_operand.vmem [shape: f32[1024,128], index: 13, kind: input, shape index: {}]
  %s14 = inlined_call_operand.hbm [shape: f32[2,128], index: 14, kind: output, shape index: {}]
  %s15 = sld [smem:[#allocation0]]
  $region186: #{dueling_dqn_forward.1} parent=0
    _
  %s17 = ssub.s32 1, %s15
  %s18 = scalar_select 0, %s17, %s15
  $region1: #{dueling_dqn_forward.1} parent=0
    #allocation8 [shape = 'u8[1024]{0}', space=vmem, size = 0x400, scoped, tag = 'output window, operand 0, single buffered']
    #allocation9 [shape = 's32[1]{0}', space=sflag, size = 0x4, scoped, tag = 'scoped memory for dueling_dqn_forward.1']
    %19 = vsyncpa [#allocation9], 0
    // Predicated region
    $region2: #{dueling_dqn_forward.1} parent=1 // pred_check
      _
    $region3: #{dueling_dqn_forward.1} parent=1 // pred_check_branch
      %21 = sbr.rel (0) target = $region5
    $region4: #{dueling_dqn_forward.1} parent=1 // pred_region
      _
    $region5: #{dueling_dqn_forward.1} parent=1 // pred_fallthru
      _
    // Predicated region
    $region6: #{dueling_dqn_forward.1} parent=1 // pred_check
      _
    $region7: #{dueling_dqn_forward.1} parent=1 // pred_check_branch
      %23 = sbr.rel (0) target = $region9
    $region8: #{dueling_dqn_forward.1} parent=1 // pred_region
      _
    $region9: #{dueling_dqn_forward.1} parent=1 // pred_fallthru
      _
    // Predicated region
    $region10: #{dueling_dqn_forward.1} parent=1 // pred_check
      _
    $region11: #{dueling_dqn_forward.1} parent=1 // pred_check_branch
      %25 = sbr.rel (0) target = $region13
    $region12: #{dueling_dqn_forward.1} parent=1 // pred_region
      _
    $region13: #{dueling_dqn_forward.1} parent=1 // pred_fallthru
      _
    // Predicated region
    $region14: #{dueling_dqn_forward.1} parent=1 // pred_check
      _
    $region15: #{dueling_dqn_forward.1} parent=1 // pred_check_branch
      %27 = sbr.rel (0) target = $region17
    $region16: #{dueling_dqn_forward.1} parent=1 // pred_region
      _
    $region17: #{dueling_dqn_forward.1} parent=1 // pred_fallthru
      _
    // Predicated region
    $region18: #{dueling_dqn_forward.1} parent=1 // pred_check
      _
    $region19: #{dueling_dqn_forward.1} parent=1 // pred_check_branch
      %29 = sbr.rel (0) target = $region21
    $region20: #{dueling_dqn_forward.1} parent=1 // pred_region
      _
    $region21: #{dueling_dqn_forward.1} parent=1 // pred_fallthru
      _
    // Predicated region
    $region22: #{dueling_dqn_forward.1} parent=1 // pred_check
      _
    $region23: #{dueling_dqn_forward.1} parent=1 // pred_check_branch
      %31 = sbr.rel (0) target = $region25
    $region24: #{dueling_dqn_forward.1} parent=1 // pred_region
      _
    $region25: #{dueling_dqn_forward.1} parent=1 // pred_fallthru
      _
    // Predicated region
    $region26: #{dueling_dqn_forward.1} parent=1 // pred_check
      _
    $region27: #{dueling_dqn_forward.1} parent=1 // pred_check_branch
      %33 = sbr.rel (0) target = $region29
    $region28: #{dueling_dqn_forward.1} parent=1 // pred_region
      _
    $region29: #{dueling_dqn_forward.1} parent=1 // pred_fallthru
      _
    // Predicated region
    $region30: #{dueling_dqn_forward.1} parent=1 // pred_check
      _
    $region31: #{dueling_dqn_forward.1} parent=1 // pred_check_branch
      %35 = sbr.rel (0) target = $region33
    $region32: #{dueling_dqn_forward.1} parent=1 // pred_region
      _
    $region33: #{dueling_dqn_forward.1} parent=1 // pred_fallthru
      _
    // Predicated region
    $region34: #{dueling_dqn_forward.1} parent=1 // pred_check
      _
    $region35: #{dueling_dqn_forward.1} parent=1 // pred_check_branch
      %37 = sbr.rel (0) target = $region37
    $region36: #{dueling_dqn_forward.1} parent=1 // pred_region
      _
    $region37: #{dueling_dqn_forward.1} parent=1 // pred_fallthru
      _
    // Predicated region
    $region38: #{dueling_dqn_forward.1} parent=1 // pred_check
      _
    $region39: #{dueling_dqn_forward.1} parent=1 // pred_check_branch
      %39 = sbr.rel (0) target = $region41
    $region40: #{dueling_dqn_forward.1} parent=1 // pred_region
      _
    $region41: #{dueling_dqn_forward.1} parent=1 // pred_fallthru
      _
    %p41 = scmp.lt.u32.totalorder 512, 8
    %p42 = pneg %p41
    // Predicated region
    $region42: #{dueling_dqn_forward.1} parent=1 // pred_check
      _
    $region43: #{dueling_dqn_forward.1} parent=1 // pred_check_branch
      %44 = sbr.rel (%p41) target = $region45
    $region44: #{dueling_dqn_forward.1} parent=1 // pred_region
      %s60 = sand.u32 512, 7
      %p61 = scmp.eq.s32.totalorder %s60, 0
      // Predicated region
      $region57: #{dueling_dqn_forward.1} parent=44 // pred_check
        %p62 = pneg %p61
      $region58: #{dueling_dqn_forward.1} parent=44 // pred_check_branch
        %64 = sbr.rel (%p62) target = $region60
      $region59: #{dueling_dqn_forward.1} parent=44 // pred_region
        loop: start=0, step=1, limit=1
        $region61: #{dueling_dqn_forward.1} parent=59 // loop_pre_header
          _
        $region62: #{dueling_dqn_forward.1} parent=59 // loop_header
          %s66 = sphi 0, %s70
          %p67 = scmp.ge.s32.totalorder %s66, 1
          %s71 = sphi %s10, %s10
          %s72 = sphi [#allocation3], [#allocation3]
        $region63: #{dueling_dqn_forward.1} parent=59 // loop_header_branch
          %69 = sbr.rel (%p67) target = $region67
        $region64: #{dueling_dqn_forward.1} parent=59 // loop_body
          %v73 = vld [vmem:[%s71] sm:$0xff]
          %74 = vst [vmem:[%s72] sm:$0xff] %v73
          %v75 = vld [vmem:[%s71 + $0x8] sm:$0xff]
          %76 = vst [vmem:[%s72 + $0x8] sm:$0xff] %v75
          %v77 = vld [vmem:[%s71 + $0x10] sm:$0xff]
          %78 = vst [vmem:[%s72 + $0x10] sm:$0xff] %v77
          %v79 = vld [vmem:[%s71 + $0x18] sm:$0xff]
          %80 = vst [vmem:[%s72 + $0x18] sm:$0xff] %v79
          %v81 = vld [vmem:[%s71 + $0x20] sm:$0xff]
          %82 = vst [vmem:[%s72 + $0x20] sm:$0xff] %v81
          %v83 = vld [vmem:[%s71 + $0x28] sm:$0xff]
          %84 = vst [vmem:[%s72 + $0x28] sm:$0xff] %v83
          %v85 = vld [vmem:[%s71 + $0x30] sm:$0xff]
          %86 = vst [vmem:[%s72 + $0x30] sm:$0xff] %v85
          %v87 = vld [vmem:[%s71 + $0x38] sm:$0xff]
          %88 = vst [vmem:[%s72 + $0x38] sm:$0xff] %v87
          %v89 = vld [vmem:[%s71 + $0x40] sm:$0xff]
          %90 = vst [vmem:[%s72 + $0x40] sm:$0xff] %v89
          %v91 = vld [vmem:[%s71 + $0x48] sm:$0xff]
          %92 = vst [vmem:[%s72 + $0x48] sm:$0xff] %v91
          %v93 = vld [vmem:[%s71 + $0x50] sm:$0xff]
          %94 = vst [vmem:[%s72 + $0x50] sm:$0xff] %v93
          %v95 = vld [vmem:[%s71 + $0x58] sm:$0xff]
          %96 = vst [vmem:[%s72 + $0x58] sm:$0xff] %v95
          %v97 = vld [vmem:[%s71 + $0x60] sm:$0xff]
          %98 = vst [vmem:[%s72 + $0x60] sm:$0xff] %v97
          %v99 = vld [vmem:[%s71 + $0x68] sm:$0xff]
          %100 = vst [vmem:[%s72 + $0x68] sm:$0xff] %v99
          %v101 = vld [vmem:[%s71 + $0x70] sm:$0xff]
          %102 = vst [vmem:[%s72 + $0x70] sm:$0xff] %v101
          %v103 = vld [vmem:[%s71 + $0x78] sm:$0xff]
          %104 = vst [vmem:[%s72 + $0x78] sm:$0xff] %v103
          %v105 = vld [vmem:[%s71 + $0x80] sm:$0xff]
          %106 = vst [vmem:[%s72 + $0x80] sm:$0xff] %v105
          %v107 = vld [vmem:[%s71 + $0x88] sm:$0xff]
          %108 = vst [vmem:[%s72 + $0x88] sm:$0xff] %v107
          %v109 = vld [vmem:[%s71 + $0x90] sm:$0xff]
          %110 = vst [vmem:[%s72 + $0x90] sm:$0xff] %v109
          %v111 = vld [vmem:[%s71 + $0x98] sm:$0xff]
          %112 = vst [vmem:[%s72 + $0x98] sm:$0xff] %v111
          %v113 = vld [vmem:[%s71 + $0xa0] sm:$0xff]
          %114 = vst [vmem:[%s72 + $0xa0] sm:$0xff] %v113
          %v115 = vld [vmem:[%s71 + $0xa8] sm:$0xff]
          %116 = vst [vmem:[%s72 + $0xa8] sm:$0xff] %v115
          %v117 = vld [vmem:[%s71 + $0xb0] sm:$0xff]
          %118 = vst [vmem:[%s72 + $0xb0] sm:$0xff] %v117
          %v119 = vld [vmem:[%s71 + $0xb8] sm:$0xff]
          %120 = vst [vmem:[%s72 + $0xb8] sm:$0xff] %v119
          %v121 = vld [vmem:[%s71 + $0xc0] sm:$0xff]
          %122 = vst [vmem:[%s72 + $0xc0] sm:$0xff] %v121
          %v123 = vld [vmem:[%s71 + $0xc8] sm:$0xff]
          %124 = vst [vmem:[%s72 + $0xc8] sm:$0xff] %v123
          %v125 = vld [vmem:[%s71 + $0xd0] sm:$0xff]
          %126 = vst [vmem:[%s72 + $0xd0] sm:$0xff] %v125
          %v127 = vld [vmem:[%s71 + $0xd8] sm:$0xff]
          %128 = vst [vmem:[%s72 + $0xd8] sm:$0xff] %v127
          %v129 = vld [vmem:[%s71 + $0xe0] sm:$0xff]
          %130 = vst [vmem:[%s72 + $0xe0] sm:$0xff] %v129
          %v131 = vld [vmem:[%s71 + $0xe8] sm:$0xff]
          %132 = vst [vmem:[%s72 + $0xe8] sm:$0xff] %v131
          %v133 = vld [vmem:[%s71 + $0xf0] sm:$0xff]
          %134 = vst [vmem:[%s72 + $0xf0] sm:$0xff] %v133
          %v135 = vld [vmem:[%s71 + $0xf8] sm:$0xff]
          %136 = vst [vmem:[%s72 + $0xf8] sm:$0xff] %v135
          %v137 = vld [vmem:[%s71 + $0x100] sm:$0xff]
          %138 = vst [vmem:[%s72 + $0x100] sm:$0xff] %v137
          %v139 = vld [vmem:[%s71 + $0x108] sm:$0xff]
          %140 = vst [vmem:[%s72 + $0x108] sm:$0xff] %v139
          %v141 = vld [vmem:[%s71 + $0x110] sm:$0xff]
          %142 = vst [vmem:[%s72 + $0x110] sm:$0xff] %v141
          %v143 = vld [vmem:[%s71 + $0x118] sm:$0xff]
          %144 = vst [vmem:[%s72 + $0x118] sm:$0xff] %v143
          %v145 = vld [vmem:[%s71 + $0x120] sm:$0xff]
          %146 = vst [vmem:[%s72 + $0x120] sm:$0xff] %v145
          %v147 = vld [vmem:[%s71 + $0x128] sm:$0xff]
          %148 = vst [vmem:[%s72 + $0x128] sm:$0xff] %v147
          %v149 = vld [vmem:[%s71 + $0x130] sm:$0xff]
          %150 = vst [vmem:[%s72 + $0x130] sm:$0xff] %v149
          %v151 = vld [vmem:[%s71 + $0x138] sm:$0xff]
          %152 = vst [vmem:[%s72 + $0x138] sm:$0xff] %v151
          %v153 = vld [vmem:[%s71 + $0x140] sm:$0xff]
          %154 = vst [vmem:[%s72 + $0x140] sm:$0xff] %v153
          %v155 = vld [vmem:[%s71 + $0x148] sm:$0xff]
          %156 = vst [vmem:[%s72 + $0x148] sm:$0xff] %v155
          %v157 = vld [vmem:[%s71 + $0x150] sm:$0xff]
          %158 = vst [vmem:[%s72 + $0x150] sm:$0xff] %v157
          %v159 = vld [vmem:[%s71 + $0x158] sm:$0xff]
          %160 = vst [vmem:[%s72 + $0x158] sm:$0xff] %v159
          %v161 = vld [vmem:[%s71 + $0x160] sm:$0xff]
          %162 = vst [vmem:[%s72 + $0x160] sm:$0xff] %v161
          %v163 = vld [vmem:[%s71 + $0x168] sm:$0xff]
          %164 = vst [vmem:[%s72 + $0x168] sm:$0xff] %v163
          %v165 = vld [vmem:[%s71 + $0x170] sm:$0xff]
          %166 = vst [vmem:[%s72 + $0x170] sm:$0xff] %v165
          %v167 = vld [vmem:[%s71 + $0x178] sm:$0xff]
          %168 = vst [vmem:[%s72 + $0x178] sm:$0xff] %v167
          %v169 = vld [vmem:[%s71 + $0x180] sm:$0xff]
          %170 = vst [vmem:[%s72 + $0x180] sm:$0xff] %v169
          %v171 = vld [vmem:[%s71 + $0x188] sm:$0xff]
          %172 = vst [vmem:[%s72 + $0x188] sm:$0xff] %v171
          %v173 = vld [vmem:[%s71 + $0x190] sm:$0xff]
          %174 = vst [vmem:[%s72 + $0x190] sm:$0xff] %v173
          %v175 = vld [vmem:[%s71 + $0x198] sm:$0xff]
          %176 = vst [vmem:[%s72 + $0x198] sm:$0xff] %v175
          %v177 = vld [vmem:[%s71 + $0x1a0] sm:$0xff]
          %178 = vst [vmem:[%s72 + $0x1a0] sm:$0xff] %v177
          %v179 = vld [vmem:[%s71 + $0x1a8] sm:$0xff]
          %180 = vst [vmem:[%s72 + $0x1a8] sm:$0xff] %v179
          %v181 = vld [vmem:[%s71 + $0x1b0] sm:$0xff]
          %182 = vst [vmem:[%s72 + $0x1b0] sm:$0xff] %v181
          %v183 = vld [vmem:[%s71 + $0x1b8] sm:$0xff]
          %184 = vst [vmem:[%s72 + $0x1b8] sm:$0xff] %v183
          %v185 = vld [vmem:[%s71 + $0x1c0] sm:$0xff]
          %186 = vst [vmem:[%s72 + $0x1c0] sm:$0xff] %v185
          %v187 = vld [vmem:[%s71 + $0x1c8] sm:$0xff]
          %188 = vst [vmem:[%s72 + $0x1c8] sm:$0xff] %v187
          %v189 = vld [vmem:[%s71 + $0x1d0] sm:$0xff]
          %190 = vst [vmem:[%s72 + $0x1d0] sm:$0xff] %v189
          %v191 = vld [vmem:[%s71 + $0x1d8] sm:$0xff]
          %192 = vst [vmem:[%s72 + $0x1d8] sm:$0xff] %v191
          %v193 = vld [vmem:[%s71 + $0x1e0] sm:$0xff]
          %194 = vst [vmem:[%s72 + $0x1e0] sm:$0xff] %v193
          %v195 = vld [vmem:[%s71 + $0x1e8] sm:$0xff]
          %196 = vst [vmem:[%s72 + $0x1e8] sm:$0xff] %v195
          %v197 = vld [vmem:[%s71 + $0x1f0] sm:$0xff]
          %198 = vst [vmem:[%s72 + $0x1f0] sm:$0xff] %v197
          %v199 = vld [vmem:[%s71 + $0x1f8] sm:$0xff]
          %200 = vst [vmem:[%s72 + $0x1f8] sm:$0xff] %v199
        $region65: #{dueling_dqn_forward.1} parent=59 // loop_footer
          %s70 = sadd.s32 1, %s66
        $region66: #{dueling_dqn_forward.1} parent=59 // loop_footer_branch
          %65 = sbr.rel target = $region62
        $region67: #{dueling_dqn_forward.1} parent=59 // loop_exit
          _
      $region60: #{dueling_dqn_forward.1} parent=44 // pred_fallthru
        _
      %p201 = pneg %p61
      // Predicated region
      $region68: #{dueling_dqn_forward.1} parent=44 // pred_check
        _
      $region69: #{dueling_dqn_forward.1} parent=44 // pred_check_branch
        %203 = sbr.rel (%p61) target = $region71
      $region70: #{dueling_dqn_forward.1} parent=44 // pred_region
        %s204 = sand.u32 512, 7
      $region71: #{dueling_dqn_forward.1} parent=44 // pred_fallthru
        _
    $region45: #{dueling_dqn_forward.1} parent=1 // pred_fallthru
      _
    // Predicated region
    $region46: #{dueling_dqn_forward.1} parent=1 // pred_check
      %p45 = pneg %p41
    $region47: #{dueling_dqn_forward.1} parent=1 // pred_check_branch
      %47 = sbr.rel (%p45) target = $region49
    $region48: #{dueling_dqn_forward.1} parent=1 // pred_region
      %s48 = sshll.u32 1, 512
      %s49 = ssub.s32 %s48, 1
      loop: start=0, step=1, limit=1
      $region50: #{dueling_dqn_forward.1} parent=48 // loop_pre_header
        _
      $region51: #{dueling_dqn_forward.1} parent=48 // loop_header
        %s51 = sphi 0, %s55
        %p52 = scmp.ge.s32.totalorder %s51, 1
        %s56 = sphi %s10, %s10
        %s57 = sphi [#allocation3], [#allocation3]
      $region52: #{dueling_dqn_forward.1} parent=48 // loop_header_branch
        %54 = sbr.rel (%p52) target = $region56
      $region53: #{dueling_dqn_forward.1} parent=48 // loop_body
        %v58 = vld [vmem:[%s56] sm:%s49]
        %59 = vst [vmem:[%s57] sm:%s49] %v58
      $region54: #{dueling_dqn_forward.1} parent=48 // loop_footer
        %s55 = sadd.s32 1, %s51
      $region55: #{dueling_dqn_forward.1} parent=48 // loop_footer_branch
        %50 = sbr.rel target = $region51
      $region56: #{dueling_dqn_forward.1} parent=48 // loop_exit
        _
    $region49: #{dueling_dqn_forward.1} parent=1 // pred_fallthru
      _
    // Predicated region
    $region72: #{dueling_dqn_forward.1} parent=1 // pred_check
      _
    $region73: #{dueling_dqn_forward.1} parent=1 // pred_check_branch
      %207 = sbr.rel (0) target = $region75
    $region74: #{dueling_dqn_forward.1} parent=1 // pred_region
      %208 = vsyncadd [#allocation7], 8192
    $region75: #{dueling_dqn_forward.1} parent=1 // pred_fallthru
      _
    %s209 = scalar_lea.sflag [#allocation7], 1
    %p211 = scmp.lt.u32.totalorder 576, 8
    %p212 = pneg %p211
    // Predicated region
    $region76: #{dueling_dqn_forward.1} parent=1 // pred_check
      _
    $region77: #{dueling_dqn_forward.1} parent=1 // pred_check_branch
      %214 = sbr.rel (%p211) target = $region79
    $region78: #{dueling_dqn_forward.1} parent=1 // pred_region
      %s230 = sand.u32 576, 7
      %p231 = scmp.eq.s32.totalorder %s230, 0
      // Predicated region
      $region91: #{dueling_dqn_forward.1} parent=78 // pred_check
        %p232 = pneg %p231
      $region92: #{dueling_dqn_forward.1} parent=78 // pred_check_branch
        %234 = sbr.rel (%p232) target = $region94
      $region93: #{dueling_dqn_forward.1} parent=78 // pred_region
        loop: start=0, step=1, limit=1
        $region95: #{dueling_dqn_forward.1} parent=93 // loop_pre_header
          _
        $region96: #{dueling_dqn_forward.1} parent=93 // loop_header
          %s236 = sphi 0, %s240
          %p237 = scmp.ge.s32.totalorder %s236, 1
          %s241 = sphi %s11, %s11
          %s242 = sphi [#allocation4], [#allocation4]
        $region97: #{dueling_dqn_forward.1} parent=93 // loop_header_branch
          %239 = sbr.rel (%p237) target = $region101
        $region98: #{dueling_dqn_forward.1} parent=93 // loop_body
          %v243 = vld [vmem:[%s241] sm:$0xff]
          %244 = vst [vmem:[%s242] sm:$0xff] %v243
          %v245 = vld [vmem:[%s241 + $0x8] sm:$0xff]
          %246 = vst [vmem:[%s242 + $0x8] sm:$0xff] %v245
          %v247 = vld [vmem:[%s241 + $0x10] sm:$0xff]
          %248 = vst [vmem:[%s242 + $0x10] sm:$0xff] %v247
          %v249 = vld [vmem:[%s241 + $0x18] sm:$0xff]
          %250 = vst [vmem:[%s242 + $0x18] sm:$0xff] %v249
          %v251 = vld [vmem:[%s241 + $0x20] sm:$0xff]
          %252 = vst [vmem:[%s242 + $0x20] sm:$0xff] %v251
          %v253 = vld [vmem:[%s241 + $0x28] sm:$0xff]
          %254 = vst [vmem:[%s242 + $0x28] sm:$0xff] %v253
          %v255 = vld [vmem:[%s241 + $0x30] sm:$0xff]
          %256 = vst [vmem:[%s242 + $0x30] sm:$0xff] %v255
          %v257 = vld [vmem:[%s241 + $0x38] sm:$0xff]
          %258 = vst [vmem:[%s242 + $0x38] sm:$0xff] %v257
          %v259 = vld [vmem:[%s241 + $0x40] sm:$0xff]
          %260 = vst [vmem:[%s242 + $0x40] sm:$0xff] %v259
          %v261 = vld [vmem:[%s241 + $0x48] sm:$0xff]
          %262 = vst [vmem:[%s242 + $0x48] sm:$0xff] %v261
          %v263 = vld [vmem:[%s241 + $0x50] sm:$0xff]
          %264 = vst [vmem:[%s242 + $0x50] sm:$0xff] %v263
          %v265 = vld [vmem:[%s241 + $0x58] sm:$0xff]
          %266 = vst [vmem:[%s242 + $0x58] sm:$0xff] %v265
          %v267 = vld [vmem:[%s241 + $0x60] sm:$0xff]
          %268 = vst [vmem:[%s242 + $0x60] sm:$0xff] %v267
          %v269 = vld [vmem:[%s241 + $0x68] sm:$0xff]
          %270 = vst [vmem:[%s242 + $0x68] sm:$0xff] %v269
          %v271 = vld [vmem:[%s241 + $0x70] sm:$0xff]
          %272 = vst [vmem:[%s242 + $0x70] sm:$0xff] %v271
          %v273 = vld [vmem:[%s241 + $0x78] sm:$0xff]
          %274 = vst [vmem:[%s242 + $0x78] sm:$0xff] %v273
          %v275 = vld [vmem:[%s241 + $0x80] sm:$0xff]
          %276 = vst [vmem:[%s242 + $0x80] sm:$0xff] %v275
          %v277 = vld [vmem:[%s241 + $0x88] sm:$0xff]
          %278 = vst [vmem:[%s242 + $0x88] sm:$0xff] %v277
          %v279 = vld [vmem:[%s241 + $0x90] sm:$0xff]
          %280 = vst [vmem:[%s242 + $0x90] sm:$0xff] %v279
          %v281 = vld [vmem:[%s241 + $0x98] sm:$0xff]
          %282 = vst [vmem:[%s242 + $0x98] sm:$0xff] %v281
          %v283 = vld [vmem:[%s241 + $0xa0] sm:$0xff]
          %284 = vst [vmem:[%s242 + $0xa0] sm:$0xff] %v283
          %v285 = vld [vmem:[%s241 + $0xa8] sm:$0xff]
          %286 = vst [vmem:[%s242 + $0xa8] sm:$0xff] %v285
          %v287 = vld [vmem:[%s241 + $0xb0] sm:$0xff]
          %288 = vst [vmem:[%s242 + $0xb0] sm:$0xff] %v287
          %v289 = vld [vmem:[%s241 + $0xb8] sm:$0xff]
          %290 = vst [vmem:[%s242 + $0xb8] sm:$0xff] %v289
          %v291 = vld [vmem:[%s241 + $0xc0] sm:$0xff]
          %292 = vst [vmem:[%s242 + $0xc0] sm:$0xff] %v291
          %v293 = vld [vmem:[%s241 + $0xc8] sm:$0xff]
          %294 = vst [vmem:[%s242 + $0xc8] sm:$0xff] %v293
          %v295 = vld [vmem:[%s241 + $0xd0] sm:$0xff]
          %296 = vst [vmem:[%s242 + $0xd0] sm:$0xff] %v295
          %v297 = vld [vmem:[%s241 + $0xd8] sm:$0xff]
          %298 = vst [vmem:[%s242 + $0xd8] sm:$0xff] %v297
          %v299 = vld [vmem:[%s241 + $0xe0] sm:$0xff]
          %300 = vst [vmem:[%s242 + $0xe0] sm:$0xff] %v299
          %v301 = vld [vmem:[%s241 + $0xe8] sm:$0xff]
          %302 = vst [vmem:[%s242 + $0xe8] sm:$0xff] %v301
          %v303 = vld [vmem:[%s241 + $0xf0] sm:$0xff]
          %304 = vst [vmem:[%s242 + $0xf0] sm:$0xff] %v303
          %v305 = vld [vmem:[%s241 + $0xf8] sm:$0xff]
          %306 = vst [vmem:[%s242 + $0xf8] sm:$0xff] %v305
          %v307 = vld [vmem:[%s241 + $0x100] sm:$0xff]
          %308 = vst [vmem:[%s242 + $0x100] sm:$0xff] %v307
          %v309 = vld [vmem:[%s241 + $0x108] sm:$0xff]
          %310 = vst [vmem:[%s242 + $0x108] sm:$0xff] %v309
          %v311 = vld [vmem:[%s241 + $0x110] sm:$0xff]
          %312 = vst [vmem:[%s242 + $0x110] sm:$0xff] %v311
          %v313 = vld [vmem:[%s241 + $0x118] sm:$0xff]
          %314 = vst [vmem:[%s242 + $0x118] sm:$0xff] %v313
          %v315 = vld [vmem:[%s241 + $0x120] sm:$0xff]
          %316 = vst [vmem:[%s242 + $0x120] sm:$0xff] %v315
          %v317 = vld [vmem:[%s241 + $0x128] sm:$0xff]
          %318 = vst [vmem:[%s242 + $0x128] sm:$0xff] %v317
          %v319 = vld [vmem:[%s241 + $0x130] sm:$0xff]
          %320 = vst [vmem:[%s242 + $0x130] sm:$0xff] %v319
          %v321 = vld [vmem:[%s241 + $0x138] sm:$0xff]
          %322 = vst [vmem:[%s242 + $0x138] sm:$0xff] %v321
          %v323 = vld [vmem:[%s241 + $0x140] sm:$0xff]
          %324 = vst [vmem:[%s242 + $0x140] sm:$0xff] %v323
          %v325 = vld [vmem:[%s241 + $0x148] sm:$0xff]
          %326 = vst [vmem:[%s242 + $0x148] sm:$0xff] %v325
          %v327 = vld [vmem:[%s241 + $0x150] sm:$0xff]
          %328 = vst [vmem:[%s242 + $0x150] sm:$0xff] %v327
          %v329 = vld [vmem:[%s241 + $0x158] sm:$0xff]
          %330 = vst [vmem:[%s242 + $0x158] sm:$0xff] %v329
          %v331 = vld [vmem:[%s241 + $0x160] sm:$0xff]
          %332 = vst [vmem:[%s242 + $0x160] sm:$0xff] %v331
          %v333 = vld [vmem:[%s241 + $0x168] sm:$0xff]
          %334 = vst [vmem:[%s242 + $0x168] sm:$0xff] %v333
          %v335 = vld [vmem:[%s241 + $0x170] sm:$0xff]
          %336 = vst [vmem:[%s242 + $0x170] sm:$0xff] %v335
          %v337 = vld [vmem:[%s241 + $0x178] sm:$0xff]
          %338 = vst [vmem:[%s242 + $0x178] sm:$0xff] %v337
          %v339 = vld [vmem:[%s241 + $0x180] sm:$0xff]
          %340 = vst [vmem:[%s242 + $0x180] sm:$0xff] %v339
          %v341 = vld [vmem:[%s241 + $0x188] sm:$0xff]
          %342 = vst [vmem:[%s242 + $0x188] sm:$0xff] %v341
          %v343 = vld [vmem:[%s241 + $0x190] sm:$0xff]
          %344 = vst [vmem:[%s242 + $0x190] sm:$0xff] %v343
          %v345 = vld [vmem:[%s241 + $0x198] sm:$0xff]
          %346 = vst [vmem:[%s242 + $0x198] sm:$0xff] %v345
          %v347 = vld [vmem:[%s241 + $0x1a0] sm:$0xff]
          %348 = vst [vmem:[%s242 + $0x1a0] sm:$0xff] %v347
          %v349 = vld [vmem:[%s241 + $0x1a8] sm:$0xff]
          %350 = vst [vmem:[%s242 + $0x1a8] sm:$0xff] %v349
          %v351 = vld [vmem:[%s241 + $0x1b0] sm:$0xff]
          %352 = vst [vmem:[%s242 + $0x1b0] sm:$0xff] %v351
          %v353 = vld [vmem:[%s241 + $0x1b8] sm:$0xff]
          %354 = vst [vmem:[%s242 + $0x1b8] sm:$0xff] %v353
          %v355 = vld [vmem:[%s241 + $0x1c0] sm:$0xff]
          %356 = vst [vmem:[%s242 + $0x1c0] sm:$0xff] %v355
          %v357 = vld [vmem:[%s241 + $0x1c8] sm:$0xff]
          %358 = vst [vmem:[%s242 + $0x1c8] sm:$0xff] %v357
          %v359 = vld [vmem:[%s241 + $0x1d0] sm:$0xff]
          %360 = vst [vmem:[%s242 + $0x1d0] sm:$0xff] %v359
          %v361 = vld [vmem:[%s241 + $0x1d8] sm:$0xff]
          %362 = vst [vmem:[%s242 + $0x1d8] sm:$0xff] %v361
          %v363 = vld [vmem:[%s241 + $0x1e0] sm:$0xff]
          %364 = vst [vmem:[%s242 + $0x1e0] sm:$0xff] %v363
          %v365 = vld [vmem:[%s241 + $0x1e8] sm:$0xff]
          %366 = vst [vmem:[%s242 + $0x1e8] sm:$0xff] %v365
          %v367 = vld [vmem:[%s241 + $0x1f0] sm:$0xff]
          %368 = vst [vmem:[%s242 + $0x1f0] sm:$0xff] %v367
          %v369 = vld [vmem:[%s241 + $0x1f8] sm:$0xff]
          %370 = vst [vmem:[%s242 + $0x1f8] sm:$0xff] %v369
          %v371 = vld [vmem:[%s241 + $0x200] sm:$0xff]
          %372 = vst [vmem:[%s242 + $0x200] sm:$0xff] %v371
          %v373 = vld [vmem:[%s241 + $0x208] sm:$0xff]
          %374 = vst [vmem:[%s242 + $0x208] sm:$0xff] %v373
          %v375 = vld [vmem:[%s241 + $0x210] sm:$0xff]
          %376 = vst [vmem:[%s242 + $0x210] sm:$0xff] %v375
          %v377 = vld [vmem:[%s241 + $0x218] sm:$0xff]
          %378 = vst [vmem:[%s242 + $0x218] sm:$0xff] %v377
          %v379 = vld [vmem:[%s241 + $0x220] sm:$0xff]
          %380 = vst [vmem:[%s242 + $0x220] sm:$0xff] %v379
          %v381 = vld [vmem:[%s241 + $0x228] sm:$0xff]
          %382 = vst [vmem:[%s242 + $0x228] sm:$0xff] %v381
          %v383 = vld [vmem:[%s241 + $0x230] sm:$0xff]
          %384 = vst [vmem:[%s242 + $0x230] sm:$0xff] %v383
          %v385 = vld [vmem:[%s241 + $0x238] sm:$0xff]
          %386 = vst [vmem:[%s242 + $0x238] sm:$0xff] %v385
        $region99: #{dueling_dqn_forward.1} parent=93 // loop_footer
          %s240 = sadd.s32 1, %s236
        $region100: #{dueling_dqn_forward.1} parent=93 // loop_footer_branch
          %235 = sbr.rel target = $region96
        $region101: #{dueling_dqn_forward.1} parent=93 // loop_exit
          _
      $region94: #{dueling_dqn_forward.1} parent=78 // pred_fallthru
        _
      %p387 = pneg %p231
      // Predicated region
      $region102: #{dueling_dqn_forward.1} parent=78 // pred_check
        _
      $region103: #{dueling_dqn_forward.1} parent=78 // pred_check_branch
        %389 = sbr.rel (%p231) target = $region105
      $region104: #{dueling_dqn_forward.1} parent=78 // pred_region
        %s390 = sand.u32 576, 7
      $region105: #{dueling_dqn_forward.1} parent=78 // pred_fallthru
        _
    $region79: #{dueling_dqn_forward.1} parent=1 // pred_fallthru
      _
    // Predicated region
    $region80: #{dueling_dqn_forward.1} parent=1 // pred_check
      %p215 = pneg %p211
    $region81: #{dueling_dqn_forward.1} parent=1 // pred_check_branch
      %217 = sbr.rel (%p215) target = $region83
    $region82: #{dueling_dqn_forward.1} parent=1 // pred_region
      %s218 = sshll.u32 1, 576
      %s219 = ssub.s32 %s218, 1
      loop: start=0, step=1, limit=1
      $region84: #{dueling_dqn_forward.1} parent=82 // loop_pre_header
        _
      $region85: #{dueling_dqn_forward.1} parent=82 // loop_header
        %s221 = sphi 0, %s225
        %p222 = scmp.ge.s32.totalorder %s221, 1
        %s226 = sphi %s11, %s11
        %s227 = sphi [#allocation4], [#allocation4]
      $region86: #{dueling_dqn_forward.1} parent=82 // loop_header_branch
        %224 = sbr.rel (%p222) target = $region90
      $region87: #{dueling_dqn_forward.1} parent=82 // loop_body
        %v228 = vld [vmem:[%s226] sm:%s219]
        %229 = vst [vmem:[%s227] sm:%s219] %v228
      $region88: #{dueling_dqn_forward.1} parent=82 // loop_footer
        %s225 = sadd.s32 1, %s221
      $region89: #{dueling_dqn_forward.1} parent=82 // loop_footer_branch
        %220 = sbr.rel target = $region85
      $region90: #{dueling_dqn_forward.1} parent=82 // loop_exit
        _
    $region83: #{dueling_dqn_forward.1} parent=1 // pred_fallthru
      _
    // Predicated region
    $region106: #{dueling_dqn_forward.1} parent=1 // pred_check
      _
    $region107: #{dueling_dqn_forward.1} parent=1 // pred_check_branch
      %393 = sbr.rel (0) target = $region109
    $region108: #{dueling_dqn_forward.1} parent=1 // pred_region
      %394 = vsyncadd %s209, 9216
    $region109: #{dueling_dqn_forward.1} parent=1 // pred_fallthru
      _
    %s395 = scalar_lea.sflag [#allocation7], 2
    %p397 = scmp.lt.u32.totalorder 512, 8
    %p398 = pneg %p397
    // Predicated region
    $region110: #{dueling_dqn_forward.1} parent=1 // pred_check
      _
    $region111: #{dueling_dqn_forward.1} parent=1 // pred_check_branch
      %400 = sbr.rel (%p397) target = $region113
    $region112: #{dueling_dqn_forward.1} parent=1 // pred_region
      %s416 = sand.u32 512, 7
      %p417 = scmp.eq.s32.totalorder %s416, 0
      // Predicated region
      $region125: #{dueling_dqn_forward.1} parent=112 // pred_check
        %p418 = pneg %p417
      $region126: #{dueling_dqn_forward.1} parent=112 // pred_check_branch
        %420 = sbr.rel (%p418) target = $region128
      $region127: #{dueling_dqn_forward.1} parent=112 // pred_region
        loop: start=0, step=1, limit=1
        $region129: #{dueling_dqn_forward.1} parent=127 // loop_pre_header
          _
        $region130: #{dueling_dqn_forward.1} parent=127 // loop_header
          %s422 = sphi 0, %s426
          %p423 = scmp.ge.s32.totalorder %s422, 1
          %s427 = sphi %s12, %s12
          %s428 = sphi [#allocation5], [#allocation5]
        $region131: #{dueling_dqn_forward.1} parent=127 // loop_header_branch
          %425 = sbr.rel (%p423) target = $region135
        $region132: #{dueling_dqn_forward.1} parent=127 // loop_body
          %v429 = vld [vmem:[%s427] sm:$0xff]
          %430 = vst [vmem:[%s428] sm:$0xff] %v429
          %v431 = vld [vmem:[%s427 + $0x8] sm:$0xff]
          %432 = vst [vmem:[%s428 + $0x8] sm:$0xff] %v431
          %v433 = vld [vmem:[%s427 + $0x10] sm:$0xff]
          %434 = vst [vmem:[%s428 + $0x10] sm:$0xff] %v433
          %v435 = vld [vmem:[%s427 + $0x18] sm:$0xff]
          %436 = vst [vmem:[%s428 + $0x18] sm:$0xff] %v435
          %v437 = vld [vmem:[%s427 + $0x20] sm:$0xff]
          %438 = vst [vmem:[%s428 + $0x20] sm:$0xff] %v437
          %v439 = vld [vmem:[%s427 + $0x28] sm:$0xff]
          %440 = vst [vmem:[%s428 + $0x28] sm:$0xff] %v439
          %v441 = vld [vmem:[%s427 + $0x30] sm:$0xff]
          %442 = vst [vmem:[%s428 + $0x30] sm:$0xff] %v441
          %v443 = vld [vmem:[%s427 + $0x38] sm:$0xff]
          %444 = vst [vmem:[%s428 + $0x38] sm:$0xff] %v443
          %v445 = vld [vmem:[%s427 + $0x40] sm:$0xff]
          %446 = vst [vmem:[%s428 + $0x40] sm:$0xff] %v445
          %v447 = vld [vmem:[%s427 + $0x48] sm:$0xff]
          %448 = vst [vmem:[%s428 + $0x48] sm:$0xff] %v447
          %v449 = vld [vmem:[%s427 + $0x50] sm:$0xff]
          %450 = vst [vmem:[%s428 + $0x50] sm:$0xff] %v449
          %v451 = vld [vmem:[%s427 + $0x58] sm:$0xff]
          %452 = vst [vmem:[%s428 + $0x58] sm:$0xff] %v451
          %v453 = vld [vmem:[%s427 + $0x60] sm:$0xff]
          %454 = vst [vmem:[%s428 + $0x60] sm:$0xff] %v453
          %v455 = vld [vmem:[%s427 + $0x68] sm:$0xff]
          %456 = vst [vmem:[%s428 + $0x68] sm:$0xff] %v455
          %v457 = vld [vmem:[%s427 + $0x70] sm:$0xff]
          %458 = vst [vmem:[%s428 + $0x70] sm:$0xff] %v457
          %v459 = vld [vmem:[%s427 + $0x78] sm:$0xff]
          %460 = vst [vmem:[%s428 + $0x78] sm:$0xff] %v459
          %v461 = vld [vmem:[%s427 + $0x80] sm:$0xff]
          %462 = vst [vmem:[%s428 + $0x80] sm:$0xff] %v461
          %v463 = vld [vmem:[%s427 + $0x88] sm:$0xff]
          %464 = vst [vmem:[%s428 + $0x88] sm:$0xff] %v463
          %v465 = vld [vmem:[%s427 + $0x90] sm:$0xff]
          %466 = vst [vmem:[%s428 + $0x90] sm:$0xff] %v465
          %v467 = vld [vmem:[%s427 + $0x98] sm:$0xff]
          %468 = vst [vmem:[%s428 + $0x98] sm:$0xff] %v467
          %v469 = vld [vmem:[%s427 + $0xa0] sm:$0xff]
          %470 = vst [vmem:[%s428 + $0xa0] sm:$0xff] %v469
          %v471 = vld [vmem:[%s427 + $0xa8] sm:$0xff]
          %472 = vst [vmem:[%s428 + $0xa8] sm:$0xff] %v471
          %v473 = vld [vmem:[%s427 + $0xb0] sm:$0xff]
          %474 = vst [vmem:[%s428 + $0xb0] sm:$0xff] %v473
          %v475 = vld [vmem:[%s427 + $0xb8] sm:$0xff]
          %476 = vst [vmem:[%s428 + $0xb8] sm:$0xff] %v475
          %v477 = vld [vmem:[%s427 + $0xc0] sm:$0xff]
          %478 = vst [vmem:[%s428 + $0xc0] sm:$0xff] %v477
          %v479 = vld [vmem:[%s427 + $0xc8] sm:$0xff]
          %480 = vst [vmem:[%s428 + $0xc8] sm:$0xff] %v479
          %v481 = vld [vmem:[%s427 + $0xd0] sm:$0xff]
          %482 = vst [vmem:[%s428 + $0xd0] sm:$0xff] %v481
          %v483 = vld [vmem:[%s427 + $0xd8] sm:$0xff]
          %484 = vst [vmem:[%s428 + $0xd8] sm:$0xff] %v483
          %v485 = vld [vmem:[%s427 + $0xe0] sm:$0xff]
          %486 = vst [vmem:[%s428 + $0xe0] sm:$0xff] %v485
          %v487 = vld [vmem:[%s427 + $0xe8] sm:$0xff]
          %488 = vst [vmem:[%s428 + $0xe8] sm:$0xff] %v487
          %v489 = vld [vmem:[%s427 + $0xf0] sm:$0xff]
          %490 = vst [vmem:[%s428 + $0xf0] sm:$0xff] %v489
          %v491 = vld [vmem:[%s427 + $0xf8] sm:$0xff]
          %492 = vst [vmem:[%s428 + $0xf8] sm:$0xff] %v491
          %v493 = vld [vmem:[%s427 + $0x100] sm:$0xff]
          %494 = vst [vmem:[%s428 + $0x100] sm:$0xff] %v493
          %v495 = vld [vmem:[%s427 + $0x108] sm:$0xff]
          %496 = vst [vmem:[%s428 + $0x108] sm:$0xff] %v495
          %v497 = vld [vmem:[%s427 + $0x110] sm:$0xff]
          %498 = vst [vmem:[%s428 + $0x110] sm:$0xff] %v497
          %v499 = vld [vmem:[%s427 + $0x118] sm:$0xff]
          %500 = vst [vmem:[%s428 + $0x118] sm:$0xff] %v499
          %v501 = vld [vmem:[%s427 + $0x120] sm:$0xff]
          %502 = vst [vmem:[%s428 + $0x120] sm:$0xff] %v501
          %v503 = vld [vmem:[%s427 + $0x128] sm:$0xff]
          %504 = vst [vmem:[%s428 + $0x128] sm:$0xff] %v503
          %v505 = vld [vmem:[%s427 + $0x130] sm:$0xff]
          %506 = vst [vmem:[%s428 + $0x130] sm:$0xff] %v505
          %v507 = vld [vmem:[%s427 + $0x138] sm:$0xff]
          %508 = vst [vmem:[%s428 + $0x138] sm:$0xff] %v507
          %v509 = vld [vmem:[%s427 + $0x140] sm:$0xff]
          %510 = vst [vmem:[%s428 + $0x140] sm:$0xff] %v509
          %v511 = vld [vmem:[%s427 + $0x148] sm:$0xff]
          %512 = vst [vmem:[%s428 + $0x148] sm:$0xff] %v511
          %v513 = vld [vmem:[%s427 + $0x150] sm:$0xff]
          %514 = vst [vmem:[%s428 + $0x150] sm:$0xff] %v513
          %v515 = vld [vmem:[%s427 + $0x158] sm:$0xff]
          %516 = vst [vmem:[%s428 + $0x158] sm:$0xff] %v515
          %v517 = vld [vmem:[%s427 + $0x160] sm:$0xff]
          %518 = vst [vmem:[%s428 + $0x160] sm:$0xff] %v517
          %v519 = vld [vmem:[%s427 + $0x168] sm:$0xff]
          %520 = vst [vmem:[%s428 + $0x168] sm:$0xff] %v519
          %v521 = vld [vmem:[%s427 + $0x170] sm:$0xff]
          %522 = vst [vmem:[%s428 + $0x170] sm:$0xff] %v521
          %v523 = vld [vmem:[%s427 + $0x178] sm:$0xff]
          %524 = vst [vmem:[%s428 + $0x178] sm:$0xff] %v523
          %v525 = vld [vmem:[%s427 + $0x180] sm:$0xff]
          %526 = vst [vmem:[%s428 + $0x180] sm:$0xff] %v525
          %v527 = vld [vmem:[%s427 + $0x188] sm:$0xff]
          %528 = vst [vmem:[%s428 + $0x188] sm:$0xff] %v527
          %v529 = vld [vmem:[%s427 + $0x190] sm:$0xff]
          %530 = vst [vmem:[%s428 + $0x190] sm:$0xff] %v529
          %v531 = vld [vmem:[%s427 + $0x198] sm:$0xff]
          %532 = vst [vmem:[%s428 + $0x198] sm:$0xff] %v531
          %v533 = vld [vmem:[%s427 + $0x1a0] sm:$0xff]
          %534 = vst [vmem:[%s428 + $0x1a0] sm:$0xff] %v533
          %v535 = vld [vmem:[%s427 + $0x1a8] sm:$0xff]
          %536 = vst [vmem:[%s428 + $0x1a8] sm:$0xff] %v535
          %v537 = vld [vmem:[%s427 + $0x1b0] sm:$0xff]
          %538 = vst [vmem:[%s428 + $0x1b0] sm:$0xff] %v537
          %v539 = vld [vmem:[%s427 + $0x1b8] sm:$0xff]
          %540 = vst [vmem:[%s428 + $0x1b8] sm:$0xff] %v539
          %v541 = vld [vmem:[%s427 + $0x1c0] sm:$0xff]
          %542 = vst [vmem:[%s428 + $0x1c0] sm:$0xff] %v541
          %v543 = vld [vmem:[%s427 + $0x1c8] sm:$0xff]
          %544 = vst [vmem:[%s428 + $0x1c8] sm:$0xff] %v543
          %v545 = vld [vmem:[%s427 + $0x1d0] sm:$0xff]
          %546 = vst [vmem:[%s428 + $0x1d0] sm:$0xff] %v545
          %v547 = vld [vmem:[%s427 + $0x1d8] sm:$0xff]
          %548 = vst [vmem:[%s428 + $0x1d8] sm:$0xff] %v547
          %v549 = vld [vmem:[%s427 + $0x1e0] sm:$0xff]
          %550 = vst [vmem:[%s428 + $0x1e0] sm:$0xff] %v549
          %v551 = vld [vmem:[%s427 + $0x1e8] sm:$0xff]
          %552 = vst [vmem:[%s428 + $0x1e8] sm:$0xff] %v551
          %v553 = vld [vmem:[%s427 + $0x1f0] sm:$0xff]
          %554 = vst [vmem:[%s428 + $0x1f0] sm:$0xff] %v553
          %v555 = vld [vmem:[%s427 + $0x1f8] sm:$0xff]
          %556 = vst [vmem:[%s428 + $0x1f8] sm:$0xff] %v555
        $region133: #{dueling_dqn_forward.1} parent=127 // loop_footer
          %s426 = sadd.s32 1, %s422
        $region134: #{dueling_dqn_forward.1} parent=127 // loop_footer_branch
          %421 = sbr.rel target = $region130
        $region135: #{dueling_dqn_forward.1} parent=127 // loop_exit
          _
      $region128: #{dueling_dqn_forward.1} parent=112 // pred_fallthru
        _
      %p557 = pneg %p417
      // Predicated region
      $region136: #{dueling_dqn_forward.1} parent=112 // pred_check
        _
      $region137: #{dueling_dqn_forward.1} parent=112 // pred_check_branch
        %559 = sbr.rel (%p417) target = $region139
      $region138: #{dueling_dqn_forward.1} parent=112 // pred_region
        %s560 = sand.u32 512, 7
      $region139: #{dueling_dqn_forward.1} parent=112 // pred_fallthru
        _
    $region113: #{dueling_dqn_forward.1} parent=1 // pred_fallthru
      _
    // Predicated region
    $region114: #{dueling_dqn_forward.1} parent=1 // pred_check
      %p401 = pneg %p397
    $region115: #{dueling_dqn_forward.1} parent=1 // pred_check_branch
      %403 = sbr.rel (%p401) target = $region117
    $region116: #{dueling_dqn_forward.1} parent=1 // pred_region
      %s404 = sshll.u32 1, 512
      %s405 = ssub.s32 %s404, 1
      loop: start=0, step=1, limit=1
      $region118: #{dueling_dqn_forward.1} parent=116 // loop_pre_header
        _
      $region119: #{dueling_dqn_forward.1} parent=116 // loop_header
        %s407 = sphi 0, %s411
        %p408 = scmp.ge.s32.totalorder %s407, 1
        %s412 = sphi %s12, %s12
        %s413 = sphi [#allocation5], [#allocation5]
      $region120: #{dueling_dqn_forward.1} parent=116 // loop_header_branch
        %410 = sbr.rel (%p408) target = $region124
      $region121: #{dueling_dqn_forward.1} parent=116 // loop_body
        %v414 = vld [vmem:[%s412] sm:%s405]
        %415 = vst [vmem:[%s413] sm:%s405] %v414
      $region122: #{dueling_dqn_forward.1} parent=116 // loop_footer
        %s411 = sadd.s32 1, %s407
      $region123: #{dueling_dqn_forward.1} parent=116 // loop_footer_branch
        %406 = sbr.rel target = $region119
      $region124: #{dueling_dqn_forward.1} parent=116 // loop_exit
        _
    $region117: #{dueling_dqn_forward.1} parent=1 // pred_fallthru
      _
    // Predicated region
    $region140: #{dueling_dqn_forward.1} parent=1 // pred_check
      _
    $region141: #{dueling_dqn_forward.1} parent=1 // pred_check_branch
      %563 = sbr.rel (0) target = $region143
    $region142: #{dueling_dqn_forward.1} parent=1 // pred_region
      %564 = vsyncadd %s395, 8192
    $region143: #{dueling_dqn_forward.1} parent=1 // pred_fallthru
      _
    %s565 = scalar_lea.sflag [#allocation7], 3
    %p567 = scmp.lt.u32.totalorder 1024, 8
    %p568 = pneg %p567
    // Predicated region
    $region144: #{dueling_dqn_forward.1} parent=1 // pred_check
      _
    $region145: #{dueling_dqn_forward.1} parent=1 // pred_check_branch
      %570 = sbr.rel (%p567) target = $region147
    $region146: #{dueling_dqn_forward.1} parent=1 // pred_region
      %s586 = sand.u32 1024, 7
      %p587 = scmp.eq.s32.totalorder %s586, 0
      // Predicated region
      $region159: #{dueling_dqn_forward.1} parent=146 // pred_check
        %p588 = pneg %p587
      $region160: #{dueling_dqn_forward.1} parent=146 // pred_check_branch
        %590 = sbr.rel (%p588) target = $region162
      $region161: #{dueling_dqn_forward.1} parent=146 // pred_region
        loop: start=0, step=1, limit=1
        $region163: #{dueling_dqn_forward.1} parent=161 // loop_pre_header
          _
        $region164: #{dueling_dqn_forward.1} parent=161 // loop_header
          %s592 = sphi 0, %s596
          %p593 = scmp.ge.s32.totalorder %s592, 1
          %s597 = sphi %s13, %s13
          %s598 = sphi [#allocation6], [#allocation6]
        $region165: #{dueling_dqn_forward.1} parent=161 // loop_header_branch
          %595 = sbr.rel (%p593) target = $region169
        $region166: #{dueling_dqn_forward.1} parent=161 // loop_body
          %v599 = vld [vmem:[%s597] sm:$0xff]
          %600 = vst [vmem:[%s598] sm:$0xff] %v599
          %v601 = vld [vmem:[%s597 + $0x8] sm:$0xff]
          %602 = vst [vmem:[%s598 + $0x8] sm:$0xff] %v601
          %v603 = vld [vmem:[%s597 + $0x10] sm:$0xff]
          %604 = vst [vmem:[%s598 + $0x10] sm:$0xff] %v603
          %v605 = vld [vmem:[%s597 + $0x18] sm:$0xff]
          %606 = vst [vmem:[%s598 + $0x18] sm:$0xff] %v605
          %v607 = vld [vmem:[%s597 + $0x20] sm:$0xff]
          %608 = vst [vmem:[%s598 + $0x20] sm:$0xff] %v607
          %v609 = vld [vmem:[%s597 + $0x28] sm:$0xff]
          %610 = vst [vmem:[%s598 + $0x28] sm:$0xff] %v609
          %v611 = vld [vmem:[%s597 + $0x30] sm:$0xff]
          %612 = vst [vmem:[%s598 + $0x30] sm:$0xff] %v611
          %v613 = vld [vmem:[%s597 + $0x38] sm:$0xff]
          %614 = vst [vmem:[%s598 + $0x38] sm:$0xff] %v613
          %v615 = vld [vmem:[%s597 + $0x40] sm:$0xff]
          %616 = vst [vmem:[%s598 + $0x40] sm:$0xff] %v615
          %v617 = vld [vmem:[%s597 + $0x48] sm:$0xff]
          %618 = vst [vmem:[%s598 + $0x48] sm:$0xff] %v617
          %v619 = vld [vmem:[%s597 + $0x50] sm:$0xff]
          %620 = vst [vmem:[%s598 + $0x50] sm:$0xff] %v619
          %v621 = vld [vmem:[%s597 + $0x58] sm:$0xff]
          %622 = vst [vmem:[%s598 + $0x58] sm:$0xff] %v621
          %v623 = vld [vmem:[%s597 + $0x60] sm:$0xff]
          %624 = vst [vmem:[%s598 + $0x60] sm:$0xff] %v623
          %v625 = vld [vmem:[%s597 + $0x68] sm:$0xff]
          %626 = vst [vmem:[%s598 + $0x68] sm:$0xff] %v625
          %v627 = vld [vmem:[%s597 + $0x70] sm:$0xff]
          %628 = vst [vmem:[%s598 + $0x70] sm:$0xff] %v627
          %v629 = vld [vmem:[%s597 + $0x78] sm:$0xff]
          %630 = vst [vmem:[%s598 + $0x78] sm:$0xff] %v629
          %v631 = vld [vmem:[%s597 + $0x80] sm:$0xff]
          %632 = vst [vmem:[%s598 + $0x80] sm:$0xff] %v631
          %v633 = vld [vmem:[%s597 + $0x88] sm:$0xff]
          %634 = vst [vmem:[%s598 + $0x88] sm:$0xff] %v633
          %v635 = vld [vmem:[%s597 + $0x90] sm:$0xff]
          %636 = vst [vmem:[%s598 + $0x90] sm:$0xff] %v635
          %v637 = vld [vmem:[%s597 + $0x98] sm:$0xff]
          %638 = vst [vmem:[%s598 + $0x98] sm:$0xff] %v637
          %v639 = vld [vmem:[%s597 + $0xa0] sm:$0xff]
          %640 = vst [vmem:[%s598 + $0xa0] sm:$0xff] %v639
          %v641 = vld [vmem:[%s597 + $0xa8] sm:$0xff]
          %642 = vst [vmem:[%s598 + $0xa8] sm:$0xff] %v641
          %v643 = vld [vmem:[%s597 + $0xb0] sm:$0xff]
          %644 = vst [vmem:[%s598 + $0xb0] sm:$0xff] %v643
          %v645 = vld [vmem:[%s597 + $0xb8] sm:$0xff]
          %646 = vst [vmem:[%s598 + $0xb8] sm:$0xff] %v645
          %v647 = vld [vmem:[%s597 + $0xc0] sm:$0xff]
          %648 = vst [vmem:[%s598 + $0xc0] sm:$0xff] %v647
          %v649 = vld [vmem:[%s597 + $0xc8] sm:$0xff]
          %650 = vst [vmem:[%s598 + $0xc8] sm:$0xff] %v649
          %v651 = vld [vmem:[%s597 + $0xd0] sm:$0xff]
          %652 = vst [vmem:[%s598 + $0xd0] sm:$0xff] %v651
          %v653 = vld [vmem:[%s597 + $0xd8] sm:$0xff]
          %654 = vst [vmem:[%s598 + $0xd8] sm:$0xff] %v653
          %v655 = vld [vmem:[%s597 + $0xe0] sm:$0xff]
          %656 = vst [vmem:[%s598 + $0xe0] sm:$0xff] %v655
          %v657 = vld [vmem:[%s597 + $0xe8] sm:$0xff]
          %658 = vst [vmem:[%s598 + $0xe8] sm:$0xff] %v657
          %v659 = vld [vmem:[%s597 + $0xf0] sm:$0xff]
          %660 = vst [vmem:[%s598 + $0xf0] sm:$0xff] %v659
          %v661 = vld [vmem:[%s597 + $0xf8] sm:$0xff]
          %662 = vst [vmem:[%s598 + $0xf8] sm:$0xff] %v661
          %v663 = vld [vmem:[%s597 + $0x100] sm:$0xff]
          %664 = vst [vmem:[%s598 + $0x100] sm:$0xff] %v663
          %v665 = vld [vmem:[%s597 + $0x108] sm:$0xff]
          %666 = vst [vmem:[%s598 + $0x108] sm:$0xff] %v665
          %v667 = vld [vmem:[%s597 + $0x110] sm:$0xff]
          %668 = vst [vmem:[%s598 + $0x110] sm:$0xff] %v667
          %v669 = vld [vmem:[%s597 + $0x118] sm:$0xff]
          %670 = vst [vmem:[%s598 + $0x118] sm:$0xff] %v669
          %v671 = vld [vmem:[%s597 + $0x120] sm:$0xff]
          %672 = vst [vmem:[%s598 + $0x120] sm:$0xff] %v671
          %v673 = vld [vmem:[%s597 + $0x128] sm:$0xff]
          %674 = vst [vmem:[%s598 + $0x128] sm:$0xff] %v673
          %v675 = vld [vmem:[%s597 + $0x130] sm:$0xff]
          %676 = vst [vmem:[%s598 + $0x130] sm:$0xff] %v675
          %v677 = vld [vmem:[%s597 + $0x138] sm:$0xff]
          %678 = vst [vmem:[%s598 + $0x138] sm:$0xff] %v677
          %v679 = vld [vmem:[%s597 + $0x140] sm:$0xff]
          %680 = vst [vmem:[%s598 + $0x140] sm:$0xff] %v679
          %v681 = vld [vmem:[%s597 + $0x148] sm:$0xff]
          %682 = vst [vmem:[%s598 + $0x148] sm:$0xff] %v681
          %v683 = vld [vmem:[%s597 + $0x150] sm:$0xff]
          %684 = vst [vmem:[%s598 + $0x150] sm:$0xff] %v683
          %v685 = vld [vmem:[%s597 + $0x158] sm:$0xff]
          %686 = vst [vmem:[%s598 + $0x158] sm:$0xff] %v685
          %v687 = vld [vmem:[%s597 + $0x160] sm:$0xff]
          %688 = vst [vmem:[%s598 + $0x160] sm:$0xff] %v687
          %v689 = vld [vmem:[%s597 + $0x168] sm:$0xff]
          %690 = vst [vmem:[%s598 + $0x168] sm:$0xff] %v689
          %v691 = vld [vmem:[%s597 + $0x170] sm:$0xff]
          %692 = vst [vmem:[%s598 + $0x170] sm:$0xff] %v691
          %v693 = vld [vmem:[%s597 + $0x178] sm:$0xff]
          %694 = vst [vmem:[%s598 + $0x178] sm:$0xff] %v693
          %v695 = vld [vmem:[%s597 + $0x180] sm:$0xff]
          %696 = vst [vmem:[%s598 + $0x180] sm:$0xff] %v695
          %v697 = vld [vmem:[%s597 + $0x188] sm:$0xff]
          %698 = vst [vmem:[%s598 + $0x188] sm:$0xff] %v697
          %v699 = vld [vmem:[%s597 + $0x190] sm:$0xff]
          %700 = vst [vmem:[%s598 + $0x190] sm:$0xff] %v699
          %v701 = vld [vmem:[%s597 + $0x198] sm:$0xff]
          %702 = vst [vmem:[%s598 + $0x198] sm:$0xff] %v701
          %v703 = vld [vmem:[%s597 + $0x1a0] sm:$0xff]
          %704 = vst [vmem:[%s598 + $0x1a0] sm:$0xff] %v703
          %v705 = vld [vmem:[%s597 + $0x1a8] sm:$0xff]
          %706 = vst [vmem:[%s598 + $0x1a8] sm:$0xff] %v705
          %v707 = vld [vmem:[%s597 + $0x1b0] sm:$0xff]
          %708 = vst [vmem:[%s598 + $0x1b0] sm:$0xff] %v707
          %v709 = vld [vmem:[%s597 + $0x1b8] sm:$0xff]
          %710 = vst [vmem:[%s598 + $0x1b8] sm:$0xff] %v709
          %v711 = vld [vmem:[%s597 + $0x1c0] sm:$0xff]
          %712 = vst [vmem:[%s598 + $0x1c0] sm:$0xff] %v711
          %v713 = vld [vmem:[%s597 + $0x1c8] sm:$0xff]
          %714 = vst [vmem:[%s598 + $0x1c8] sm:$0xff] %v713
          %v715 = vld [vmem:[%s597 + $0x1d0] sm:$0xff]
          %716 = vst [vmem:[%s598 + $0x1d0] sm:$0xff] %v715
          %v717 = vld [vmem:[%s597 + $0x1d8] sm:$0xff]
          %718 = vst [vmem:[%s598 + $0x1d8] sm:$0xff] %v717
          %v719 = vld [vmem:[%s597 + $0x1e0] sm:$0xff]
          %720 = vst [vmem:[%s598 + $0x1e0] sm:$0xff] %v719
          %v721 = vld [vmem:[%s597 + $0x1e8] sm:$0xff]
          %722 = vst [vmem:[%s598 + $0x1e8] sm:$0xff] %v721
          %v723 = vld [vmem:[%s597 + $0x1f0] sm:$0xff]
          %724 = vst [vmem:[%s598 + $0x1f0] sm:$0xff] %v723
          %v725 = vld [vmem:[%s597 + $0x1f8] sm:$0xff]
          %726 = vst [vmem:[%s598 + $0x1f8] sm:$0xff] %v725
          %v727 = vld [vmem:[%s597 + $0x200] sm:$0xff]
          %728 = vst [vmem:[%s598 + $0x200] sm:$0xff] %v727
          %v729 = vld [vmem:[%s597 + $0x208] sm:$0xff]
          %730 = vst [vmem:[%s598 + $0x208] sm:$0xff] %v729
          %v731 = vld [vmem:[%s597 + $0x210] sm:$0xff]
          %732 = vst [vmem:[%s598 + $0x210] sm:$0xff] %v731
          %v733 = vld [vmem:[%s597 + $0x218] sm:$0xff]
          %734 = vst [vmem:[%s598 + $0x218] sm:$0xff] %v733
          %v735 = vld [vmem:[%s597 + $0x220] sm:$0xff]
          %736 = vst [vmem:[%s598 + $0x220] sm:$0xff] %v735
          %v737 = vld [vmem:[%s597 + $0x228] sm:$0xff]
          %738 = vst [vmem:[%s598 + $0x228] sm:$0xff] %v737
          %v739 = vld [vmem:[%s597 + $0x230] sm:$0xff]
          %740 = vst [vmem:[%s598 + $0x230] sm:$0xff] %v739
          %v741 = vld [vmem:[%s597 + $0x238] sm:$0xff]
          %742 = vst [vmem:[%s598 + $0x238] sm:$0xff] %v741
          %v743 = vld [vmem:[%s597 + $0x240] sm:$0xff]
          %744 = vst [vmem:[%s598 + $0x240] sm:$0xff] %v743
          %v745 = vld [vmem:[%s597 + $0x248] sm:$0xff]
          %746 = vst [vmem:[%s598 + $0x248] sm:$0xff] %v745
          %v747 = vld [vmem:[%s597 + $0x250] sm:$0xff]
          %748 = vst [vmem:[%s598 + $0x250] sm:$0xff] %v747
          %v749 = vld [vmem:[%s597 + $0x258] sm:$0xff]
          %750 = vst [vmem:[%s598 + $0x258] sm:$0xff] %v749
          %v751 = vld [vmem:[%s597 + $0x260] sm:$0xff]
          %752 = vst [vmem:[%s598 + $0x260] sm:$0xff] %v751
          %v753 = vld [vmem:[%s597 + $0x268] sm:$0xff]
          %754 = vst [vmem:[%s598 + $0x268] sm:$0xff] %v753
          %v755 = vld [vmem:[%s597 + $0x270] sm:$0xff]
          %756 = vst [vmem:[%s598 + $0x270] sm:$0xff] %v755
          %v757 = vld [vmem:[%s597 + $0x278] sm:$0xff]
          %758 = vst [vmem:[%s598 + $0x278] sm:$0xff] %v757
          %v759 = vld [vmem:[%s597 + $0x280] sm:$0xff]
          %760 = vst [vmem:[%s598 + $0x280] sm:$0xff] %v759
          %v761 = vld [vmem:[%s597 + $0x288] sm:$0xff]
          %762 = vst [vmem:[%s598 + $0x288] sm:$0xff] %v761
          %v763 = vld [vmem:[%s597 + $0x290] sm:$0xff]
          %764 = vst [vmem:[%s598 + $0x290] sm:$0xff] %v763
          %v765 = vld [vmem:[%s597 + $0x298] sm:$0xff]
          %766 = vst [vmem:[%s598 + $0x298] sm:$0xff] %v765
          %v767 = vld [vmem:[%s597 + $0x2a0] sm:$0xff]
          %768 = vst [vmem:[%s598 + $0x2a0] sm:$0xff] %v767
          %v769 = vld [vmem:[%s597 + $0x2a8] sm:$0xff]
          %770 = vst [vmem:[%s598 + $0x2a8] sm:$0xff] %v769
          %v771 = vld [vmem:[%s597 + $0x2b0] sm:$0xff]
          %772 = vst [vmem:[%s598 + $0x2b0] sm:$0xff] %v771
          %v773 = vld [vmem:[%s597 + $0x2b8] sm:$0xff]
          %774 = vst [vmem:[%s598 + $0x2b8] sm:$0xff] %v773
          %v775 = vld [vmem:[%s597 + $0x2c0] sm:$0xff]
          %776 = vst [vmem:[%s598 + $0x2c0] sm:$0xff] %v775
          %v777 = vld [vmem:[%s597 + $0x2c8] sm:$0xff]
          %778 = vst [vmem:[%s598 + $0x2c8] sm:$0xff] %v777
          %v779 = vld [vmem:[%s597 + $0x2d0] sm:$0xff]
          %780 = vst [vmem:[%s598 + $0x2d0] sm:$0xff] %v779
          %v781 = vld [vmem:[%s597 + $0x2d8] sm:$0xff]
          %782 = vst [vmem:[%s598 + $0x2d8] sm:$0xff] %v781
          %v783 = vld [vmem:[%s597 + $0x2e0] sm:$0xff]
          %784 = vst [vmem:[%s598 + $0x2e0] sm:$0xff] %v783
          %v785 = vld [vmem:[%s597 + $0x2e8] sm:$0xff]
          %786 = vst [vmem:[%s598 + $0x2e8] sm:$0xff] %v785
          %v787 = vld [vmem:[%s597 + $0x2f0] sm:$0xff]
          %788 = vst [vmem:[%s598 + $0x2f0] sm:$0xff] %v787
          %v789 = vld [vmem:[%s597 + $0x2f8] sm:$0xff]
          %790 = vst [vmem:[%s598 + $0x2f8] sm:$0xff] %v789
          %v791 = vld [vmem:[%s597 + $0x300] sm:$0xff]
          %792 = vst [vmem:[%s598 + $0x300] sm:$0xff] %v791
          %v793 = vld [vmem:[%s597 + $0x308] sm:$0xff]
          %794 = vst [vmem:[%s598 + $0x308] sm:$0xff] %v793
          %v795 = vld [vmem:[%s597 + $0x310] sm:$0xff]
          %796 = vst [vmem:[%s598 + $0x310] sm:$0xff] %v795
          %v797 = vld [vmem:[%s597 + $0x318] sm:$0xff]
          %798 = vst [vmem:[%s598 + $0x318] sm:$0xff] %v797
          %v799 = vld [vmem:[%s597 + $0x320] sm:$0xff]
          %800 = vst [vmem:[%s598 + $0x320] sm:$0xff] %v799
          %v801 = vld [vmem:[%s597 + $0x328] sm:$0xff]
          %802 = vst [vmem:[%s598 + $0x328] sm:$0xff] %v801
          %v803 = vld [vmem:[%s597 + $0x330] sm:$0xff]
          %804 = vst [vmem:[%s598 + $0x330] sm:$0xff] %v803
          %v805 = vld [vmem:[%s597 + $0x338] sm:$0xff]
          %806 = vst [vmem:[%s598 + $0x338] sm:$0xff] %v805
          %v807 = vld [vmem:[%s597 + $0x340] sm:$0xff]
          %808 = vst [vmem:[%s598 + $0x340] sm:$0xff] %v807
          %v809 = vld [vmem:[%s597 + $0x348] sm:$0xff]
          %810 = vst [vmem:[%s598 + $0x348] sm:$0xff] %v809
          %v811 = vld [vmem:[%s597 + $0x350] sm:$0xff]
          %812 = vst [vmem:[%s598 + $0x350] sm:$0xff] %v811
          %v813 = vld [vmem:[%s597 + $0x358] sm:$0xff]
          %814 = vst [vmem:[%s598 + $0x358] sm:$0xff] %v813
          %v815 = vld [vmem:[%s597 + $0x360] sm:$0xff]
          %816 = vst [vmem:[%s598 + $0x360] sm:$0xff] %v815
          %v817 = vld [vmem:[%s597 + $0x368] sm:$0xff]
          %818 = vst [vmem:[%s598 + $0x368] sm:$0xff] %v817
          %v819 = vld [vmem:[%s597 + $0x370] sm:$0xff]
          %820 = vst [vmem:[%s598 + $0x370] sm:$0xff] %v819
          %v821 = vld [vmem:[%s597 + $0x378] sm:$0xff]
          %822 = vst [vmem:[%s598 + $0x378] sm:$0xff] %v821
          %v823 = vld [vmem:[%s597 + $0x380] sm:$0xff]
          %824 = vst [vmem:[%s598 + $0x380] sm:$0xff] %v823
          %v825 = vld [vmem:[%s597 + $0x388] sm:$0xff]
          %826 = vst [vmem:[%s598 + $0x388] sm:$0xff] %v825
          %v827 = vld [vmem:[%s597 + $0x390] sm:$0xff]
          %828 = vst [vmem:[%s598 + $0x390] sm:$0xff] %v827
          %v829 = vld [vmem:[%s597 + $0x398] sm:$0xff]
          %830 = vst [vmem:[%s598 + $0x398] sm:$0xff] %v829
          %v831 = vld [vmem:[%s597 + $0x3a0] sm:$0xff]
          %832 = vst [vmem:[%s598 + $0x3a0] sm:$0xff] %v831
          %v833 = vld [vmem:[%s597 + $0x3a8] sm:$0xff]
          %834 = vst [vmem:[%s598 + $0x3a8] sm:$0xff] %v833
          %v835 = vld [vmem:[%s597 + $0x3b0] sm:$0xff]
          %836 = vst [vmem:[%s598 + $0x3b0] sm:$0xff] %v835
          %v837 = vld [vmem:[%s597 + $0x3b8] sm:$0xff]
          %838 = vst [vmem:[%s598 + $0x3b8] sm:$0xff] %v837
          %v839 = vld [vmem:[%s597 + $0x3c0] sm:$0xff]
          %840 = vst [vmem:[%s598 + $0x3c0] sm:$0xff] %v839
          %v841 = vld [vmem:[%s597 + $0x3c8] sm:$0xff]
          %842 = vst [vmem:[%s598 + $0x3c8] sm:$0xff] %v841
          %v843 = vld [vmem:[%s597 + $0x3d0] sm:$0xff]
          %844 = vst [vmem:[%s598 + $0x3d0] sm:$0xff] %v843
          %v845 = vld [vmem:[%s597 + $0x3d8] sm:$0xff]
          %846 = vst [vmem:[%s598 + $0x3d8] sm:$0xff] %v845
          %v847 = vld [vmem:[%s597 + $0x3e0] sm:$0xff]
          %848 = vst [vmem:[%s598 + $0x3e0] sm:$0xff] %v847
          %v849 = vld [vmem:[%s597 + $0x3e8] sm:$0xff]
          %850 = vst [vmem:[%s598 + $0x3e8] sm:$0xff] %v849
          %v851 = vld [vmem:[%s597 + $0x3f0] sm:$0xff]
          %852 = vst [vmem:[%s598 + $0x3f0] sm:$0xff] %v851
          %v853 = vld [vmem:[%s597 + $0x3f8] sm:$0xff]
          %854 = vst [vmem:[%s598 + $0x3f8] sm:$0xff] %v853
        $region167: #{dueling_dqn_forward.1} parent=161 // loop_footer
          %s596 = sadd.s32 1, %s592
        $region168: #{dueling_dqn_forward.1} parent=161 // loop_footer_branch
          %591 = sbr.rel target = $region164
        $region169: #{dueling_dqn_forward.1} parent=161 // loop_exit
          _
      $region162: #{dueling_dqn_forward.1} parent=146 // pred_fallthru
        _
      %p855 = pneg %p587
      // Predicated region
      $region170: #{dueling_dqn_forward.1} parent=146 // pred_check
        _
      $region171: #{dueling_dqn_forward.1} parent=146 // pred_check_branch
        %857 = sbr.rel (%p587) target = $region173
      $region172: #{dueling_dqn_forward.1} parent=146 // pred_region
        %s858 = sand.u32 1024, 7
      $region173: #{dueling_dqn_forward.1} parent=146 // pred_fallthru
        _
    $region147: #{dueling_dqn_forward.1} parent=1 // pred_fallthru
      _
    // Predicated region
    $region148: #{dueling_dqn_forward.1} parent=1 // pred_check
      %p571 = pneg %p567
    $region149: #{dueling_dqn_forward.1} parent=1 // pred_check_branch
      %573 = sbr.rel (%p571) target = $region151
    $region150: #{dueling_dqn_forward.1} parent=1 // pred_region
      %s574 = sshll.u32 1, 1024
      %s575 = ssub.s32 %s574, 1
      loop: start=0, step=1, limit=1
      $region152: #{dueling_dqn_forward.1} parent=150 // loop_pre_header
        _
      $region153: #{dueling_dqn_forward.1} parent=150 // loop_header
        %s577 = sphi 0, %s581
        %p578 = scmp.ge.s32.totalorder %s577, 1
        %s582 = sphi %s13, %s13
        %s583 = sphi [#allocation6], [#allocation6]
      $region154: #{dueling_dqn_forward.1} parent=150 // loop_header_branch
        %580 = sbr.rel (%p578) target = $region158
      $region155: #{dueling_dqn_forward.1} parent=150 // loop_body
        %v584 = vld [vmem:[%s582] sm:%s575]
        %585 = vst [vmem:[%s583] sm:%s575] %v584
      $region156: #{dueling_dqn_forward.1} parent=150 // loop_footer
        %s581 = sadd.s32 1, %s577
      $region157: #{dueling_dqn_forward.1} parent=150 // loop_footer_branch
        %576 = sbr.rel target = $region153
      $region158: #{dueling_dqn_forward.1} parent=150 // loop_exit
        _
    $region151: #{dueling_dqn_forward.1} parent=1 // pred_fallthru
      _
    // Predicated region
    $region174: #{dueling_dqn_forward.1} parent=1 // pred_check
      _
    $region175: #{dueling_dqn_forward.1} parent=1 // pred_check_branch
      %861 = sbr.rel (0) target = $region177
    $region176: #{dueling_dqn_forward.1} parent=1 // pred_region
      %862 = vsyncadd %s565, 16384
    $region177: #{dueling_dqn_forward.1} parent=1 // pred_fallthru
      _
    %v863 = vld [vmem:[%s0] sm:$0xff]
    %v864 = vld [vmem:[%s0 + $0x8] sm:$0xff]
    %v865 = vld [vmem:[%s0 + $0x10] sm:$0xff]
    %v866 = vld [vmem:[%s0 + $0x18] sm:$0xff]
    %v867 = vld [vmem:[%s0 + $0x20] sm:$0xff]
    %v868 = vld [vmem:[%s0 + $0x28] sm:$0xff]
    %v869 = vld [vmem:[%s0 + $0x30] sm:$0xff]
    %v870 = vld [vmem:[%s0 + $0x38] sm:$0xff]
    %v871 = vld [vmem:[%s0 + $0x40] sm:$0xff]
    %v872 = vld [vmem:[%s0 + $0x48] sm:$0xff]
    %v873 = vld [vmem:[%s0 + $0x50] sm:$0xff]
    %v874 = vld [vmem:[%s0 + $0x58] sm:$0xff]
    %v875 = vld [vmem:[%s0 + $0x60] sm:$0xff]
    %v876 = vld [vmem:[%s0 + $0x68] sm:$0xff]
    %v877 = vld [vmem:[%s0 + $0x70] sm:$0xff]
    %v878 = vld [vmem:[%s0 + $0x78] sm:$0xff]
    %v879 = vld [vmem:[%s0 + $0x80] sm:$0xff]
    %v880 = vld [vmem:[%s0 + $0x88] sm:$0xff]
    %v881 = vld [vmem:[%s0 + $0x90] sm:$0xff]
    %v882 = vld [vmem:[%s0 + $0x98] sm:$0xff]
    %v883 = vld [vmem:[%s0 + $0xa0] sm:$0xff]
    %v884 = vld [vmem:[%s0 + $0xa8] sm:$0xff]
    %v885 = vld [vmem:[%s0 + $0xb0] sm:$0xff]
    %v886 = vld [vmem:[%s0 + $0xb8] sm:$0xff]
    %v887 = vld [vmem:[%s0 + $0xc0] sm:$0xff]
    %v888 = vld [vmem:[%s0 + $0xc8] sm:$0xff]
    %v889 = vld [vmem:[%s0 + $0xd0] sm:$0xff]
    %v890 = vld [vmem:[%s0 + $0xd8] sm:$0xff]
    %v891 = vld [vmem:[%s0 + $0xe0] sm:$0xff]
    %v892 = vld [vmem:[%s0 + $0xe8] sm:$0xff]
    %v893 = vld [vmem:[%s0 + $0xf0] sm:$0xff]
    %v894 = vld [vmem:[%s0 + $0xf8] sm:$0xff]
    %v895 = vld [vmem:[%s1] sm:$0xff]
    %v896 = vld [vmem:[%s1 + $0x8] sm:$0xff]
    %v897 = vld [vmem:[%s1 + $0x10] sm:$0xff]
    %v898 = vld [vmem:[%s1 + $0x18] sm:$0xff]
    %v899 = vld [vmem:[%s1 + $0x20] sm:$0xff]
    %v900 = vld [vmem:[%s1 + $0x28] sm:$0xff]
    %v901 = vld [vmem:[%s1 + $0x30] sm:$0xff]
    %v902 = vld [vmem:[%s1 + $0x38] sm:$0xff]
    %v903 = vld [vmem:[%s1 + $0x40] sm:$0xff]
    %v904 = vld [vmem:[%s1 + $0x48] sm:$0xff]
    %v905 = vld [vmem:[%s1 + $0x50] sm:$0xff]
    %v906 = vld [vmem:[%s1 + $0x58] sm:$0xff]
    %v907 = vld [vmem:[%s1 + $0x60] sm:$0xff]
    %v908 = vld [vmem:[%s1 + $0x68] sm:$0xff]
    %v909 = vld [vmem:[%s1 + $0x70] sm:$0xff]
    %v910 = vld [vmem:[%s1 + $0x78] sm:$0xff]
    %v911 = vld [vmem:[%s1 + $0x80] sm:$0xff]
    %v912 = vld [vmem:[%s1 + $0x88] sm:$0xff]
    %v913 = vld [vmem:[%s1 + $0x90] sm:$0xff]
    %v914 = vld [vmem:[%s1 + $0x98] sm:$0xff]
    %v915 = vld [vmem:[%s1 + $0xa0] sm:$0xff]
    %v916 = vld [vmem:[%s1 + $0xa8] sm:$0xff]
    %v917 = vld [vmem:[%s1 + $0xb0] sm:$0xff]
    %v918 = vld [vmem:[%s1 + $0xb8] sm:$0xff]
    %v919 = vld [vmem:[%s1 + $0xc0] sm:$0xff]
    %v920 = vld [vmem:[%s1 + $0xc8] sm:$0xff]
    %v921 = vld [vmem:[%s1 + $0xd0] sm:$0xff]
    %v922 = vld [vmem:[%s1 + $0xd8] sm:$0xff]
    %v923 = vld [vmem:[%s1 + $0xe0] sm:$0xff]
    %v924 = vld [vmem:[%s1 + $0xe8] sm:$0xff]
    %v925 = vld [vmem:[%s1 + $0xf0] sm:$0xff]
    %v926 = vld [vmem:[%s1 + $0xf8] sm:$0xff]
    %927 = vmatprep.subr.mxu0 0.0
    %928 = vmatpush1.msra.mxu0 %v910
    %929 = vmatprep.subr.mxu0 0.0
    %930 = vmatpush1.msra.mxu0 %v909
    %931 = vmatprep.subr.mxu0 0.0
    %932 = vmatpush1.msra.mxu0 %v908
    %933 = vmatprep.subr.mxu0 0.0
    %934 = vmatpush1.msra.mxu0 %v907
    %935 = vmatprep.subr.mxu0 0.0
    %936 = vmatpush1.msra.mxu0 %v906
    %937 = vmatprep.subr.mxu0 0.0
    %938 = vmatpush1.msra.mxu0 %v905
    %939 = vmatprep.subr.mxu0 0.0
    %940 = vmatpush1.msra.mxu0 %v904
    %941 = vmatprep.subr.mxu0 0.0
    %942 = vmatpush1.msra.mxu0 %v903
    %943 = vmatprep.subr.mxu0 0.0
    %944 = vmatpush1.msra.mxu0 %v902
    %945 = vmatprep.subr.mxu0 0.0
    %946 = vmatpush1.msra.mxu0 %v901
    %947 = vmatprep.subr.mxu0 0.0
    %948 = vmatpush1.msra.mxu0 %v900
    %949 = vmatprep.subr.mxu0 0.0
    %950 = vmatpush1.msra.mxu0 %v899
    %951 = vmatprep.subr.mxu0 0.0
    %952 = vmatpush1.msra.mxu0 %v898
    %953 = vmatprep.subr.mxu0 0.0
    %954 = vmatpush1.msra.mxu0 %v897
    %955 = vmatprep.subr.mxu0 0.0
    %956 = vmatpush1.msra.mxu0 %v896
    %957 = vmatprep.subr.mxu0 0.0
    %958 = vmatpush1.msra.mxu0 %v895
    %959 = vmatprep.subr.mxu0 0.0
    %960 = vmatpush2.msra.mxu0 %v926
    %961 = vmatprep.subr.mxu0 0.0
    %962 = vmatpush2.msra.mxu0 %v925
    %963 = vmatprep.subr.mxu0 0.0
    %964 = vmatpush2.msra.mxu0 %v924
    %965 = vmatprep.subr.mxu0 0.0
    %966 = vmatpush2.msra.mxu0 %v923
    %967 = vmatprep.subr.mxu0 0.0
    %968 = vmatpush2.msra.mxu0 %v922
    %969 = vmatprep.subr.mxu0 0.0
    %970 = vmatpush2.msra.mxu0 %v921
    %971 = vmatprep.subr.mxu0 0.0
    %972 = vmatpush2.msra.mxu0 %v920
    %973 = vmatprep.subr.mxu0 0.0
    %974 = vmatpush2.msra.mxu0 %v919
    %975 = vmatprep.subr.mxu0 0.0
    %976 = vmatpush2.msra.mxu0 %v918
    %977 = vmatprep.subr.mxu0 0.0
    %978 = vmatpush2.msra.mxu0 %v917
    %979 = vmatprep.subr.mxu0 0.0
    %980 = vmatpush2.msra.mxu0 %v916
    %981 = vmatprep.subr.mxu0 0.0
    %982 = vmatpush2.msra.mxu0 %v915
    %983 = vmatprep.subr.mxu0 0.0
    %984 = vmatpush2.msra.mxu0 %v914
    %985 = vmatprep.subr.mxu0 0.0
    %986 = vmatpush2.msra.mxu0 %v913
    %987 = vmatprep.subr.mxu0 0.0
    %988 = vmatpush2.msra.mxu0 %v912
    %989 = vmatprep.subr.mxu0 0.0
    %990 = vmatpush2.msra.mxu0 %v911
    %991 = vmatprep.mubr.f32.mxu0 %v864
    %992 = vmatmul.mubr.f32.gmra.mxu0 %v863
    %v993 = vpop.f32.mrf.mxu0
    %v994 = vadd.f32 0.0, %v993
    %v995 = vpop.f32.mrf.mxu0
    %996 = vmatprep.mubr.f32.mxu0 %v866
    %997 = vmatmul.mubr.f32.gmra.mxu0 %v865
    %v998 = vpop.f32.mrf.mxu0
    %v999 = vadd.f32 0.0, %v998
    %v1000 = vpop.f32.mrf.mxu0
    %1001 = vmatprep.mubr.f32.mxu0 %v868
    %1002 = vmatmul.mubr.f32.gmra.mxu0 %v867
    %v1003 = vpop.f32.mrf.mxu0
    %v1004 = vadd.f32 0.0, %v1003
    %v1005 = vpop.f32.mrf.mxu0
    %1006 = vmatprep.mubr.f32.mxu0 %v870
    %1007 = vmatmul.mubr.f32.gmra.mxu0 %v869
    %v1008 = vpop.f32.mrf.mxu0
    %v1009 = vadd.f32 0.0, %v1008
    %v1010 = vpop.f32.mrf.mxu0
    %1011 = vmatprep.mubr.f32.mxu0 %v872
    %1012 = vmatmul.mubr.f32.gmra.mxu0 %v871
    %v1013 = vpop.f32.mrf.mxu0
    %v1014 = vadd.f32 0.0, %v1013
    %v1015 = vpop.f32.mrf.mxu0
    %1016 = vmatprep.mubr.f32.mxu0 %v874
    %1017 = vmatmul.mubr.f32.gmra.mxu0 %v873
    %v1018 = vpop.f32.mrf.mxu0
    %v1019 = vadd.f32 0.0, %v1018
    %v1020 = vpop.f32.mrf.mxu0
    %1021 = vmatprep.mubr.f32.mxu0 %v876
    %1022 = vmatmul.mubr.f32.gmra.mxu0 %v875
    %v1023 = vpop.f32.mrf.mxu0
    %v1024 = vadd.f32 0.0, %v1023
    %v1025 = vpop.f32.mrf.mxu0
    %1026 = vmatprep.mubr.f32.mxu0 %v878
    %1027 = vmatmul.mubr.f32.gmra.mxu0 %v877
    %v1028 = vpop.f32.mrf.mxu0
    %v1029 = vadd.f32 0.0, %v1028
    %v1030 = vpop.f32.mrf.mxu0
    %1031 = vmatprep.mubr.f32.mxu0 %v880
    %1032 = vmatmul.mubr.f32.gmra.mxu0 %v879
    %v1033 = vpop.f32.mrf.mxu0
    %v1034 = vadd.f32 0.0, %v1033
    %v1035 = vpop.f32.mrf.mxu0
    %1036 = vmatprep.mubr.f32.mxu0 %v882
    %1037 = vmatmul.mubr.f32.gmra.mxu0 %v881
    %v1038 = vpop.f32.mrf.mxu0
    %v1039 = vadd.f32 0.0, %v1038
    %v1040 = vpop.f32.mrf.mxu0
    %1041 = vmatprep.mubr.f32.mxu0 %v884
    %1042 = vmatmul.mubr.f32.gmra.mxu0 %v883
    %v1043 = vpop.f32.mrf.mxu0
    %v1044 = vadd.f32 0.0, %v1043
    %v1045 = vpop.f32.mrf.mxu0
    %1046 = vmatprep.mubr.f32.mxu0 %v886
    %1047 = vmatmul.mubr.f32.gmra.mxu0 %v885
    %v1048 = vpop.f32.mrf.mxu0
    %v1049 = vadd.f32 0.0, %v1048
    %v1050 = vpop.f32.mrf.mxu0
    %1051 = vmatprep.mubr.f32.mxu0 %v888
    %1052 = vmatmul.mubr.f32.gmra.mxu0 %v887
    %v1053 = vpop.f32.mrf.mxu0
    %v1054 = vadd.f32 0.0, %v1053
    %v1055 = vpop.f32.mrf.mxu0
    %1056 = vmatprep.mubr.f32.mxu0 %v890
    %1057 = vmatmul.mubr.f32.gmra.mxu0 %v889
    %v1058 = vpop.f32.mrf.mxu0
    %v1059 = vadd.f32 0.0, %v1058
    %v1060 = vpop.f32.mrf.mxu0
    %1061 = vmatprep.mubr.f32.mxu0 %v892
    %1062 = vmatmul.mubr.f32.gmra.mxu0 %v891
    %v1063 = vpop.f32.mrf.mxu0
    %v1064 = vadd.f32 0.0, %v1063
    %v1065 = vpop.f32.mrf.mxu0
    %1066 = vmatprep.mubr.f32.mxu0 %v894
    %1067 = vmatmul.mubr.f32.gmra.mxu0 %v893
    %v1068 = vpop.f32.mrf.mxu0
    %v1069 = vadd.f32 0.0, %v1068
    %v1070 = vpop.f32.mrf.mxu0
    %1071 = vdwg.mxu0
    %v1072 = vld [vmem:[%s2] sm:$0x1]
    %v1073 = vld [vmem:[%s3] sm:$0x1]
    %vm1074 = vcmask 261120
    %v1075 = vsel %vm1074, %v994, 0.0
    %v1076 = vsel %vm1074, %v999, 0.0
    %v1077 = vadd.f32 %v1075, %v1076
    %v1078 = vsel %vm1074, %v1004, 0.0
    %v1079 = vadd.f32 %v1077, %v1078
    %v1080 = vsel %vm1074, %v1009, 0.0
    %v1081 = vadd.f32 %v1079, %v1080
    %v1082 = vsel %vm1074, %v1014, 0.0
    %v1083 = vadd.f32 %v1081, %v1082
    %v1084 = vsel %vm1074, %v1019, 0.0
    %v1085 = vadd.f32 %v1083, %v1084
    %v1086 = vsel %vm1074, %v1024, 0.0
    %v1087 = vadd.f32 %v1085, %v1086
    %v1088 = vsel %vm1074, %v1029, 0.0
    %v1089 = vadd.f32 %v1087, %v1088
    %v1090 = vsel %vm1074, %v1034, 0.0
    %v1091 = vadd.f32 %v1089, %v1090
    %v1092 = vsel %vm1074, %v1039, 0.0
    %v1093 = vadd.f32 %v1091, %v1092
    %v1094 = vsel %vm1074, %v1044, 0.0
    %v1095 = vadd.f32 %v1093, %v1094
    %v1096 = vsel %vm1074, %v1049, 0.0
    %v1097 = vadd.f32 %v1095, %v1096
    %v1098 = vsel %vm1074, %v1054, 0.0
    %v1099 = vadd.f32 %v1097, %v1098
    %v1100 = vsel %vm1074, %v1059, 0.0
    %v1101 = vadd.f32 %v1099, %v1100
    %v1102 = vsel %vm1074, %v1064, 0.0
    %v1103 = vadd.f32 %v1101, %v1102
    %v1104 = vsel %vm1074, %v1069, 0.0
    %v1105 = vadd.f32 %v1103, %v1104
    %v1106 = vrot.slane %v1105, 4
    %v1107 = vadd.f32 %v1105, %v1106
    %v1108 = vrot.slane %v1107, 2
    %v1109 = vadd.f32 %v1107, %v1108
    %v1110 = vrot.slane %v1109, 1
    %v1111 = vadd.f32 %v1109, %v1110
    %v1112 = vmul.f32 %v1111, 0.0078125
    %v1113 = vsub.f32 %v994, %v1112
    %v1114 = vsub.f32 %v999, %v1112
    %v1115 = vsub.f32 %v1004, %v1112
    %v1116 = vsub.f32 %v1009, %v1112
    %v1117 = vsub.f32 %v1014, %v1112
    %v1118 = vsub.f32 %v1019, %v1112
    %v1119 = vsub.f32 %v1024, %v1112
    %v1120 = vsub.f32 %v1029, %v1112
    %v1121 = vsub.f32 %v1034, %v1112
    %v1122 = vsub.f32 %v1039, %v1112
    %v1123 = vsub.f32 %v1044, %v1112
    %v1124 = vsub.f32 %v1049, %v1112
    %v1125 = vsub.f32 %v1054, %v1112
    %v1126 = vsub.f32 %v1059, %v1112
    %v1127 = vsub.f32 %v1064, %v1112
    %v1128 = vsub.f32 %v1069, %v1112
    %v1129 = vmul.f32 %v1113, %v1113
    %v1130 = vmul.f32 %v1114, %v1114
    %v1131 = vmul.f32 %v1115, %v1115
    %v1132 = vmul.f32 %v1116, %v1116
    %v1133 = vmul.f32 %v1117, %v1117
    %v1134 = vmul.f32 %v1118, %v1118
    %v1135 = vmul.f32 %v1119, %v1119
    %v1136 = vmul.f32 %v1120, %v1120
    %v1137 = vmul.f32 %v1121, %v1121
    %v1138 = vmul.f32 %v1122, %v1122
    %v1139 = vmul.f32 %v1123, %v1123
    %v1140 = vmul.f32 %v1124, %v1124
    %v1141 = vmul.f32 %v1125, %v1125
    %v1142 = vmul.f32 %v1126, %v1126
    %v1143 = vmul.f32 %v1127, %v1127
    %v1144 = vmul.f32 %v1128, %v1128
    %v1145 = vsel %vm1074, %v1129, 0.0
    %v1146 = vsel %vm1074, %v1130, 0.0
    %v1147 = vadd.f32 %v1145, %v1146
    %v1148 = vsel %vm1074, %v1131, 0.0
    %v1149 = vadd.f32 %v1147, %v1148
    %v1150 = vsel %vm1074, %v1132, 0.0
    %v1151 = vadd.f32 %v1149, %v1150
    %v1152 = vsel %vm1074, %v1133, 0.0
    %v1153 = vadd.f32 %v1151, %v1152
    %v1154 = vsel %vm1074, %v1134, 0.0
    %v1155 = vadd.f32 %v1153, %v1154
    %v1156 = vsel %vm1074, %v1135, 0.0
    %v1157 = vadd.f32 %v1155, %v1156
    %v1158 = vsel %vm1074, %v1136, 0.0
    %v1159 = vadd.f32 %v1157, %v1158
    %v1160 = vsel %vm1074, %v1137, 0.0
    %v1161 = vadd.f32 %v1159, %v1160
    %v1162 = vsel %vm1074, %v1138, 0.0
    %v1163 = vadd.f32 %v1161, %v1162
    %v1164 = vsel %vm1074, %v1139, 0.0
    %v1165 = vadd.f32 %v1163, %v1164
    %v1166 = vsel %vm1074, %v1140, 0.0
    %v1167 = vadd.f32 %v1165, %v1166
    %v1168 = vsel %vm1074, %v1141, 0.0
    %v1169 = vadd.f32 %v1167, %v1168
    %v1170 = vsel %vm1074, %v1142, 0.0
    %v1171 = vadd.f32 %v1169, %v1170
    %v1172 = vsel %vm1074, %v1143, 0.0
    %v1173 = vadd.f32 %v1171, %v1172
    %v1174 = vsel %vm1074, %v1144, 0.0
    %v1175 = vadd.f32 %v1173, %v1174
    %v1176 = vrot.slane %v1175, 4
    %v1177 = vadd.f32 %v1175, %v1176
    %v1178 = vrot.slane %v1177, 2
    %v1179 = vadd.f32 %v1177, %v1178
    %v1180 = vrot.slane %v1179, 1
    %v1181 = vadd.f32 %v1179, %v1180
    %v1182 = vmul.f32 %v1181, 0.0078125
    %v1183 = vadd.f32 %v1182, 1e-05
    %v1184 = vrsqrt.pop %v1183
    %v1185 = vmul.f32 %v1113, %v1184
    %v1186 = vmul.f32 %v1114, %v1184
    %v1187 = vmul.f32 %v1115, %v1184
    %v1188 = vmul.f32 %v1116, %v1184
    %v1189 = vmul.f32 %v1117, %v1184
    %v1190 = vmul.f32 %v1118, %v1184
    %v1191 = vmul.f32 %v1119, %v1184
    %v1192 = vmul.f32 %v1120, %v1184
    %v1193 = vmul.f32 %v1121, %v1184
    %v1194 = vmul.f32 %v1122, %v1184
    %v1195 = vmul.f32 %v1123, %v1184
    %v1196 = vmul.f32 %v1124, %v1184
    %v1197 = vmul.f32 %v1125, %v1184
    %v1198 = vmul.f32 %v1126, %v1184
    %v1199 = vmul.f32 %v1127, %v1184
    %v1200 = vmul.f32 %v1128, %v1184
    %v1202 = vlaneseq
    %v1203 = vshrl.u32 %v1202, 7
    %v1204 = vsub.s32 0, %v1203
    %v1205 = vrot.slane %v1072, %v1204
    %v1207 = vmul.f32 %v1185, %v1205
    %v1208 = vmul.f32 %v1186, %v1205
    %v1209 = vmul.f32 %v1187, %v1205
    %v1210 = vmul.f32 %v1188, %v1205
    %v1211 = vmul.f32 %v1189, %v1205
    %v1212 = vmul.f32 %v1190, %v1205
    %v1213 = vmul.f32 %v1191, %v1205
    %v1214 = vmul.f32 %v1192, %v1205
    %v1215 = vmul.f32 %v1193, %v1205
    %v1216 = vmul.f32 %v1194, %v1205
    %v1217 = vmul.f32 %v1195, %v1205
    %v1218 = vmul.f32 %v1196, %v1205
    %v1219 = vmul.f32 %v1197, %v1205
    %v1220 = vmul.f32 %v1198, %v1205
    %v1221 = vmul.f32 %v1199, %v1205
    %v1222 = vmul.f32 %v1200, %v1205
    %v1224 = vlaneseq
    %v1225 = vshrl.u32 %v1224, 7
    %v1226 = vsub.s32 0, %v1225
    %v1227 = vrot.slane %v1073, %v1226
    %v1229 = vadd.f32 %v1207, %v1227
    %v1230 = vadd.f32 %v1208, %v1227
    %v1231 = vadd.f32 %v1209, %v1227
    %v1232 = vadd.f32 %v1210, %v1227
    %v1233 = vadd.f32 %v1211, %v1227
    %v1234 = vadd.f32 %v1212, %v1227
    %v1235 = vadd.f32 %v1213, %v1227
    %v1236 = vadd.f32 %v1214, %v1227
    %v1237 = vadd.f32 %v1215, %v1227
    %v1238 = vadd.f32 %v1216, %v1227
    %v1239 = vadd.f32 %v1217, %v1227
    %v1240 = vadd.f32 %v1218, %v1227
    %v1241 = vadd.f32 %v1219, %v1227
    %v1242 = vadd.f32 %v1220, %v1227
    %v1243 = vadd.f32 %v1221, %v1227
    %v1244 = vadd.f32 %v1222, %v1227
    %v1245 = vmax.f32 %v1229, 0.0
    %v1246 = vmax.f32 %v1230, 0.0
    %v1247 = vmax.f32 %v1231, 0.0
    %v1248 = vmax.f32 %v1232, 0.0
    %v1249 = vmax.f32 %v1233, 0.0
    %v1250 = vmax.f32 %v1234, 0.0
    %v1251 = vmax.f32 %v1235, 0.0
    %v1252 = vmax.f32 %v1236, 0.0
    %v1253 = vmax.f32 %v1237, 0.0
    %v1254 = vmax.f32 %v1238, 0.0
    %v1255 = vmax.f32 %v1239, 0.0
    %v1256 = vmax.f32 %v1240, 0.0
    %v1257 = vmax.f32 %v1241, 0.0
    %v1258 = vmax.f32 %v1242, 0.0
    %v1259 = vmax.f32 %v1243, 0.0
    %v1260 = vmax.f32 %v1244, 0.0
    %1261 = vst.msk [vmem:[#allocation2] sm:$0xff] %vm1074, %v1245
    %1262 = vst.msk [vmem:[#allocation2 + $0x8] sm:$0xff] %vm1074, %v1246
    %1263 = vst.msk [vmem:[#allocation2 + $0x10] sm:$0xff] %vm1074, %v1247
    %1264 = vst.msk [vmem:[#allocation2 + $0x18] sm:$0xff] %vm1074, %v1248
    %1265 = vst.msk [vmem:[#allocation2 + $0x20] sm:$0xff] %vm1074, %v1249
    %1266 = vst.msk [vmem:[#allocation2 + $0x28] sm:$0xff] %vm1074, %v1250
    %1267 = vst.msk [vmem:[#allocation2 + $0x30] sm:$0xff] %vm1074, %v1251
    %1268 = vst.msk [vmem:[#allocation2 + $0x38] sm:$0xff] %vm1074, %v1252
    %1269 = vst.msk [vmem:[#allocation2 + $0x40] sm:$0xff] %vm1074, %v1253
    %1270 = vst.msk [vmem:[#allocation2 + $0x48] sm:$0xff] %vm1074, %v1254
    %1271 = vst.msk [vmem:[#allocation2 + $0x50] sm:$0xff] %vm1074, %v1255
    %1272 = vst.msk [vmem:[#allocation2 + $0x58] sm:$0xff] %vm1074, %v1256
    %1273 = vst.msk [vmem:[#allocation2 + $0x60] sm:$0xff] %vm1074, %v1257
    %1274 = vst.msk [vmem:[#allocation2 + $0x68] sm:$0xff] %vm1074, %v1258
    %1275 = vst.msk [vmem:[#allocation2 + $0x70] sm:$0xff] %vm1074, %v1259
    %1276 = vst.msk [vmem:[#allocation2 + $0x78] sm:$0xff] %vm1074, %v1260
    %s1277 = smul.u32 512, 1
    %s1278 = sshll.u32 %s1277, 4
    %1279 = dma.done [#allocation7], %s1278
    %v1280 = vld [vmem:[#allocation3] sm:$0xff]
    %v1281 = vld [vmem:[#allocation3 + $0x8] sm:$0xff]
    %v1282 = vld [vmem:[#allocation3 + $0x10] sm:$0xff]
    %v1283 = vld [vmem:[#allocation3 + $0x18] sm:$0xff]
    %v1284 = vld [vmem:[#allocation3 + $0x20] sm:$0xff]
    %v1285 = vld [vmem:[#allocation3 + $0x28] sm:$0xff]
    %v1286 = vld [vmem:[#allocation3 + $0x30] sm:$0xff]
    %v1287 = vld [vmem:[#allocation3 + $0x38] sm:$0xff]
    %v1288 = vld [vmem:[#allocation3 + $0x40] sm:$0xff]
    %v1289 = vld [vmem:[#allocation3 + $0x48] sm:$0xff]
    %v1290 = vld [vmem:[#allocation3 + $0x50] sm:$0xff]
    %v1291 = vld [vmem:[#allocation3 + $0x58] sm:$0xff]
    %v1292 = vld [vmem:[#allocation3 + $0x60] sm:$0xff]
    %v1293 = vld [vmem:[#allocation3 + $0x68] sm:$0xff]
    %v1294 = vld [vmem:[#allocation3 + $0x70] sm:$0xff]
    %v1295 = vld [vmem:[#allocation3 + $0x78] sm:$0xff]
    %v1296 = vld [vmem:[#allocation3 + $0x80] sm:$0xff]
    %v1297 = vld [vmem:[#allocation3 + $0x88] sm:$0xff]
    %v1298 = vld [vmem:[#allocation3 + $0x90] sm:$0xff]
    %v1299 = vld [vmem:[#allocation3 + $0x98] sm:$0xff]
    %v1300 = vld [vmem:[#allocation3 + $0xa0] sm:$0xff]
    %v1301 = vld [vmem:[#allocation3 + $0xa8] sm:$0xff]
    %v1302 = vld [vmem:[#allocation3 + $0xb0] sm:$0xff]
    %v1303 = vld [vmem:[#allocation3 + $0xb8] sm:$0xff]
    %v1304 = vld [vmem:[#allocation3 + $0xc0] sm:$0xff]
    %v1305 = vld [vmem:[#allocation3 + $0xc8] sm:$0xff]
    %v1306 = vld [vmem:[#allocation3 + $0xd0] sm:$0xff]
    %v1307 = vld [vmem:[#allocation3 + $0xd8] sm:$0xff]
    %v1308 = vld [vmem:[#allocation3 + $0xe0] sm:$0xff]
    %v1309 = vld [vmem:[#allocation3 + $0xe8] sm:$0xff]
    %v1310 = vld [vmem:[#allocation3 + $0xf0] sm:$0xff]
    %v1311 = vld [vmem:[#allocation3 + $0xf8] sm:$0xff]
    %v1312 = vld [vmem:[#allocation3 + $0x100] sm:$0xff]
    %v1313 = vld [vmem:[#allocation3 + $0x108] sm:$0xff]
    %v1314 = vld [vmem:[#allocation3 + $0x110] sm:$0xff]
    %v1315 = vld [vmem:[#allocation3 + $0x118] sm:$0xff]
    %v1316 = vld [vmem:[#allocation3 + $0x120] sm:$0xff]
    %v1317 = vld [vmem:[#allocation3 + $0x128] sm:$0xff]
    %v1318 = vld [vmem:[#allocation3 + $0x130] sm:$0xff]
    %v1319 = vld [vmem:[#allocation3 + $0x138] sm:$0xff]
    %v1320 = vld [vmem:[#allocation3 + $0x140] sm:$0xff]
    %v1321 = vld [vmem:[#allocation3 + $0x148] sm:$0xff]
    %v1322 = vld [vmem:[#allocation3 + $0x150] sm:$0xff]
    %v1323 = vld [vmem:[#allocation3 + $0x158] sm:$0xff]
    %v1324 = vld [vmem:[#allocation3 + $0x160] sm:$0xff]
    %v1325 = vld [vmem:[#allocation3 + $0x168] sm:$0xff]
    %v1326 = vld [vmem:[#allocation3 + $0x170] sm:$0xff]
    %v1327 = vld [vmem:[#allocation3 + $0x178] sm:$0xff]
    %v1328 = vld [vmem:[#allocation3 + $0x180] sm:$0xff]
    %v1329 = vld [vmem:[#allocation3 + $0x188] sm:$0xff]
    %v1330 = vld [vmem:[#allocation3 + $0x190] sm:$0xff]
    %v1331 = vld [vmem:[#allocation3 + $0x198] sm:$0xff]
    %v1332 = vld [vmem:[#allocation3 + $0x1a0] sm:$0xff]
    %v1333 = vld [vmem:[#allocation3 + $0x1a8] sm:$0xff]
    %v1334 = vld [vmem:[#allocation3 + $0x1b0] sm:$0xff]
    %v1335 = vld [vmem:[#allocation3 + $0x1b8] sm:$0xff]
    %v1336 = vld [vmem:[#allocation3 + $0x1c0] sm:$0xff]
    %v1337 = vld [vmem:[#allocation3 + $0x1c8] sm:$0xff]
    %v1338 = vld [vmem:[#allocation3 + $0x1d0] sm:$0xff]
    %v1339 = vld [vmem:[#allocation3 + $0x1d8] sm:$0xff]
    %v1340 = vld [vmem:[#allocation3 + $0x1e0] sm:$0xff]
    %v1341 = vld [vmem:[#allocation3 + $0x1e8] sm:$0xff]
    %v1342 = vld [vmem:[#allocation3 + $0x1f0] sm:$0xff]
    %v1343 = vld [vmem:[#allocation3 + $0x1f8] sm:$0xff]
    %v1344 = vld [vmem:[#allocation2] sm:$0x7]
    %v1345 = vld [vmem:[#allocation2 + $0x40] sm:$0x7]
    %v1346 = vld [vmem:[#allocation2 + $0x1] sm:$0x7]
    %v1347 = vld [vmem:[#allocation2 + $0x41] sm:$0x7]
    %v1348 = vld [vmem:[#allocation2 + $0x4] sm:$0x7]
    %v1349 = vld [vmem:[#allocation2 + $0x44] sm:$0x7]
    %v1350 = vld [vmem:[#allocation2 + $0x5] sm:$0x7]
    %v1351 = vld [vmem:[#allocation2 + $0x45] sm:$0x7]
    %v1352 = vld [vmem:[#allocation2 + $0x8] sm:$0x7]
    %v1353 = vld [vmem:[#allocation2 + $0x48] sm:$0x7]
    %v1354 = vld [vmem:[#allocation2 + $0x9] sm:$0x7]
    %v1355 = vld [vmem:[#allocation2 + $0x49] sm:$0x7]
    %v1356 = vld [vmem:[#allocation2 + $0xc] sm:$0x7]
    %v1357 = vld [vmem:[#allocation2 + $0x4c] sm:$0x7]
    %v1358 = vld [vmem:[#allocation2 + $0xd] sm:$0x7]
    %v1359 = vld [vmem:[#allocation2 + $0x4d] sm:$0x7]
    %1361 = vrot.lane.b32.xlu0 %v1345, 32
    %v1362 = vpop.permute.xlu0 %1361
    %1365 = vrot.lane.b32.xlu0 %v1346, 64
    %v1366 = vpop.permute.xlu0 %1365
    %1369 = vrot.lane.b32.xlu0 %v1347, 96
    %v1370 = vpop.permute.xlu0 %1369
    %1373 = vrot.lane.b32.xlu0 %v1349, 32
    %v1374 = vpop.permute.xlu0 %1373
    %1377 = vrot.lane.b32.xlu0 %v1350, 64
    %v1378 = vpop.permute.xlu0 %1377
    %1381 = vrot.lane.b32.xlu0 %v1351, 96
    %v1382 = vpop.permute.xlu0 %1381
    %1385 = vrot.lane.b32.xlu0 %v1353, 32
    %v1386 = vpop.permute.xlu0 %1385
    %1389 = vrot.lane.b32.xlu0 %v1354, 64
    %v1390 = vpop.permute.xlu0 %1389
    %1393 = vrot.lane.b32.xlu0 %v1355, 96
    %v1394 = vpop.permute.xlu0 %1393
    %1397 = vrot.lane.b32.xlu0 %v1357, 32
    %v1398 = vpop.permute.xlu0 %1397
    %1401 = vrot.lane.b32.xlu0 %v1358, 64
    %v1402 = vpop.permute.xlu0 %1401
    %1405 = vrot.lane.b32.xlu0 %v1359, 96
    %v1406 = vpop.permute.xlu0 %1405
    %v1408 = vsel %vm1074, %v1344, %v1362
    %vm1409 = vcmask 523264
    %v1410 = vsel %vm1409, %v1408, %v1366
    %vm1411 = vcmask 785408
    %v1412 = vsel %vm1411, %v1410, %v1370
    %v1413 = vsel %vm1074, %v1348, %v1374
    %v1414 = vsel %vm1409, %v1413, %v1378
    %v1415 = vsel %vm1411, %v1414, %v1382
    %v1416 = vsel %vm1074, %v1352, %v1386
    %v1417 = vsel %vm1409, %v1416, %v1390
    %v1418 = vsel %vm1411, %v1417, %v1394
    %v1419 = vsel %vm1074, %v1356, %v1398
    %v1420 = vsel %vm1409, %v1419, %v1402
    %v1421 = vsel %vm1411, %v1420, %v1406
    %1422 = vmatprep.subr.mxu0 0.0
    %1423 = vmatpush1.msra.mxu0 %v1295
    %1424 = vmatprep.subr.mxu0 0.0
    %1425 = vmatpush1.msra.mxu0 %v1294
    %1426 = vmatprep.subr.mxu0 0.0
    %1427 = vmatpush1.msra.mxu0 %v1293
    %1428 = vmatprep.subr.mxu0 0.0
    %1429 = vmatpush1.msra.mxu0 %v1292
    %1430 = vmatprep.subr.mxu0 0.0
    %1431 = vmatpush1.msra.mxu0 %v1291
    %1432 = vmatprep.subr.mxu0 0.0
    %1433 = vmatpush1.msra.mxu0 %v1290
    %1434 = vmatprep.subr.mxu0 0.0
    %1435 = vmatpush1.msra.mxu0 %v1289
    %1436 = vmatprep.subr.mxu0 0.0
    %1437 = vmatpush1.msra.mxu0 %v1288
    %1438 = vmatprep.subr.mxu0 0.0
    %1439 = vmatpush1.msra.mxu0 %v1287
    %1440 = vmatprep.subr.mxu0 0.0
    %1441 = vmatpush1.msra.mxu0 %v1286
    %1442 = vmatprep.subr.mxu0 0.0
    %1443 = vmatpush1.msra.mxu0 %v1285
    %1444 = vmatprep.subr.mxu0 0.0
    %1445 = vmatpush1.msra.mxu0 %v1284
    %1446 = vmatprep.subr.mxu0 0.0
    %1447 = vmatpush1.msra.mxu0 %v1283
    %1448 = vmatprep.subr.mxu0 0.0
    %1449 = vmatpush1.msra.mxu0 %v1282
    %1450 = vmatprep.subr.mxu0 0.0
    %1451 = vmatpush1.msra.mxu0 %v1281
    %1452 = vmatprep.subr.mxu0 0.0
    %1453 = vmatpush1.msra.mxu0 %v1280
    %1454 = vmatprep.subr.mxu0 0.0
    %1455 = vmatpush2.msra.mxu0 %v1311
    %1456 = vmatprep.subr.mxu0 0.0
    %1457 = vmatpush2.msra.mxu0 %v1310
    %1458 = vmatprep.subr.mxu0 0.0
    %1459 = vmatpush2.msra.mxu0 %v1309
    %1460 = vmatprep.subr.mxu0 0.0
    %1461 = vmatpush2.msra.mxu0 %v1308
    %1462 = vmatprep.subr.mxu0 0.0
    %1463 = vmatpush2.msra.mxu0 %v1307
    %1464 = vmatprep.subr.mxu0 0.0
    %1465 = vmatpush2.msra.mxu0 %v1306
    %1466 = vmatprep.subr.mxu0 0.0
    %1467 = vmatpush2.msra.mxu0 %v1305
    %1468 = vmatprep.subr.mxu0 0.0
    %1469 = vmatpush2.msra.mxu0 %v1304
    %1470 = vmatprep.subr.mxu0 0.0
    %1471 = vmatpush2.msra.mxu0 %v1303
    %1472 = vmatprep.subr.mxu0 0.0
    %1473 = vmatpush2.msra.mxu0 %v1302
    %1474 = vmatprep.subr.mxu0 0.0
    %1475 = vmatpush2.msra.mxu0 %v1301
    %1476 = vmatprep.subr.mxu0 0.0
    %1477 = vmatpush2.msra.mxu0 %v1300
    %1478 = vmatprep.subr.mxu0 0.0
    %1479 = vmatpush2.msra.mxu0 %v1299
    %1480 = vmatprep.subr.mxu0 0.0
    %1481 = vmatpush2.msra.mxu0 %v1298
    %1482 = vmatprep.subr.mxu0 0.0
    %1483 = vmatpush2.msra.mxu0 %v1297
    %1484 = vmatprep.subr.mxu0 0.0
    %1485 = vmatpush2.msra.mxu0 %v1296
    %1486 = vmatprep.mubr.f32.mxu0 %v1415
    %1487 = vmatmul.mubr.f32.gmra.mxu0 %v1412
    %v1488 = vpop.f32.mrf.mxu0
    %v1489 = vadd.f32 0.0, %v1488
    %v1490 = vpop.f32.mrf.mxu0
    %1491 = vdwg.mxu0
    %1492 = vmatprep.subr.mxu0 0.0
    %1493 = vmatpush1.msra.mxu0 %v1327
    %1494 = vmatprep.subr.mxu0 0.0
    %1495 = vmatpush1.msra.mxu0 %v1326
    %1496 = vmatprep.subr.mxu0 0.0
    %1497 = vmatpush1.msra.mxu0 %v1325
    %1498 = vmatprep.subr.mxu0 0.0
    %1499 = vmatpush1.msra.mxu0 %v1324
    %1500 = vmatprep.subr.mxu0 0.0
    %1501 = vmatpush1.msra.mxu0 %v1323
    %1502 = vmatprep.subr.mxu0 0.0
    %1503 = vmatpush1.msra.mxu0 %v1322
    %1504 = vmatprep.subr.mxu0 0.0
    %1505 = vmatpush1.msra.mxu0 %v1321
    %1506 = vmatprep.subr.mxu0 0.0
    %1507 = vmatpush1.msra.mxu0 %v1320
    %1508 = vmatprep.subr.mxu0 0.0
    %1509 = vmatpush1.msra.mxu0 %v1319
    %1510 = vmatprep.subr.mxu0 0.0
    %1511 = vmatpush1.msra.mxu0 %v1318
    %1512 = vmatprep.subr.mxu0 0.0
    %1513 = vmatpush1.msra.mxu0 %v1317
    %1514 = vmatprep.subr.mxu0 0.0
    %1515 = vmatpush1.msra.mxu0 %v1316
    %1516 = vmatprep.subr.mxu0 0.0
    %1517 = vmatpush1.msra.mxu0 %v1315
    %1518 = vmatprep.subr.mxu0 0.0
    %1519 = vmatpush1.msra.mxu0 %v1314
    %1520 = vmatprep.subr.mxu0 0.0
    %1521 = vmatpush1.msra.mxu0 %v1313
    %1522 = vmatprep.subr.mxu0 0.0
    %1523 = vmatpush1.msra.mxu0 %v1312
    %1524 = vmatprep.subr.mxu0 0.0
    %1525 = vmatpush2.msra.mxu0 %v1343
    %1526 = vmatprep.subr.mxu0 0.0
    %1527 = vmatpush2.msra.mxu0 %v1342
    %1528 = vmatprep.subr.mxu0 0.0
    %1529 = vmatpush2.msra.mxu0 %v1341
    %1530 = vmatprep.subr.mxu0 0.0
    %1531 = vmatpush2.msra.mxu0 %v1340
    %1532 = vmatprep.subr.mxu0 0.0
    %1533 = vmatpush2.msra.mxu0 %v1339
    %1534 = vmatprep.subr.mxu0 0.0
    %1535 = vmatpush2.msra.mxu0 %v1338
    %1536 = vmatprep.subr.mxu0 0.0
    %1537 = vmatpush2.msra.mxu0 %v1337
    %1538 = vmatprep.subr.mxu0 0.0
    %1539 = vmatpush2.msra.mxu0 %v1336
    %1540 = vmatprep.subr.mxu0 0.0
    %1541 = vmatpush2.msra.mxu0 %v1335
    %1542 = vmatprep.subr.mxu0 0.0
    %1543 = vmatpush2.msra.mxu0 %v1334
    %1544 = vmatprep.subr.mxu0 0.0
    %1545 = vmatpush2.msra.mxu0 %v1333
    %1546 = vmatprep.subr.mxu0 0.0
    %1547 = vmatpush2.msra.mxu0 %v1332
    %1548 = vmatprep.subr.mxu0 0.0
    %1549 = vmatpush2.msra.mxu0 %v1331
    %1550 = vmatprep.subr.mxu0 0.0
    %1551 = vmatpush2.msra.mxu0 %v1330
    %1552 = vmatprep.subr.mxu0 0.0
    %1553 = vmatpush2.msra.mxu0 %v1329
    %1554 = vmatprep.subr.mxu0 0.0
    %1555 = vmatpush2.msra.mxu0 %v1328
    %1556 = vmatprep.mubr.f32.mxu0 %v1421
    %1557 = vmatmul.mubr.f32.gmra.mxu0 %v1418
    %v1558 = vpop.f32.mrf.mxu0
    %v1559 = vadd.f32 %v1489, %v1558
    %v1560 = vpop.f32.mrf.mxu0
    %1561 = vdwg.mxu0
    %v1562 = vld [vmem:[#allocation2 + $0x10] sm:$0x7]
    %v1563 = vld [vmem:[#allocation2 + $0x50] sm:$0x7]
    %v1564 = vld [vmem:[#allocation2 + $0x11] sm:$0x7]
    %v1565 = vld [vmem:[#allocation2 + $0x51] sm:$0x7]
    %v1566 = vld [vmem:[#allocation2 + $0x14] sm:$0x7]
    %v1567 = vld [vmem:[#allocation2 + $0x54] sm:$0x7]
    %v1568 = vld [vmem:[#allocation2 + $0x15] sm:$0x7]
    %v1569 = vld [vmem:[#allocation2 + $0x55] sm:$0x7]
    %1571 = vrot.lane.b32.xlu0 %v1563, 32
    %v1572 = vpop.permute.xlu0 %1571
    %1575 = vrot.lane.b32.xlu0 %v1564, 64
    %v1576 = vpop.permute.xlu0 %1575
    %1579 = vrot.lane.b32.xlu0 %v1565, 96
    %v1580 = vpop.permute.xlu0 %1579
    %1583 = vrot.lane.b32.xlu0 %v1567, 32
    %v1584 = vpop.permute.xlu0 %1583
    %1587 = vrot.lane.b32.xlu0 %v1568, 64
    %v1588 = vpop.permute.xlu0 %1587
    %1591 = vrot.lane.b32.xlu0 %v1569, 96
    %v1592 = vpop.permute.xlu0 %1591
    %v1594 = vsel %vm1074, %v1562, %v1572
    %v1595 = vsel %vm1409, %v1594, %v1576
    %v1596 = vsel %vm1411, %v1595, %v1580
    %v1597 = vsel %vm1074, %v1566, %v1584
    %v1598 = vsel %vm1409, %v1597, %v1588
    %v1599 = vsel %vm1411, %v1598, %v1592
    %1600 = vmatprep.subr.mxu0 0.0
    %1601 = vmatpush1.msra.mxu0 %v1295
    %1602 = vmatprep.subr.mxu0 0.0
    %1603 = vmatpush1.msra.mxu0 %v1294
    %1604 = vmatprep.subr.mxu0 0.0
    %1605 = vmatpush1.msra.mxu0 %v1293
    %1606 = vmatprep.subr.mxu0 0.0
    %1607 = vmatpush1.msra.mxu0 %v1292
    %1608 = vmatprep.subr.mxu0 0.0
    %1609 = vmatpush1.msra.mxu0 %v1291
    %1610 = vmatprep.subr.mxu0 0.0
    %1611 = vmatpush1.msra.mxu0 %v1290
    %1612 = vmatprep.subr.mxu0 0.0
    %1613 = vmatpush1.msra.mxu0 %v1289
    %1614 = vmatprep.subr.mxu0 0.0
    %1615 = vmatpush1.msra.mxu0 %v1288
    %1616 = vmatprep.subr.mxu0 0.0
    %1617 = vmatpush1.msra.mxu0 %v1287
    %1618 = vmatprep.subr.mxu0 0.0
    %1619 = vmatpush1.msra.mxu0 %v1286
    %1620 = vmatprep.subr.mxu0 0.0
    %1621 = vmatpush1.msra.mxu0 %v1285
    %1622 = vmatprep.subr.mxu0 0.0
    %1623 = vmatpush1.msra.mxu0 %v1284
    %1624 = vmatprep.subr.mxu0 0.0
    %1625 = vmatpush1.msra.mxu0 %v1283
    %1626 = vmatprep.subr.mxu0 0.0
    %1627 = vmatpush1.msra.mxu0 %v1282
    %1628 = vmatprep.subr.mxu0 0.0
    %1629 = vmatpush1.msra.mxu0 %v1281
    %1630 = vmatprep.subr.mxu0 0.0
    %1631 = vmatpush1.msra.mxu0 %v1280
    %1632 = vmatprep.subr.mxu0 0.0
    %1633 = vmatpush2.msra.mxu0 %v1311
    %1634 = vmatprep.subr.mxu0 0.0
    %1635 = vmatpush2.msra.mxu0 %v1310
    %1636 = vmatprep.subr.mxu0 0.0
    %1637 = vmatpush2.msra.mxu0 %v1309
    %1638 = vmatprep.subr.mxu0 0.0
    %1639 = vmatpush2.msra.mxu0 %v1308
    %1640 = vmatprep.subr.mxu0 0.0
    %1641 = vmatpush2.msra.mxu0 %v1307
    %1642 = vmatprep.subr.mxu0 0.0
    %1643 = vmatpush2.msra.mxu0 %v1306
    %1644 = vmatprep.subr.mxu0 0.0
    %1645 = vmatpush2.msra.mxu0 %v1305
    %1646 = vmatprep.subr.mxu0 0.0
    %1647 = vmatpush2.msra.mxu0 %v1304
    %1648 = vmatprep.subr.mxu0 0.0
    %1649 = vmatpush2.msra.mxu0 %v1303
    %1650 = vmatprep.subr.mxu0 0.0
    %1651 = vmatpush2.msra.mxu0 %v1302
    %1652 = vmatprep.subr.mxu0 0.0
    %1653 = vmatpush2.msra.mxu0 %v1301
    %1654 = vmatprep.subr.mxu0 0.0
    %1655 = vmatpush2.msra.mxu0 %v1300
    %1656 = vmatprep.subr.mxu0 0.0
    %1657 = vmatpush2.msra.mxu0 %v1299
    %1658 = vmatprep.subr.mxu0 0.0
    %1659 = vmatpush2.msra.mxu0 %v1298
    %1660 = vmatprep.subr.mxu0 0.0
    %1661 = vmatpush2.msra.mxu0 %v1297
    %1662 = vmatprep.subr.mxu0 0.0
    %1663 = vmatpush2.msra.mxu0 %v1296
    %1664 = vmatprep.mubr.f32.mxu0 %v1421
    %1665 = vmatmul.mubr.f32.gmra.mxu0 %v1418
    %v1666 = vpop.f32.mrf.mxu0
    %v1667 = vadd.f32 0.0, %v1666
    %v1668 = vpop.f32.mrf.mxu0
    %1669 = vdwg.mxu0
    %1670 = vmatprep.subr.mxu0 0.0
    %1671 = vmatpush1.msra.mxu0 %v1327
    %1672 = vmatprep.subr.mxu0 0.0
    %1673 = vmatpush1.msra.mxu0 %v1326
    %1674 = vmatprep.subr.mxu0 0.0
    %1675 = vmatpush1.msra.mxu0 %v1325
    %1676 = vmatprep.subr.mxu0 0.0
    %1677 = vmatpush1.msra.mxu0 %v1324
    %1678 = vmatprep.subr.mxu0 0.0
    %1679 = vmatpush1.msra.mxu0 %v1323
    %1680 = vmatprep.subr.mxu0 0.0
    %1681 = vmatpush1.msra.mxu0 %v1322
    %1682 = vmatprep.subr.mxu0 0.0
    %1683 = vmatpush1.msra.mxu0 %v1321
    %1684 = vmatprep.subr.mxu0 0.0
    %1685 = vmatpush1.msra.mxu0 %v1320
    %1686 = vmatprep.subr.mxu0 0.0
    %1687 = vmatpush1.msra.mxu0 %v1319
    %1688 = vmatprep.subr.mxu0 0.0
    %1689 = vmatpush1.msra.mxu0 %v1318
    %1690 = vmatprep.subr.mxu0 0.0
    %1691 = vmatpush1.msra.mxu0 %v1317
    %1692 = vmatprep.subr.mxu0 0.0
    %1693 = vmatpush1.msra.mxu0 %v1316
    %1694 = vmatprep.subr.mxu0 0.0
    %1695 = vmatpush1.msra.mxu0 %v1315
    %1696 = vmatprep.subr.mxu0 0.0
    %1697 = vmatpush1.msra.mxu0 %v1314
    %1698 = vmatprep.subr.mxu0 0.0
    %1699 = vmatpush1.msra.mxu0 %v1313
    %1700 = vmatprep.subr.mxu0 0.0
    %1701 = vmatpush1.msra.mxu0 %v1312
    %1702 = vmatprep.subr.mxu0 0.0
    %1703 = vmatpush2.msra.mxu0 %v1343
    %1704 = vmatprep.subr.mxu0 0.0
    %1705 = vmatpush2.msra.mxu0 %v1342
    %1706 = vmatprep.subr.mxu0 0.0
    %1707 = vmatpush2.msra.mxu0 %v1341
    %1708 = vmatprep.subr.mxu0 0.0
    %1709 = vmatpush2.msra.mxu0 %v1340
    %1710 = vmatprep.subr.mxu0 0.0
    %1711 = vmatpush2.msra.mxu0 %v1339
    %1712 = vmatprep.subr.mxu0 0.0
    %1713 = vmatpush2.msra.mxu0 %v1338
    %1714 = vmatprep.subr.mxu0 0.0
    %1715 = vmatpush2.msra.mxu0 %v1337
    %1716 = vmatprep.subr.mxu0 0.0
    %1717 = vmatpush2.msra.mxu0 %v1336
    %1718 = vmatprep.subr.mxu0 0.0
    %1719 = vmatpush2.msra.mxu0 %v1335
    %1720 = vmatprep.subr.mxu0 0.0
    %1721 = vmatpush2.msra.mxu0 %v1334
    %1722 = vmatprep.subr.mxu0 0.0
    %1723 = vmatpush2.msra.mxu0 %v1333
    %1724 = vmatprep.subr.mxu0 0.0
    %1725 = vmatpush2.msra.mxu0 %v1332
    %1726 = vmatprep.subr.mxu0 0.0
    %1727 = vmatpush2.msra.mxu0 %v1331
    %1728 = vmatprep.subr.mxu0 0.0
    %1729 = vmatpush2.msra.mxu0 %v1330
    %1730 = vmatprep.subr.mxu0 0.0
    %1731 = vmatpush2.msra.mxu0 %v1329
    %1732 = vmatprep.subr.mxu0 0.0
    %1733 = vmatpush2.msra.mxu0 %v1328
    %1734 = vmatprep.mubr.f32.mxu0 %v1599
    %1735 = vmatmul.mubr.f32.gmra.mxu0 %v1596
    %v1736 = vpop.f32.mrf.mxu0
    %v1737 = vadd.f32 %v1667, %v1736
    %v1738 = vpop.f32.mrf.mxu0
    %1739 = vdwg.mxu0
    %v1740 = vld [vmem:[#allocation2 + $0x18] sm:$0x7]
    %v1741 = vld [vmem:[#allocation2 + $0x58] sm:$0x7]
    %v1742 = vld [vmem:[#allocation2 + $0x19] sm:$0x7]
    %v1743 = vld [vmem:[#allocation2 + $0x59] sm:$0x7]
    %v1744 = vld [vmem:[#allocation2 + $0x1c] sm:$0x7]
    %v1745 = vld [vmem:[#allocation2 + $0x5c] sm:$0x7]
    %v1746 = vld [vmem:[#allocation2 + $0x1d] sm:$0x7]
    %v1747 = vld [vmem:[#allocation2 + $0x5d] sm:$0x7]
    %1749 = vrot.lane.b32.xlu0 %v1741, 32
    %v1750 = vpop.permute.xlu0 %1749
    %1753 = vrot.lane.b32.xlu0 %v1742, 64
    %v1754 = vpop.permute.xlu0 %1753
    %1757 = vrot.lane.b32.xlu0 %v1743, 96
    %v1758 = vpop.permute.xlu0 %1757
    %1761 = vrot.lane.b32.xlu0 %v1745, 32
    %v1762 = vpop.permute.xlu0 %1761
    %1765 = vrot.lane.b32.xlu0 %v1746, 64
    %v1766 = vpop.permute.xlu0 %1765
    %1769 = vrot.lane.b32.xlu0 %v1747, 96
    %v1770 = vpop.permute.xlu0 %1769
    %v1772 = vsel %vm1074, %v1740, %v1750
    %v1773 = vsel %vm1409, %v1772, %v1754
    %v1774 = vsel %vm1411, %v1773, %v1758
    %v1775 = vsel %vm1074, %v1744, %v1762
    %v1776 = vsel %vm1409, %v1775, %v1766
    %v1777 = vsel %vm1411, %v1776, %v1770
    %1778 = vmatprep.subr.mxu0 0.0
    %1779 = vmatpush1.msra.mxu0 %v1295
    %1780 = vmatprep.subr.mxu0 0.0
    %1781 = vmatpush1.msra.mxu0 %v1294
    %1782 = vmatprep.subr.mxu0 0.0
    %1783 = vmatpush1.msra.mxu0 %v1293
    %1784 = vmatprep.subr.mxu0 0.0
    %1785 = vmatpush1.msra.mxu0 %v1292
    %1786 = vmatprep.subr.mxu0 0.0
    %1787 = vmatpush1.msra.mxu0 %v1291
    %1788 = vmatprep.subr.mxu0 0.0
    %1789 = vmatpush1.msra.mxu0 %v1290
    %1790 = vmatprep.subr.mxu0 0.0
    %1791 = vmatpush1.msra.mxu0 %v1289
    %1792 = vmatprep.subr.mxu0 0.0
    %1793 = vmatpush1.msra.mxu0 %v1288
    %1794 = vmatprep.subr.mxu0 0.0
    %1795 = vmatpush1.msra.mxu0 %v1287
    %1796 = vmatprep.subr.mxu0 0.0
    %1797 = vmatpush1.msra.mxu0 %v1286
    %1798 = vmatprep.subr.mxu0 0.0
    %1799 = vmatpush1.msra.mxu0 %v1285
    %1800 = vmatprep.subr.mxu0 0.0
    %1801 = vmatpush1.msra.mxu0 %v1284
    %1802 = vmatprep.subr.mxu0 0.0
    %1803 = vmatpush1.msra.mxu0 %v1283
    %1804 = vmatprep.subr.mxu0 0.0
    %1805 = vmatpush1.msra.mxu0 %v1282
    %1806 = vmatprep.subr.mxu0 0.0
    %1807 = vmatpush1.msra.mxu0 %v1281
    %1808 = vmatprep.subr.mxu0 0.0
    %1809 = vmatpush1.msra.mxu0 %v1280
    %1810 = vmatprep.subr.mxu0 0.0
    %1811 = vmatpush2.msra.mxu0 %v1311
    %1812 = vmatprep.subr.mxu0 0.0
    %1813 = vmatpush2.msra.mxu0 %v1310
    %1814 = vmatprep.subr.mxu0 0.0
    %1815 = vmatpush2.msra.mxu0 %v1309
    %1816 = vmatprep.subr.mxu0 0.0
    %1817 = vmatpush2.msra.mxu0 %v1308
    %1818 = vmatprep.subr.mxu0 0.0
    %1819 = vmatpush2.msra.mxu0 %v1307
    %1820 = vmatprep.subr.mxu0 0.0
    %1821 = vmatpush2.msra.mxu0 %v1306
    %1822 = vmatprep.subr.mxu0 0.0
    %1823 = vmatpush2.msra.mxu0 %v1305
    %1824 = vmatprep.subr.mxu0 0.0
    %1825 = vmatpush2.msra.mxu0 %v1304
    %1826 = vmatprep.subr.mxu0 0.0
    %1827 = vmatpush2.msra.mxu0 %v1303
    %1828 = vmatprep.subr.mxu0 0.0
    %1829 = vmatpush2.msra.mxu0 %v1302
    %1830 = vmatprep.subr.mxu0 0.0
    %1831 = vmatpush2.msra.mxu0 %v1301
    %1832 = vmatprep.subr.mxu0 0.0
    %1833 = vmatpush2.msra.mxu0 %v1300
    %1834 = vmatprep.subr.mxu0 0.0
    %1835 = vmatpush2.msra.mxu0 %v1299
    %1836 = vmatprep.subr.mxu0 0.0
    %1837 = vmatpush2.msra.mxu0 %v1298
    %1838 = vmatprep.subr.mxu0 0.0
    %1839 = vmatpush2.msra.mxu0 %v1297
    %1840 = vmatprep.subr.mxu0 0.0
    %1841 = vmatpush2.msra.mxu0 %v1296
    %1842 = vmatprep.mubr.f32.mxu0 %v1599
    %1843 = vmatmul.mubr.f32.gmra.mxu0 %v1596
    %v1844 = vpop.f32.mrf.mxu0
    %v1845 = vadd.f32 0.0, %v1844
    %v1846 = vpop.f32.mrf.mxu0
    %1847 = vdwg.mxu0
    %1848 = vmatprep.subr.mxu0 0.0
    %1849 = vmatpush1.msra.mxu0 %v1327
    %1850 = vmatprep.subr.mxu0 0.0
    %1851 = vmatpush1.msra.mxu0 %v1326
    %1852 = vmatprep.subr.mxu0 0.0
    %1853 = vmatpush1.msra.mxu0 %v1325
    %1854 = vmatprep.subr.mxu0 0.0
    %1855 = vmatpush1.msra.mxu0 %v1324
    %1856 = vmatprep.subr.mxu0 0.0
    %1857 = vmatpush1.msra.mxu0 %v1323
    %1858 = vmatprep.subr.mxu0 0.0
    %1859 = vmatpush1.msra.mxu0 %v1322
    %1860 = vmatprep.subr.mxu0 0.0
    %1861 = vmatpush1.msra.mxu0 %v1321
    %1862 = vmatprep.subr.mxu0 0.0
    %1863 = vmatpush1.msra.mxu0 %v1320
    %1864 = vmatprep.subr.mxu0 0.0
    %1865 = vmatpush1.msra.mxu0 %v1319
    %1866 = vmatprep.subr.mxu0 0.0
    %1867 = vmatpush1.msra.mxu0 %v1318
    %1868 = vmatprep.subr.mxu0 0.0
    %1869 = vmatpush1.msra.mxu0 %v1317
    %1870 = vmatprep.subr.mxu0 0.0
    %1871 = vmatpush1.msra.mxu0 %v1316
    %1872 = vmatprep.subr.mxu0 0.0
    %1873 = vmatpush1.msra.mxu0 %v1315
    %1874 = vmatprep.subr.mxu0 0.0
    %1875 = vmatpush1.msra.mxu0 %v1314
    %1876 = vmatprep.subr.mxu0 0.0
    %1877 = vmatpush1.msra.mxu0 %v1313
    %1878 = vmatprep.subr.mxu0 0.0
    %1879 = vmatpush1.msra.mxu0 %v1312
    %1880 = vmatprep.subr.mxu0 0.0
    %1881 = vmatpush2.msra.mxu0 %v1343
    %1882 = vmatprep.subr.mxu0 0.0
    %1883 = vmatpush2.msra.mxu0 %v1342
    %1884 = vmatprep.subr.mxu0 0.0
    %1885 = vmatpush2.msra.mxu0 %v1341
    %1886 = vmatprep.subr.mxu0 0.0
    %1887 = vmatpush2.msra.mxu0 %v1340
    %1888 = vmatprep.subr.mxu0 0.0
    %1889 = vmatpush2.msra.mxu0 %v1339
    %1890 = vmatprep.subr.mxu0 0.0
    %1891 = vmatpush2.msra.mxu0 %v1338
    %1892 = vmatprep.subr.mxu0 0.0
    %1893 = vmatpush2.msra.mxu0 %v1337
    %1894 = vmatprep.subr.mxu0 0.0
    %1895 = vmatpush2.msra.mxu0 %v1336
    %1896 = vmatprep.subr.mxu0 0.0
    %1897 = vmatpush2.msra.mxu0 %v1335
    %1898 = vmatprep.subr.mxu0 0.0
    %1899 = vmatpush2.msra.mxu0 %v1334
    %1900 = vmatprep.subr.mxu0 0.0
    %1901 = vmatpush2.msra.mxu0 %v1333
    %1902 = vmatprep.subr.mxu0 0.0
    %1903 = vmatpush2.msra.mxu0 %v1332
    %1904 = vmatprep.subr.mxu0 0.0
    %1905 = vmatpush2.msra.mxu0 %v1331
    %1906 = vmatprep.subr.mxu0 0.0
    %1907 = vmatpush2.msra.mxu0 %v1330
    %1908 = vmatprep.subr.mxu0 0.0
    %1909 = vmatpush2.msra.mxu0 %v1329
    %1910 = vmatprep.subr.mxu0 0.0
    %1911 = vmatpush2.msra.mxu0 %v1328
    %1912 = vmatprep.mubr.f32.mxu0 %v1777
    %1913 = vmatmul.mubr.f32.gmra.mxu0 %v1774
    %v1914 = vpop.f32.mrf.mxu0
    %v1915 = vadd.f32 %v1845, %v1914
    %v1916 = vpop.f32.mrf.mxu0
    %1917 = vdwg.mxu0
    %v1918 = vld [vmem:[#allocation2 + $0x20] sm:$0x7]
    %v1919 = vld [vmem:[#allocation2 + $0x60] sm:$0x7]
    %v1920 = vld [vmem:[#allocation2 + $0x21] sm:$0x7]
    %v1921 = vld [vmem:[#allocation2 + $0x61] sm:$0x7]
    %v1922 = vld [vmem:[#allocation2 + $0x24] sm:$0x7]
    %v1923 = vld [vmem:[#allocation2 + $0x64] sm:$0x7]
    %v1924 = vld [vmem:[#allocation2 + $0x25] sm:$0x7]
    %v1925 = vld [vmem:[#allocation2 + $0x65] sm:$0x7]
    %v1926 = vld [vmem:[#allocation2 + $0x28] sm:$0x7]
    %v1927 = vld [vmem:[#allocation2 + $0x68] sm:$0x7]
    %v1928 = vld [vmem:[#allocation2 + $0x29] sm:$0x7]
    %v1929 = vld [vmem:[#allocation2 + $0x69] sm:$0x7]
    %v1930 = vld [vmem:[#allocation2 + $0x2c] sm:$0x7]
    %v1931 = vld [vmem:[#allocation2 + $0x6c] sm:$0x7]
    %v1932 = vld [vmem:[#allocation2 + $0x2d] sm:$0x7]
    %v1933 = vld [vmem:[#allocation2 + $0x6d] sm:$0x7]
    %1935 = vrot.lane.b32.xlu0 %v1919, 32
    %v1936 = vpop.permute.xlu0 %1935
    %1939 = vrot.lane.b32.xlu0 %v1920, 64
    %v1940 = vpop.permute.xlu0 %1939
    %1943 = vrot.lane.b32.xlu0 %v1921, 96
    %v1944 = vpop.permute.xlu0 %1943
    %1947 = vrot.lane.b32.xlu0 %v1923, 32
    %v1948 = vpop.permute.xlu0 %1947
    %1951 = vrot.lane.b32.xlu0 %v1924, 64
    %v1952 = vpop.permute.xlu0 %1951
    %1955 = vrot.lane.b32.xlu0 %v1925, 96
    %v1956 = vpop.permute.xlu0 %1955
    %1959 = vrot.lane.b32.xlu0 %v1927, 32
    %v1960 = vpop.permute.xlu0 %1959
    %1963 = vrot.lane.b32.xlu0 %v1928, 64
    %v1964 = vpop.permute.xlu0 %1963
    %1967 = vrot.lane.b32.xlu0 %v1929, 96
    %v1968 = vpop.permute.xlu0 %1967
    %1971 = vrot.lane.b32.xlu0 %v1931, 32
    %v1972 = vpop.permute.xlu0 %1971
    %1975 = vrot.lane.b32.xlu0 %v1932, 64
    %v1976 = vpop.permute.xlu0 %1975
    %1979 = vrot.lane.b32.xlu0 %v1933, 96
    %v1980 = vpop.permute.xlu0 %1979
    %v1982 = vsel %vm1074, %v1918, %v1936
    %v1983 = vsel %vm1409, %v1982, %v1940
    %v1984 = vsel %vm1411, %v1983, %v1944
    %v1985 = vsel %vm1074, %v1922, %v1948
    %v1986 = vsel %vm1409, %v1985, %v1952
    %v1987 = vsel %vm1411, %v1986, %v1956
    %v1988 = vsel %vm1074, %v1926, %v1960
    %v1989 = vsel %vm1409, %v1988, %v1964
    %v1990 = vsel %vm1411, %v1989, %v1968
    %v1991 = vsel %vm1074, %v1930, %v1972
    %v1992 = vsel %vm1409, %v1991, %v1976
    %v1993 = vsel %vm1411, %v1992, %v1980
    %1994 = vmatprep.subr.mxu0 0.0
    %1995 = vmatpush1.msra.mxu0 %v1295
    %1996 = vmatprep.subr.mxu0 0.0
    %1997 = vmatpush1.msra.mxu0 %v1294
    %1998 = vmatprep.subr.mxu0 0.0
    %1999 = vmatpush1.msra.mxu0 %v1293
    %2000 = vmatprep.subr.mxu0 0.0
    %2001 = vmatpush1.msra.mxu0 %v1292
    %2002 = vmatprep.subr.mxu0 0.0
    %2003 = vmatpush1.msra.mxu0 %v1291
    %2004 = vmatprep.subr.mxu0 0.0
    %2005 = vmatpush1.msra.mxu0 %v1290
    %2006 = vmatprep.subr.mxu0 0.0
    %2007 = vmatpush1.msra.mxu0 %v1289
    %2008 = vmatprep.subr.mxu0 0.0
    %2009 = vmatpush1.msra.mxu0 %v1288
    %2010 = vmatprep.subr.mxu0 0.0
    %2011 = vmatpush1.msra.mxu0 %v1287
    %2012 = vmatprep.subr.mxu0 0.0
    %2013 = vmatpush1.msra.mxu0 %v1286
    %2014 = vmatprep.subr.mxu0 0.0
    %2015 = vmatpush1.msra.mxu0 %v1285
    %2016 = vmatprep.subr.mxu0 0.0
    %2017 = vmatpush1.msra.mxu0 %v1284
    %2018 = vmatprep.subr.mxu0 0.0
    %2019 = vmatpush1.msra.mxu0 %v1283
    %2020 = vmatprep.subr.mxu0 0.0
    %2021 = vmatpush1.msra.mxu0 %v1282
    %2022 = vmatprep.subr.mxu0 0.0
    %2023 = vmatpush1.msra.mxu0 %v1281
    %2024 = vmatprep.subr.mxu0 0.0
    %2025 = vmatpush1.msra.mxu0 %v1280
    %2026 = vmatprep.subr.mxu0 0.0
    %2027 = vmatpush2.msra.mxu0 %v1311
    %2028 = vmatprep.subr.mxu0 0.0
    %2029 = vmatpush2.msra.mxu0 %v1310
    %2030 = vmatprep.subr.mxu0 0.0
    %2031 = vmatpush2.msra.mxu0 %v1309
    %2032 = vmatprep.subr.mxu0 0.0
    %2033 = vmatpush2.msra.mxu0 %v1308
    %2034 = vmatprep.subr.mxu0 0.0
    %2035 = vmatpush2.msra.mxu0 %v1307
    %2036 = vmatprep.subr.mxu0 0.0
    %2037 = vmatpush2.msra.mxu0 %v1306
    %2038 = vmatprep.subr.mxu0 0.0
    %2039 = vmatpush2.msra.mxu0 %v1305
    %2040 = vmatprep.subr.mxu0 0.0
    %2041 = vmatpush2.msra.mxu0 %v1304
    %2042 = vmatprep.subr.mxu0 0.0
    %2043 = vmatpush2.msra.mxu0 %v1303
    %2044 = vmatprep.subr.mxu0 0.0
    %2045 = vmatpush2.msra.mxu0 %v1302
    %2046 = vmatprep.subr.mxu0 0.0
    %2047 = vmatpush2.msra.mxu0 %v1301
    %2048 = vmatprep.subr.mxu0 0.0
    %2049 = vmatpush2.msra.mxu0 %v1300
    %2050 = vmatprep.subr.mxu0 0.0
    %2051 = vmatpush2.msra.mxu0 %v1299
    %2052 = vmatprep.subr.mxu0 0.0
    %2053 = vmatpush2.msra.mxu0 %v1298
    %2054 = vmatprep.subr.mxu0 0.0
    %2055 = vmatpush2.msra.mxu0 %v1297
    %2056 = vmatprep.subr.mxu0 0.0
    %2057 = vmatpush2.msra.mxu0 %v1296
    %2058 = vmatprep.mubr.f32.mxu0 %v1987
    %2059 = vmatmul.mubr.f32.gmra.mxu0 %v1984
    %v2060 = vpop.f32.mrf.mxu0
    %v2061 = vadd.f32 0.0, %v2060
    %v2062 = vpop.f32.mrf.mxu0
    %2063 = vdwg.mxu0
    %2064 = vmatprep.subr.mxu0 0.0
    %2065 = vmatpush1.msra.mxu0 %v1327
    %2066 = vmatprep.subr.mxu0 0.0
    %2067 = vmatpush1.msra.mxu0 %v1326
    %2068 = vmatprep.subr.mxu0 0.0
    %2069 = vmatpush1.msra.mxu0 %v1325
    %2070 = vmatprep.subr.mxu0 0.0
    %2071 = vmatpush1.msra.mxu0 %v1324
    %2072 = vmatprep.subr.mxu0 0.0
    %2073 = vmatpush1.msra.mxu0 %v1323
    %2074 = vmatprep.subr.mxu0 0.0
    %2075 = vmatpush1.msra.mxu0 %v1322
    %2076 = vmatprep.subr.mxu0 0.0
    %2077 = vmatpush1.msra.mxu0 %v1321
    %2078 = vmatprep.subr.mxu0 0.0
    %2079 = vmatpush1.msra.mxu0 %v1320
    %2080 = vmatprep.subr.mxu0 0.0
    %2081 = vmatpush1.msra.mxu0 %v1319
    %2082 = vmatprep.subr.mxu0 0.0
    %2083 = vmatpush1.msra.mxu0 %v1318
    %2084 = vmatprep.subr.mxu0 0.0
    %2085 = vmatpush1.msra.mxu0 %v1317
    %2086 = vmatprep.subr.mxu0 0.0
    %2087 = vmatpush1.msra.mxu0 %v1316
    %2088 = vmatprep.subr.mxu0 0.0
    %2089 = vmatpush1.msra.mxu0 %v1315
    %2090 = vmatprep.subr.mxu0 0.0
    %2091 = vmatpush1.msra.mxu0 %v1314
    %2092 = vmatprep.subr.mxu0 0.0
    %2093 = vmatpush1.msra.mxu0 %v1313
    %2094 = vmatprep.subr.mxu0 0.0
    %2095 = vmatpush1.msra.mxu0 %v1312
    %2096 = vmatprep.subr.mxu0 0.0
    %2097 = vmatpush2.msra.mxu0 %v1343
    %2098 = vmatprep.subr.mxu0 0.0
    %2099 = vmatpush2.msra.mxu0 %v1342
    %2100 = vmatprep.subr.mxu0 0.0
    %2101 = vmatpush2.msra.mxu0 %v1341
    %2102 = vmatprep.subr.mxu0 0.0
    %2103 = vmatpush2.msra.mxu0 %v1340
    %2104 = vmatprep.subr.mxu0 0.0
    %2105 = vmatpush2.msra.mxu0 %v1339
    %2106 = vmatprep.subr.mxu0 0.0
    %2107 = vmatpush2.msra.mxu0 %v1338
    %2108 = vmatprep.subr.mxu0 0.0
    %2109 = vmatpush2.msra.mxu0 %v1337
    %2110 = vmatprep.subr.mxu0 0.0
    %2111 = vmatpush2.msra.mxu0 %v1336
    %2112 = vmatprep.subr.mxu0 0.0
    %2113 = vmatpush2.msra.mxu0 %v1335
    %2114 = vmatprep.subr.mxu0 0.0
    %2115 = vmatpush2.msra.mxu0 %v1334
    %2116 = vmatprep.subr.mxu0 0.0
    %2117 = vmatpush2.msra.mxu0 %v1333
    %2118 = vmatprep.subr.mxu0 0.0
    %2119 = vmatpush2.msra.mxu0 %v1332
    %2120 = vmatprep.subr.mxu0 0.0
    %2121 = vmatpush2.msra.mxu0 %v1331
    %2122 = vmatprep.subr.mxu0 0.0
    %2123 = vmatpush2.msra.mxu0 %v1330
    %2124 = vmatprep.subr.mxu0 0.0
    %2125 = vmatpush2.msra.mxu0 %v1329
    %2126 = vmatprep.subr.mxu0 0.0
    %2127 = vmatpush2.msra.mxu0 %v1328
    %2128 = vmatprep.mubr.f32.mxu0 %v1993
    %2129 = vmatmul.mubr.f32.gmra.mxu0 %v1990
    %v2130 = vpop.f32.mrf.mxu0
    %v2131 = vadd.f32 %v2061, %v2130
    %v2132 = vpop.f32.mrf.mxu0
    %2133 = vdwg.mxu0
    %v2134 = vld [vmem:[#allocation2 + $0x30] sm:$0x7]
    %v2135 = vld [vmem:[#allocation2 + $0x70] sm:$0x7]
    %v2136 = vld [vmem:[#allocation2 + $0x31] sm:$0x7]
    %v2137 = vld [vmem:[#allocation2 + $0x71] sm:$0x7]
    %v2138 = vld [vmem:[#allocation2 + $0x34] sm:$0x7]
    %v2139 = vld [vmem:[#allocation2 + $0x74] sm:$0x7]
    %v2140 = vld [vmem:[#allocation2 + $0x35] sm:$0x7]
    %v2141 = vld [vmem:[#allocation2 + $0x75] sm:$0x7]
    %2143 = vrot.lane.b32.xlu0 %v2135, 32
    %v2144 = vpop.permute.xlu0 %2143
    %2147 = vrot.lane.b32.xlu0 %v2136, 64
    %v2148 = vpop.permute.xlu0 %2147
    %2151 = vrot.lane.b32.xlu0 %v2137, 96
    %v2152 = vpop.permute.xlu0 %2151
    %2155 = vrot.lane.b32.xlu0 %v2139, 32
    %v2156 = vpop.permute.xlu0 %2155
    %2159 = vrot.lane.b32.xlu0 %v2140, 64
    %v2160 = vpop.permute.xlu0 %2159
    %2163 = vrot.lane.b32.xlu0 %v2141, 96
    %v2164 = vpop.permute.xlu0 %2163
    %v2166 = vsel %vm1074, %v2134, %v2144
    %v2167 = vsel %vm1409, %v2166, %v2148
    %v2168 = vsel %vm1411, %v2167, %v2152
    %v2169 = vsel %vm1074, %v2138, %v2156
    %v2170 = vsel %vm1409, %v2169, %v2160
    %v2171 = vsel %vm1411, %v2170, %v2164
    %2172 = vmatprep.subr.mxu0 0.0
    %2173 = vmatpush1.msra.mxu0 %v1295
    %2174 = vmatprep.subr.mxu0 0.0
    %2175 = vmatpush1.msra.mxu0 %v1294
    %2176 = vmatprep.subr.mxu0 0.0
    %2177 = vmatpush1.msra.mxu0 %v1293
    %2178 = vmatprep.subr.mxu0 0.0
    %2179 = vmatpush1.msra.mxu0 %v1292
    %2180 = vmatprep.subr.mxu0 0.0
    %2181 = vmatpush1.msra.mxu0 %v1291
    %2182 = vmatprep.subr.mxu0 0.0
    %2183 = vmatpush1.msra.mxu0 %v1290
    %2184 = vmatprep.subr.mxu0 0.0
    %2185 = vmatpush1.msra.mxu0 %v1289
    %2186 = vmatprep.subr.mxu0 0.0
    %2187 = vmatpush1.msra.mxu0 %v1288
    %2188 = vmatprep.subr.mxu0 0.0
    %2189 = vmatpush1.msra.mxu0 %v1287
    %2190 = vmatprep.subr.mxu0 0.0
    %2191 = vmatpush1.msra.mxu0 %v1286
    %2192 = vmatprep.subr.mxu0 0.0
    %2193 = vmatpush1.msra.mxu0 %v1285
    %2194 = vmatprep.subr.mxu0 0.0
    %2195 = vmatpush1.msra.mxu0 %v1284
    %2196 = vmatprep.subr.mxu0 0.0
    %2197 = vmatpush1.msra.mxu0 %v1283
    %2198 = vmatprep.subr.mxu0 0.0
    %2199 = vmatpush1.msra.mxu0 %v1282
    %2200 = vmatprep.subr.mxu0 0.0
    %2201 = vmatpush1.msra.mxu0 %v1281
    %2202 = vmatprep.subr.mxu0 0.0
    %2203 = vmatpush1.msra.mxu0 %v1280
    %2204 = vmatprep.subr.mxu0 0.0
    %2205 = vmatpush2.msra.mxu0 %v1311
    %2206 = vmatprep.subr.mxu0 0.0
    %2207 = vmatpush2.msra.mxu0 %v1310
    %2208 = vmatprep.subr.mxu0 0.0
    %2209 = vmatpush2.msra.mxu0 %v1309
    %2210 = vmatprep.subr.mxu0 0.0
    %2211 = vmatpush2.msra.mxu0 %v1308
    %2212 = vmatprep.subr.mxu0 0.0
    %2213 = vmatpush2.msra.mxu0 %v1307
    %2214 = vmatprep.subr.mxu0 0.0
    %2215 = vmatpush2.msra.mxu0 %v1306
    %2216 = vmatprep.subr.mxu0 0.0
    %2217 = vmatpush2.msra.mxu0 %v1305
    %2218 = vmatprep.subr.mxu0 0.0
    %2219 = vmatpush2.msra.mxu0 %v1304
    %2220 = vmatprep.subr.mxu0 0.0
    %2221 = vmatpush2.msra.mxu0 %v1303
    %2222 = vmatprep.subr.mxu0 0.0
    %2223 = vmatpush2.msra.mxu0 %v1302
    %2224 = vmatprep.subr.mxu0 0.0
    %2225 = vmatpush2.msra.mxu0 %v1301
    %2226 = vmatprep.subr.mxu0 0.0
    %2227 = vmatpush2.msra.mxu0 %v1300
    %2228 = vmatprep.subr.mxu0 0.0
    %2229 = vmatpush2.msra.mxu0 %v1299
    %2230 = vmatprep.subr.mxu0 0.0
    %2231 = vmatpush2.msra.mxu0 %v1298
    %2232 = vmatprep.subr.mxu0 0.0
    %2233 = vmatpush2.msra.mxu0 %v1297
    %2234 = vmatprep.subr.mxu0 0.0
    %2235 = vmatpush2.msra.mxu0 %v1296
    %2236 = vmatprep.mubr.f32.mxu0 %v1993
    %2237 = vmatmul.mubr.f32.gmra.mxu0 %v1990
    %v2238 = vpop.f32.mrf.mxu0
    %v2239 = vadd.f32 0.0, %v2238
    %v2240 = vpop.f32.mrf.mxu0
    %2241 = vdwg.mxu0
    %2242 = vmatprep.subr.mxu0 0.0
    %2243 = vmatpush1.msra.mxu0 %v1327
    %2244 = vmatprep.subr.mxu0 0.0
    %2245 = vmatpush1.msra.mxu0 %v1326
    %2246 = vmatprep.subr.mxu0 0.0
    %2247 = vmatpush1.msra.mxu0 %v1325
    %2248 = vmatprep.subr.mxu0 0.0
    %2249 = vmatpush1.msra.mxu0 %v1324
    %2250 = vmatprep.subr.mxu0 0.0
    %2251 = vmatpush1.msra.mxu0 %v1323
    %2252 = vmatprep.subr.mxu0 0.0
    %2253 = vmatpush1.msra.mxu0 %v1322
    %2254 = vmatprep.subr.mxu0 0.0
    %2255 = vmatpush1.msra.mxu0 %v1321
    %2256 = vmatprep.subr.mxu0 0.0
    %2257 = vmatpush1.msra.mxu0 %v1320
    %2258 = vmatprep.subr.mxu0 0.0
    %2259 = vmatpush1.msra.mxu0 %v1319
    %2260 = vmatprep.subr.mxu0 0.0
    %2261 = vmatpush1.msra.mxu0 %v1318
    %2262 = vmatprep.subr.mxu0 0.0
    %2263 = vmatpush1.msra.mxu0 %v1317
    %2264 = vmatprep.subr.mxu0 0.0
    %2265 = vmatpush1.msra.mxu0 %v1316
    %2266 = vmatprep.subr.mxu0 0.0
    %2267 = vmatpush1.msra.mxu0 %v1315
    %2268 = vmatprep.subr.mxu0 0.0
    %2269 = vmatpush1.msra.mxu0 %v1314
    %2270 = vmatprep.subr.mxu0 0.0
    %2271 = vmatpush1.msra.mxu0 %v1313
    %2272 = vmatprep.subr.mxu0 0.0
    %2273 = vmatpush1.msra.mxu0 %v1312
    %2274 = vmatprep.subr.mxu0 0.0
    %2275 = vmatpush2.msra.mxu0 %v1343
    %2276 = vmatprep.subr.mxu0 0.0
    %2277 = vmatpush2.msra.mxu0 %v1342
    %2278 = vmatprep.subr.mxu0 0.0
    %2279 = vmatpush2.msra.mxu0 %v1341
    %2280 = vmatprep.subr.mxu0 0.0
    %2281 = vmatpush2.msra.mxu0 %v1340
    %2282 = vmatprep.subr.mxu0 0.0
    %2283 = vmatpush2.msra.mxu0 %v1339
    %2284 = vmatprep.subr.mxu0 0.0
    %2285 = vmatpush2.msra.mxu0 %v1338
    %2286 = vmatprep.subr.mxu0 0.0
    %2287 = vmatpush2.msra.mxu0 %v1337
    %2288 = vmatprep.subr.mxu0 0.0
    %2289 = vmatpush2.msra.mxu0 %v1336
    %2290 = vmatprep.subr.mxu0 0.0
    %2291 = vmatpush2.msra.mxu0 %v1335
    %2292 = vmatprep.subr.mxu0 0.0
    %2293 = vmatpush2.msra.mxu0 %v1334
    %2294 = vmatprep.subr.mxu0 0.0
    %2295 = vmatpush2.msra.mxu0 %v1333
    %2296 = vmatprep.subr.mxu0 0.0
    %2297 = vmatpush2.msra.mxu0 %v1332
    %2298 = vmatprep.subr.mxu0 0.0
    %2299 = vmatpush2.msra.mxu0 %v1331
    %2300 = vmatprep.subr.mxu0 0.0
    %2301 = vmatpush2.msra.mxu0 %v1330
    %2302 = vmatprep.subr.mxu0 0.0
    %2303 = vmatpush2.msra.mxu0 %v1329
    %2304 = vmatprep.subr.mxu0 0.0
    %2305 = vmatpush2.msra.mxu0 %v1328
    %2306 = vmatprep.mubr.f32.mxu0 %v2171
    %2307 = vmatmul.mubr.f32.gmra.mxu0 %v2168
    %v2308 = vpop.f32.mrf.mxu0
    %v2309 = vadd.f32 %v2239, %v2308
    %v2310 = vpop.f32.mrf.mxu0
    %2311 = vdwg.mxu0
    %v2312 = vld [vmem:[#allocation2 + $0x38] sm:$0x7]
    %v2313 = vld [vmem:[#allocation2 + $0x78] sm:$0x7]
    %v2314 = vld [vmem:[#allocation2 + $0x39] sm:$0x7]
    %v2315 = vld [vmem:[#allocation2 + $0x79] sm:$0x7]
    %v2316 = vld [vmem:[#allocation2 + $0x3c] sm:$0x7]
    %v2317 = vld [vmem:[#allocation2 + $0x7c] sm:$0x7]
    %v2318 = vld [vmem:[#allocation2 + $0x3d] sm:$0x7]
    %v2319 = vld [vmem:[#allocation2 + $0x7d] sm:$0x7]
    %2321 = vrot.lane.b32.xlu0 %v2313, 32
    %v2322 = vpop.permute.xlu0 %2321
    %2325 = vrot.lane.b32.xlu0 %v2314, 64
    %v2326 = vpop.permute.xlu0 %2325
    %2329 = vrot.lane.b32.xlu0 %v2315, 96
    %v2330 = vpop.permute.xlu0 %2329
    %2333 = vrot.lane.b32.xlu0 %v2317, 32
    %v2334 = vpop.permute.xlu0 %2333
    %2337 = vrot.lane.b32.xlu0 %v2318, 64
    %v2338 = vpop.permute.xlu0 %2337
    %2341 = vrot.lane.b32.xlu0 %v2319, 96
    %v2342 = vpop.permute.xlu0 %2341
    %v2344 = vsel %vm1074, %v2312, %v2322
    %v2345 = vsel %vm1409, %v2344, %v2326
    %v2346 = vsel %vm1411, %v2345, %v2330
    %v2347 = vsel %vm1074, %v2316, %v2334
    %v2348 = vsel %vm1409, %v2347, %v2338
    %v2349 = vsel %vm1411, %v2348, %v2342
    %2350 = vmatprep.subr.mxu0 0.0
    %2351 = vmatpush1.msra.mxu0 %v1295
    %2352 = vmatprep.subr.mxu0 0.0
    %2353 = vmatpush1.msra.mxu0 %v1294
    %2354 = vmatprep.subr.mxu0 0.0
    %2355 = vmatpush1.msra.mxu0 %v1293
    %2356 = vmatprep.subr.mxu0 0.0
    %2357 = vmatpush1.msra.mxu0 %v1292
    %2358 = vmatprep.subr.mxu0 0.0
    %2359 = vmatpush1.msra.mxu0 %v1291
    %2360 = vmatprep.subr.mxu0 0.0
    %2361 = vmatpush1.msra.mxu0 %v1290
    %2362 = vmatprep.subr.mxu0 0.0
    %2363 = vmatpush1.msra.mxu0 %v1289
    %2364 = vmatprep.subr.mxu0 0.0
    %2365 = vmatpush1.msra.mxu0 %v1288
    %2366 = vmatprep.subr.mxu0 0.0
    %2367 = vmatpush1.msra.mxu0 %v1287
    %2368 = vmatprep.subr.mxu0 0.0
    %2369 = vmatpush1.msra.mxu0 %v1286
    %2370 = vmatprep.subr.mxu0 0.0
    %2371 = vmatpush1.msra.mxu0 %v1285
    %2372 = vmatprep.subr.mxu0 0.0
    %2373 = vmatpush1.msra.mxu0 %v1284
    %2374 = vmatprep.subr.mxu0 0.0
    %2375 = vmatpush1.msra.mxu0 %v1283
    %2376 = vmatprep.subr.mxu0 0.0
    %2377 = vmatpush1.msra.mxu0 %v1282
    %2378 = vmatprep.subr.mxu0 0.0
    %2379 = vmatpush1.msra.mxu0 %v1281
    %2380 = vmatprep.subr.mxu0 0.0
    %2381 = vmatpush1.msra.mxu0 %v1280
    %2382 = vmatprep.subr.mxu0 0.0
    %2383 = vmatpush2.msra.mxu0 %v1311
    %2384 = vmatprep.subr.mxu0 0.0
    %2385 = vmatpush2.msra.mxu0 %v1310
    %2386 = vmatprep.subr.mxu0 0.0
    %2387 = vmatpush2.msra.mxu0 %v1309
    %2388 = vmatprep.subr.mxu0 0.0
    %2389 = vmatpush2.msra.mxu0 %v1308
    %2390 = vmatprep.subr.mxu0 0.0
    %2391 = vmatpush2.msra.mxu0 %v1307
    %2392 = vmatprep.subr.mxu0 0.0
    %2393 = vmatpush2.msra.mxu0 %v1306
    %2394 = vmatprep.subr.mxu0 0.0
    %2395 = vmatpush2.msra.mxu0 %v1305
    %2396 = vmatprep.subr.mxu0 0.0
    %2397 = vmatpush2.msra.mxu0 %v1304
    %2398 = vmatprep.subr.mxu0 0.0
    %2399 = vmatpush2.msra.mxu0 %v1303
    %2400 = vmatprep.subr.mxu0 0.0
    %2401 = vmatpush2.msra.mxu0 %v1302
    %2402 = vmatprep.subr.mxu0 0.0
    %2403 = vmatpush2.msra.mxu0 %v1301
    %2404 = vmatprep.subr.mxu0 0.0
    %2405 = vmatpush2.msra.mxu0 %v1300
    %2406 = vmatprep.subr.mxu0 0.0
    %2407 = vmatpush2.msra.mxu0 %v1299
    %2408 = vmatprep.subr.mxu0 0.0
    %2409 = vmatpush2.msra.mxu0 %v1298
    %2410 = vmatprep.subr.mxu0 0.0
    %2411 = vmatpush2.msra.mxu0 %v1297
    %2412 = vmatprep.subr.mxu0 0.0
    %2413 = vmatpush2.msra.mxu0 %v1296
    %2414 = vmatprep.mubr.f32.mxu0 %v2171
    %2415 = vmatmul.mubr.f32.gmra.mxu0 %v2168
    %v2416 = vpop.f32.mrf.mxu0
    %v2417 = vadd.f32 0.0, %v2416
    %v2418 = vpop.f32.mrf.mxu0
    %2419 = vdwg.mxu0
    %2420 = vmatprep.subr.mxu0 0.0
    %2421 = vmatpush1.msra.mxu0 %v1327
    %2422 = vmatprep.subr.mxu0 0.0
    %2423 = vmatpush1.msra.mxu0 %v1326
    %2424 = vmatprep.subr.mxu0 0.0
    %2425 = vmatpush1.msra.mxu0 %v1325
    %2426 = vmatprep.subr.mxu0 0.0
    %2427 = vmatpush1.msra.mxu0 %v1324
    %2428 = vmatprep.subr.mxu0 0.0
    %2429 = vmatpush1.msra.mxu0 %v1323
    %2430 = vmatprep.subr.mxu0 0.0
    %2431 = vmatpush1.msra.mxu0 %v1322
    %2432 = vmatprep.subr.mxu0 0.0
    %2433 = vmatpush1.msra.mxu0 %v1321
    %2434 = vmatprep.subr.mxu0 0.0
    %2435 = vmatpush1.msra.mxu0 %v1320
    %2436 = vmatprep.subr.mxu0 0.0
    %2437 = vmatpush1.msra.mxu0 %v1319
    %2438 = vmatprep.subr.mxu0 0.0
    %2439 = vmatpush1.msra.mxu0 %v1318
    %2440 = vmatprep.subr.mxu0 0.0
    %2441 = vmatpush1.msra.mxu0 %v1317
    %2442 = vmatprep.subr.mxu0 0.0
    %2443 = vmatpush1.msra.mxu0 %v1316
    %2444 = vmatprep.subr.mxu0 0.0
    %2445 = vmatpush1.msra.mxu0 %v1315
    %2446 = vmatprep.subr.mxu0 0.0
    %2447 = vmatpush1.msra.mxu0 %v1314
    %2448 = vmatprep.subr.mxu0 0.0
    %2449 = vmatpush1.msra.mxu0 %v1313
    %2450 = vmatprep.subr.mxu0 0.0
    %2451 = vmatpush1.msra.mxu0 %v1312
    %2452 = vmatprep.subr.mxu0 0.0
    %2453 = vmatpush2.msra.mxu0 %v1343
    %2454 = vmatprep.subr.mxu0 0.0
    %2455 = vmatpush2.msra.mxu0 %v1342
    %2456 = vmatprep.subr.mxu0 0.0
    %2457 = vmatpush2.msra.mxu0 %v1341
    %2458 = vmatprep.subr.mxu0 0.0
    %2459 = vmatpush2.msra.mxu0 %v1340
    %2460 = vmatprep.subr.mxu0 0.0
    %2461 = vmatpush2.msra.mxu0 %v1339
    %2462 = vmatprep.subr.mxu0 0.0
    %2463 = vmatpush2.msra.mxu0 %v1338
    %2464 = vmatprep.subr.mxu0 0.0
    %2465 = vmatpush2.msra.mxu0 %v1337
    %2466 = vmatprep.subr.mxu0 0.0
    %2467 = vmatpush2.msra.mxu0 %v1336
    %2468 = vmatprep.subr.mxu0 0.0
    %2469 = vmatpush2.msra.mxu0 %v1335
    %2470 = vmatprep.subr.mxu0 0.0
    %2471 = vmatpush2.msra.mxu0 %v1334
    %2472 = vmatprep.subr.mxu0 0.0
    %2473 = vmatpush2.msra.mxu0 %v1333
    %2474 = vmatprep.subr.mxu0 0.0
    %2475 = vmatpush2.msra.mxu0 %v1332
    %2476 = vmatprep.subr.mxu0 0.0
    %2477 = vmatpush2.msra.mxu0 %v1331
    %2478 = vmatprep.subr.mxu0 0.0
    %2479 = vmatpush2.msra.mxu0 %v1330
    %2480 = vmatprep.subr.mxu0 0.0
    %2481 = vmatpush2.msra.mxu0 %v1329
    %2482 = vmatprep.subr.mxu0 0.0
    %2483 = vmatpush2.msra.mxu0 %v1328
    %2484 = vmatprep.mubr.f32.mxu0 %v2349
    %2485 = vmatmul.mubr.f32.gmra.mxu0 %v2346
    %v2486 = vpop.f32.mrf.mxu0
    %v2487 = vadd.f32 %v2417, %v2486
    %v2488 = vpop.f32.mrf.mxu0
    %2489 = vdwg.mxu0
    %v2491 = vrot.slane %v1737, 5
    %v2494 = vrot.slane %v1915, 2
    %v2497 = vrot.slane %v2131, 7
    %v2500 = vrot.slane %v2309, 4
    %v2503 = vrot.slane %v2487, 1
    %vm2505 = vcmask 1042432
    %v2506 = vsel %vm2505, %v1559, %v2491
    %vm2507 = vcmask 1045504
    %v2508 = vsel %vm2507, %v2506, %v2494
    %vm2509 = vcmask 1040384
    %v2510 = vsel %vm2509, %v2494, %v2497
    %vm2511 = vcmask 1043456
    %v2512 = vsel %vm2511, %v2510, %v2500
    %vm2513 = vcmask 1046528
    %v2514 = vsel %vm2513, %v2512, %v2503
    %v2515 = vld [vmem:[%s4] sm:$0x1]
    %v2516 = vld [vmem:[%s5] sm:$0x1]
    %v2517 = vsel %vm1409, %v2508, 0.0
    %v2518 = vsel %vm1409, %v2514, 0.0
    %v2519 = vadd.f32 %v2517, %v2518
    %vm2520 = vcmask 517120
    %v2521 = vsel %vm2520, %v2503, 0.0
    %v2522 = vadd.f32 %v2519, %v2521
    %v2523 = vrot.slane %v2522, 4
    %v2524 = vadd.f32 %v2522, %v2523
    %v2525 = vrot.slane %v2524, 2
    %v2526 = vadd.f32 %v2524, %v2525
    %v2527 = vrot.slane %v2526, 1
    %v2528 = vadd.f32 %v2526, %v2527
    %v2529 = vmul.f32 %v2528, 0.055555556
    %v2530 = vsub.f32 %v2508, %v2529
    %v2531 = vsub.f32 %v2514, %v2529
    %v2532 = vsub.f32 %v2503, %v2529
    %v2533 = vmul.f32 %v2530, %v2530
    %v2534 = vmul.f32 %v2531, %v2531
    %v2535 = vmul.f32 %v2532, %v2532
    %v2536 = vsel %vm1409, %v2533, 0.0
    %v2537 = vsel %vm1409, %v2534, 0.0
    %v2538 = vadd.f32 %v2536, %v2537
    %v2539 = vsel %vm2520, %v2535, 0.0
    %v2540 = vadd.f32 %v2538, %v2539
    %v2541 = vrot.slane %v2540, 4
    %v2542 = vadd.f32 %v2540, %v2541
    %v2543 = vrot.slane %v2542, 2
    %v2544 = vadd.f32 %v2542, %v2543
    %v2545 = vrot.slane %v2544, 1
    %v2546 = vadd.f32 %v2544, %v2545
    %v2547 = vmul.f32 %v2546, 0.055555556
    %v2548 = vadd.f32 %v2547, 1e-05
    %v2549 = vrsqrt.pop %v2548
    %v2550 = vmul.f32 %v2530, %v2549
    %v2551 = vmul.f32 %v2531, %v2549
    %v2552 = vmul.f32 %v2532, %v2549
    %v2554 = vlaneseq
    %v2555 = vshrl.u32 %v2554, 7
    %v2556 = vsub.s32 0, %v2555
    %v2557 = vrot.slane %v2515, %v2556
    %v2559 = vmul.f32 %v2550, %v2557
    %v2560 = vmul.f32 %v2551, %v2557
    %v2561 = vmul.f32 %v2552, %v2557
    %v2563 = vlaneseq
    %v2564 = vshrl.u32 %v2563, 7
    %v2565 = vsub.s32 0, %v2564
    %v2566 = vrot.slane %v2516, %v2565
    %v2568 = vadd.f32 %v2559, %v2566
    %v2569 = vadd.f32 %v2560, %v2566
    %v2570 = vadd.f32 %v2561, %v2566
    %v2571 = vmax.f32 %v2568, 0.0
    %v2572 = vmax.f32 %v2569, 0.0
    %v2573 = vmax.f32 %v2570, 0.0
    %s2574 = smul.u32 576, 1
    %s2575 = sshll.u32 %s2574, 4
    %2576 = dma.done %s209, %s2575
    %v2578 = vrot.slane %v2571, 1
    %2579 = vrot.lane.b32.xlu0 %v2578, 64
    %v2580 = vpop.permute.xlu0 %2579
    %v2582 = vrot.slane %v2571, 2
    %v2584 = vrot.slane %v2571, 3
    %2585 = vrot.lane.b32.xlu0 %v2584, 64
    %v2586 = vpop.permute.xlu0 %2585
    %v2588 = vrot.slane %v2571, 4
    %v2590 = vrot.slane %v2571, 5
    %2591 = vrot.lane.b32.xlu0 %v2590, 64
    %v2592 = vpop.permute.xlu0 %2591
    %v2594 = vrot.slane %v2571, 6
    %v2596 = vrot.slane %v2571, 7
    %2597 = vrot.lane.b32.xlu0 %v2596, 64
    %v2598 = vpop.permute.xlu0 %2597
    %v2600 = vsel %vm1409, %v2571, %v2580
    %v2601 = vsel %vm1409, %v2582, %v2586
    %v2602 = vsel %vm1409, %v2588, %v2592
    %v2603 = vsel %vm1409, %v2594, %v2598
    %v2605 = vrot.slane %v2572, 1
    %2606 = vrot.lane.b32.xlu0 %v2605, 64
    %v2607 = vpop.permute.xlu0 %2606
    %v2609 = vrot.slane %v2572, 2
    %v2611 = vrot.slane %v2572, 3
    %2612 = vrot.lane.b32.xlu0 %v2611, 64
    %v2613 = vpop.permute.xlu0 %2612
    %v2615 = vrot.slane %v2572, 4
    %v2617 = vrot.slane %v2572, 5
    %2618 = vrot.lane.b32.xlu0 %v2617, 64
    %v2619 = vpop.permute.xlu0 %2618
    %v2621 = vrot.slane %v2572, 6
    %v2624 = vrot.slane %v2573, 7
    %2625 = vrot.lane.b32.xlu0 %v2624, 64
    %v2626 = vpop.permute.xlu0 %2625
    %v2628 = vsel %vm1409, %v2572, %v2607
    %v2629 = vsel %vm1409, %v2609, %v2613
    %v2630 = vsel %vm1409, %v2615, %v2619
    %v2631 = vsel %vm1409, %v2621, %v2626
    %v2632 = vsel %vm2509, %v2600, %v2628
    %v2633 = vsel %vm2509, %v2601, %v2629
    %v2634 = vsel %vm2509, %v2602, %v2630
    %v2635 = vsel %vm2509, %v2603, %v2631
    %v2636 = vsel %vm2509, %v2572, %v2573
    %v2637 = vld [vmem:[#allocation4] sm:$0xff]
    %v2638 = vld [vmem:[#allocation4 + $0x8] sm:$0xff]
    %v2639 = vld [vmem:[#allocation4 + $0x10] sm:$0xff]
    %v2640 = vld [vmem:[#allocation4 + $0x18] sm:$0xff]
    %v2641 = vld [vmem:[#allocation4 + $0x20] sm:$0xff]
    %v2642 = vld [vmem:[#allocation4 + $0x28] sm:$0xff]
    %v2643 = vld [vmem:[#allocation4 + $0x30] sm:$0xff]
    %v2644 = vld [vmem:[#allocation4 + $0x38] sm:$0xff]
    %v2645 = vld [vmem:[#allocation4 + $0x40] sm:$0xff]
    %v2646 = vld [vmem:[#allocation4 + $0x48] sm:$0xff]
    %v2647 = vld [vmem:[#allocation4 + $0x50] sm:$0xff]
    %v2648 = vld [vmem:[#allocation4 + $0x58] sm:$0xff]
    %v2649 = vld [vmem:[#allocation4 + $0x60] sm:$0xff]
    %v2650 = vld [vmem:[#allocation4 + $0x68] sm:$0xff]
    %v2651 = vld [vmem:[#allocation4 + $0x70] sm:$0xff]
    %v2652 = vld [vmem:[#allocation4 + $0x78] sm:$0xff]
    %v2653 = vld [vmem:[#allocation4 + $0x80] sm:$0xff]
    %v2654 = vld [vmem:[#allocation4 + $0x88] sm:$0xff]
    %v2655 = vld [vmem:[#allocation4 + $0x90] sm:$0xff]
    %v2656 = vld [vmem:[#allocation4 + $0x98] sm:$0xff]
    %v2657 = vld [vmem:[#allocation4 + $0xa0] sm:$0xff]
    %v2658 = vld [vmem:[#allocation4 + $0xa8] sm:$0xff]
    %v2659 = vld [vmem:[#allocation4 + $0xb0] sm:$0xff]
    %v2660 = vld [vmem:[#allocation4 + $0xb8] sm:$0xff]
    %v2661 = vld [vmem:[#allocation4 + $0xc0] sm:$0xff]
    %v2662 = vld [vmem:[#allocation4 + $0xc8] sm:$0xff]
    %v2663 = vld [vmem:[#allocation4 + $0xd0] sm:$0xff]
    %v2664 = vld [vmem:[#allocation4 + $0xd8] sm:$0xff]
    %v2665 = vld [vmem:[#allocation4 + $0xe0] sm:$0xff]
    %v2666 = vld [vmem:[#allocation4 + $0xe8] sm:$0xff]
    %v2667 = vld [vmem:[#allocation4 + $0xf0] sm:$0xff]
    %v2668 = vld [vmem:[#allocation4 + $0xf8] sm:$0xff]
    %v2669 = vld [vmem:[#allocation4 + $0x100] sm:$0xff]
    %v2670 = vld [vmem:[#allocation4 + $0x108] sm:$0xff]
    %v2671 = vld [vmem:[#allocation4 + $0x110] sm:$0xff]
    %v2672 = vld [vmem:[#allocation4 + $0x118] sm:$0xff]
    %v2673 = vld [vmem:[#allocation4 + $0x120] sm:$0xff]
    %v2674 = vld [vmem:[#allocation4 + $0x128] sm:$0xff]
    %v2675 = vld [vmem:[#allocation4 + $0x130] sm:$0xff]
    %v2676 = vld [vmem:[#allocation4 + $0x138] sm:$0xff]
    %v2677 = vld [vmem:[#allocation4 + $0x140] sm:$0xff]
    %v2678 = vld [vmem:[#allocation4 + $0x148] sm:$0xff]
    %v2679 = vld [vmem:[#allocation4 + $0x150] sm:$0xff]
    %v2680 = vld [vmem:[#allocation4 + $0x158] sm:$0xff]
    %v2681 = vld [vmem:[#allocation4 + $0x160] sm:$0xff]
    %v2682 = vld [vmem:[#allocation4 + $0x168] sm:$0xff]
    %v2683 = vld [vmem:[#allocation4 + $0x170] sm:$0xff]
    %v2684 = vld [vmem:[#allocation4 + $0x178] sm:$0xff]
    %v2685 = vld [vmem:[#allocation4 + $0x180] sm:$0xff]
    %v2686 = vld [vmem:[#allocation4 + $0x188] sm:$0xff]
    %v2687 = vld [vmem:[#allocation4 + $0x190] sm:$0xff]
    %v2688 = vld [vmem:[#allocation4 + $0x198] sm:$0xff]
    %v2689 = vld [vmem:[#allocation4 + $0x1a0] sm:$0xff]
    %v2690 = vld [vmem:[#allocation4 + $0x1a8] sm:$0xff]
    %v2691 = vld [vmem:[#allocation4 + $0x1b0] sm:$0xff]
    %v2692 = vld [vmem:[#allocation4 + $0x1b8] sm:$0xff]
    %v2693 = vld [vmem:[#allocation4 + $0x1c0] sm:$0xff]
    %v2694 = vld [vmem:[#allocation4 + $0x1c8] sm:$0xff]
    %v2695 = vld [vmem:[#allocation4 + $0x1d0] sm:$0xff]
    %v2696 = vld [vmem:[#allocation4 + $0x1d8] sm:$0xff]
    %v2697 = vld [vmem:[#allocation4 + $0x1e0] sm:$0xff]
    %v2698 = vld [vmem:[#allocation4 + $0x1e8] sm:$0xff]
    %v2699 = vld [vmem:[#allocation4 + $0x1f0] sm:$0xff]
    %v2700 = vld [vmem:[#allocation4 + $0x1f8] sm:$0xff]
    %v2701 = vld [vmem:[#allocation4 + $0x200] sm:$0xff]
    %v2702 = vld [vmem:[#allocation4 + $0x208] sm:$0xff]
    %v2703 = vld [vmem:[#allocation4 + $0x210] sm:$0xff]
    %v2704 = vld [vmem:[#allocation4 + $0x218] sm:$0xff]
    %v2705 = vld [vmem:[#allocation4 + $0x220] sm:$0xff]
    %v2706 = vld [vmem:[#allocation4 + $0x228] sm:$0xff]
    %v2707 = vld [vmem:[#allocation4 + $0x230] sm:$0xff]
    %v2708 = vld [vmem:[#allocation4 + $0x238] sm:$0xff]
    %v2710 = vsel %vm1409, %v2636, 0
    %2712 = vmatprep.subr.mxu0 0.0
    %2713 = vmatpush1.msra.mxu0 %v2652
    %2714 = vmatprep.subr.mxu0 0.0
    %2715 = vmatpush1.msra.mxu0 %v2651
    %2716 = vmatprep.subr.mxu0 0.0
    %2717 = vmatpush1.msra.mxu0 %v2650
    %2718 = vmatprep.subr.mxu0 0.0
    %2719 = vmatpush1.msra.mxu0 %v2649
    %2720 = vmatprep.subr.mxu0 0.0
    %2721 = vmatpush1.msra.mxu0 %v2648
    %2722 = vmatprep.subr.mxu0 0.0
    %2723 = vmatpush1.msra.mxu0 %v2647
    %2724 = vmatprep.subr.mxu0 0.0
    %2725 = vmatpush1.msra.mxu0 %v2646
    %2726 = vmatprep.subr.mxu0 0.0
    %2727 = vmatpush1.msra.mxu0 %v2645
    %2728 = vmatprep.subr.mxu0 0.0
    %2729 = vmatpush1.msra.mxu0 %v2644
    %2730 = vmatprep.subr.mxu0 0.0
    %2731 = vmatpush1.msra.mxu0 %v2643
    %2732 = vmatprep.subr.mxu0 0.0
    %2733 = vmatpush1.msra.mxu0 %v2642
    %2734 = vmatprep.subr.mxu0 0.0
    %2735 = vmatpush1.msra.mxu0 %v2641
    %2736 = vmatprep.subr.mxu0 0.0
    %2737 = vmatpush1.msra.mxu0 %v2640
    %2738 = vmatprep.subr.mxu0 0.0
    %2739 = vmatpush1.msra.mxu0 %v2639
    %2740 = vmatprep.subr.mxu0 0.0
    %2741 = vmatpush1.msra.mxu0 %v2638
    %2742 = vmatprep.subr.mxu0 0.0
    %2743 = vmatpush1.msra.mxu0 %v2637
    %2744 = vmatprep.subr.mxu0 0.0
    %2745 = vmatpush2.msra.mxu0 %v2668
    %2746 = vmatprep.subr.mxu0 0.0
    %2747 = vmatpush2.msra.mxu0 %v2667
    %2748 = vmatprep.subr.mxu0 0.0
    %2749 = vmatpush2.msra.mxu0 %v2666
    %2750 = vmatprep.subr.mxu0 0.0
    %2751 = vmatpush2.msra.mxu0 %v2665
    %2752 = vmatprep.subr.mxu0 0.0
    %2753 = vmatpush2.msra.mxu0 %v2664
    %2754 = vmatprep.subr.mxu0 0.0
    %2755 = vmatpush2.msra.mxu0 %v2663
    %2756 = vmatprep.subr.mxu0 0.0
    %2757 = vmatpush2.msra.mxu0 %v2662
    %2758 = vmatprep.subr.mxu0 0.0
    %2759 = vmatpush2.msra.mxu0 %v2661
    %2760 = vmatprep.subr.mxu0 0.0
    %2761 = vmatpush2.msra.mxu0 %v2660
    %2762 = vmatprep.subr.mxu0 0.0
    %2763 = vmatpush2.msra.mxu0 %v2659
    %2764 = vmatprep.subr.mxu0 0.0
    %2765 = vmatpush2.msra.mxu0 %v2658
    %2766 = vmatprep.subr.mxu0 0.0
    %2767 = vmatpush2.msra.mxu0 %v2657
    %2768 = vmatprep.subr.mxu0 0.0
    %2769 = vmatpush2.msra.mxu0 %v2656
    %2770 = vmatprep.subr.mxu0 0.0
    %2771 = vmatpush2.msra.mxu0 %v2655
    %2772 = vmatprep.subr.mxu0 0.0
    %2773 = vmatpush2.msra.mxu0 %v2654
    %2774 = vmatprep.subr.mxu0 0.0
    %2775 = vmatpush2.msra.mxu0 %v2653
    %2776 = vmatprep.mubr.f32.mxu0 %v2633
    %2777 = vmatmul.mubr.f32.gmra.mxu0 %v2632
    %v2778 = vpop.f32.mrf.mxu0
    %v2779 = vadd.f32 0.0, %v2778
    %v2780 = vpop.f32.mrf.mxu0
    %2781 = vdwg.mxu0
    %2782 = vmatprep.subr.mxu0 0.0
    %2783 = vmatpush1.msra.mxu0 %v2684
    %2784 = vmatprep.subr.mxu0 0.0
    %2785 = vmatpush1.msra.mxu0 %v2683
    %2786 = vmatprep.subr.mxu0 0.0
    %2787 = vmatpush1.msra.mxu0 %v2682
    %2788 = vmatprep.subr.mxu0 0.0
    %2789 = vmatpush1.msra.mxu0 %v2681
    %2790 = vmatprep.subr.mxu0 0.0
    %2791 = vmatpush1.msra.mxu0 %v2680
    %2792 = vmatprep.subr.mxu0 0.0
    %2793 = vmatpush1.msra.mxu0 %v2679
    %2794 = vmatprep.subr.mxu0 0.0
    %2795 = vmatpush1.msra.mxu0 %v2678
    %2796 = vmatprep.subr.mxu0 0.0
    %2797 = vmatpush1.msra.mxu0 %v2677
    %2798 = vmatprep.subr.mxu0 0.0
    %2799 = vmatpush1.msra.mxu0 %v2676
    %2800 = vmatprep.subr.mxu0 0.0
    %2801 = vmatpush1.msra.mxu0 %v2675
    %2802 = vmatprep.subr.mxu0 0.0
    %2803 = vmatpush1.msra.mxu0 %v2674
    %2804 = vmatprep.subr.mxu0 0.0
    %2805 = vmatpush1.msra.mxu0 %v2673
    %2806 = vmatprep.subr.mxu0 0.0
    %2807 = vmatpush1.msra.mxu0 %v2672
    %2808 = vmatprep.subr.mxu0 0.0
    %2809 = vmatpush1.msra.mxu0 %v2671
    %2810 = vmatprep.subr.mxu0 0.0
    %2811 = vmatpush1.msra.mxu0 %v2670
    %2812 = vmatprep.subr.mxu0 0.0
    %2813 = vmatpush1.msra.mxu0 %v2669
    %2814 = vmatprep.subr.mxu0 0.0
    %2815 = vmatpush2.msra.mxu0 %v2700
    %2816 = vmatprep.subr.mxu0 0.0
    %2817 = vmatpush2.msra.mxu0 %v2699
    %2818 = vmatprep.subr.mxu0 0.0
    %2819 = vmatpush2.msra.mxu0 %v2698
    %2820 = vmatprep.subr.mxu0 0.0
    %2821 = vmatpush2.msra.mxu0 %v2697
    %2822 = vmatprep.subr.mxu0 0.0
    %2823 = vmatpush2.msra.mxu0 %v2696
    %2824 = vmatprep.subr.mxu0 0.0
    %2825 = vmatpush2.msra.mxu0 %v2695
    %2826 = vmatprep.subr.mxu0 0.0
    %2827 = vmatpush2.msra.mxu0 %v2694
    %2828 = vmatprep.subr.mxu0 0.0
    %2829 = vmatpush2.msra.mxu0 %v2693
    %2830 = vmatprep.subr.mxu0 0.0
    %2831 = vmatpush2.msra.mxu0 %v2692
    %2832 = vmatprep.subr.mxu0 0.0
    %2833 = vmatpush2.msra.mxu0 %v2691
    %2834 = vmatprep.subr.mxu0 0.0
    %2835 = vmatpush2.msra.mxu0 %v2690
    %2836 = vmatprep.subr.mxu0 0.0
    %2837 = vmatpush2.msra.mxu0 %v2689
    %2838 = vmatprep.subr.mxu0 0.0
    %2839 = vmatpush2.msra.mxu0 %v2688
    %2840 = vmatprep.subr.mxu0 0.0
    %2841 = vmatpush2.msra.mxu0 %v2687
    %2842 = vmatprep.subr.mxu0 0.0
    %2843 = vmatpush2.msra.mxu0 %v2686
    %2844 = vmatprep.subr.mxu0 0.0
    %2845 = vmatpush2.msra.mxu0 %v2685
    %2846 = vmatprep.mubr.f32.mxu0 %v2635
    %2847 = vmatmul.mubr.f32.gmra.mxu0 %v2634
    %v2848 = vpop.f32.mrf.mxu0
    %v2849 = vadd.f32 %v2779, %v2848
    %v2850 = vpop.f32.mrf.mxu0
    %2851 = vdwg.mxu0
    %2852 = vmatprep.subr.mxu0 0.0
    %2853 = vmatpush1.msra.mxu0 0.0
    %2854 = vmatprep.subr.mxu0 0.0
    %2855 = vmatpush1.msra.mxu0 0.0
    %2856 = vmatprep.subr.mxu0 0.0
    %2857 = vmatpush1.msra.mxu0 0.0
    %2858 = vmatprep.subr.mxu0 0.0
    %2859 = vmatpush1.msra.mxu0 0.0
    %2860 = vmatprep.subr.mxu0 0.0
    %2861 = vmatpush1.msra.mxu0 0.0
    %2862 = vmatprep.subr.mxu0 0.0
    %2863 = vmatpush1.msra.mxu0 0.0
    %2864 = vmatprep.subr.mxu0 0.0
    %2865 = vmatpush1.msra.mxu0 0.0
    %2866 = vmatprep.subr.mxu0 0.0
    %2867 = vmatpush1.msra.mxu0 0.0
    %2868 = vmatprep.subr.mxu0 0.0
    %2869 = vmatpush1.msra.mxu0 %v2708
    %2870 = vmatprep.subr.mxu0 0.0
    %2871 = vmatpush1.msra.mxu0 %v2707
    %2872 = vmatprep.subr.mxu0 0.0
    %2873 = vmatpush1.msra.mxu0 %v2706
    %2874 = vmatprep.subr.mxu0 0.0
    %2875 = vmatpush1.msra.mxu0 %v2705
    %2876 = vmatprep.subr.mxu0 0.0
    %2877 = vmatpush1.msra.mxu0 %v2704
    %2878 = vmatprep.subr.mxu0 0.0
    %2879 = vmatpush1.msra.mxu0 %v2703
    %2880 = vmatprep.subr.mxu0 0.0
    %2881 = vmatpush1.msra.mxu0 %v2702
    %2882 = vmatprep.subr.mxu0 0.0
    %2883 = vmatpush1.msra.mxu0 %v2701
    %2884 = vmatprep.subr.mxu0 0.0
    %2885 = vmatpush2.msra.mxu0 0.0
    %2886 = vmatprep.subr.mxu0 0.0
    %2887 = vmatpush2.msra.mxu0 0.0
    %2888 = vmatprep.subr.mxu0 0.0
    %2889 = vmatpush2.msra.mxu0 0.0
    %2890 = vmatprep.subr.mxu0 0.0
    %2891 = vmatpush2.msra.mxu0 0.0
    %2892 = vmatprep.subr.mxu0 0.0
    %2893 = vmatpush2.msra.mxu0 0.0
    %2894 = vmatprep.subr.mxu0 0.0
    %2895 = vmatpush2.msra.mxu0 0.0
    %2896 = vmatprep.subr.mxu0 0.0
    %2897 = vmatpush2.msra.mxu0 0.0
    %2898 = vmatprep.subr.mxu0 0.0
    %2899 = vmatpush2.msra.mxu0 0.0
    %2900 = vmatprep.subr.mxu0 0.0
    %2901 = vmatpush2.msra.mxu0 0.0
    %2902 = vmatprep.subr.mxu0 0.0
    %2903 = vmatpush2.msra.mxu0 0.0
    %2904 = vmatprep.subr.mxu0 0.0
    %2905 = vmatpush2.msra.mxu0 0.0
    %2906 = vmatprep.subr.mxu0 0.0
    %2907 = vmatpush2.msra.mxu0 0.0
    %2908 = vmatprep.subr.mxu0 0.0
    %2909 = vmatpush2.msra.mxu0 0.0
    %2910 = vmatprep.subr.mxu0 0.0
    %2911 = vmatpush2.msra.mxu0 0.0
    %2912 = vmatprep.subr.mxu0 0.0
    %2913 = vmatpush2.msra.mxu0 0.0
    %2914 = vmatprep.subr.mxu0 0.0
    %2915 = vmatpush2.msra.mxu0 0.0
    %2916 = vmatprep.mubr.f32.mxu0 0.0
    %2917 = vmatmul.mubr.f32.gmra.mxu0 %v2710
    %v2918 = vpop.f32.mrf.mxu0
    %v2919 = vadd.f32 %v2849, %v2918
    %v2920 = vpop.f32.mrf.mxu0
    %2921 = vdwg.mxu0
    %v2922 = vld [vmem:[%s6] sm:$0x1]
    %v2923 = vld [vmem:[%s7] sm:$0x1]
    %v2924 = vsel %vm2520, %v2919, 0.0
    %v2925 = vrot.slane %v2924, 4
    %v2926 = vadd.f32 %v2924, %v2925
    %v2927 = vrot.slane %v2926, 2
    %v2928 = vadd.f32 %v2926, %v2927
    %v2929 = vrot.slane %v2928, 1
    %v2930 = vadd.f32 %v2928, %v2929
    %v2931 = vmul.f32 %v2930, 0.5
    %v2932 = vsub.f32 %v2919, %v2931
    %v2933 = vmul.f32 %v2932, %v2932
    %v2934 = vsel %vm2520, %v2933, 0.0
    %v2935 = vrot.slane %v2934, 4
    %v2936 = vadd.f32 %v2934, %v2935
    %v2937 = vrot.slane %v2936, 2
    %v2938 = vadd.f32 %v2936, %v2937
    %v2939 = vrot.slane %v2938, 1
    %v2940 = vadd.f32 %v2938, %v2939
    %v2941 = vmul.f32 %v2940, 0.5
    %v2942 = vadd.f32 %v2941, 1e-05
    %v2943 = vrsqrt.pop %v2942
    %v2944 = vmul.f32 %v2932, %v2943
    %v2946 = vlaneseq
    %v2947 = vshrl.u32 %v2946, 7
    %v2948 = vsub.s32 0, %v2947
    %v2949 = vrot.slane %v2922, %v2948
    %v2951 = vmul.f32 %v2944, %v2949
    %v2953 = vlaneseq
    %v2954 = vshrl.u32 %v2953, 7
    %v2955 = vsub.s32 0, %v2954
    %v2956 = vrot.slane %v2923, %v2955
    %v2958 = vadd.f32 %v2951, %v2956
    %v2959 = vmax.f32 %v2958, 0.0
    %s2960 = smul.u32 8, 8
    %s2961 = smul.u32 %s2960, 8
    %s2962 = sshll.u32 %s2961, 4
    %2963 = dma.done %s395, %s2962
    %v2964 = vld [vmem:[#allocation5] sm:$0xff]
    %v2965 = vld [vmem:[#allocation5 + $0x8] sm:$0xff]
    %v2966 = vld [vmem:[#allocation5 + $0x10] sm:$0xff]
    %v2967 = vld [vmem:[#allocation5 + $0x18] sm:$0xff]
    %v2968 = vld [vmem:[#allocation5 + $0x20] sm:$0xff]
    %v2969 = vld [vmem:[#allocation5 + $0x28] sm:$0xff]
    %v2970 = vld [vmem:[#allocation5 + $0x30] sm:$0xff]
    %v2971 = vld [vmem:[#allocation5 + $0x38] sm:$0xff]
    %v2972 = vld [vmem:[#allocation5 + $0x40] sm:$0xff]
    %v2973 = vld [vmem:[#allocation5 + $0x48] sm:$0xff]
    %v2974 = vld [vmem:[#allocation5 + $0x50] sm:$0xff]
    %v2975 = vld [vmem:[#allocation5 + $0x58] sm:$0xff]
    %v2976 = vld [vmem:[#allocation5 + $0x60] sm:$0xff]
    %v2977 = vld [vmem:[#allocation5 + $0x68] sm:$0xff]
    %v2978 = vld [vmem:[#allocation5 + $0x70] sm:$0xff]
    %v2979 = vld [vmem:[#allocation5 + $0x78] sm:$0xff]
    %v2980 = vld [vmem:[#allocation5 + $0x80] sm:$0xff]
    %v2981 = vld [vmem:[#allocation5 + $0x88] sm:$0xff]
    %v2982 = vld [vmem:[#allocation5 + $0x90] sm:$0xff]
    %v2983 = vld [vmem:[#allocation5 + $0x98] sm:$0xff]
    %v2984 = vld [vmem:[#allocation5 + $0xa0] sm:$0xff]
    %v2985 = vld [vmem:[#allocation5 + $0xa8] sm:$0xff]
    %v2986 = vld [vmem:[#allocation5 + $0xb0] sm:$0xff]
    %v2987 = vld [vmem:[#allocation5 + $0xb8] sm:$0xff]
    %v2988 = vld [vmem:[#allocation5 + $0xc0] sm:$0xff]
    %v2989 = vld [vmem:[#allocation5 + $0xc8] sm:$0xff]
    %v2990 = vld [vmem:[#allocation5 + $0xd0] sm:$0xff]
    %v2991 = vld [vmem:[#allocation5 + $0xd8] sm:$0xff]
    %v2992 = vld [vmem:[#allocation5 + $0xe0] sm:$0xff]
    %v2993 = vld [vmem:[#allocation5 + $0xe8] sm:$0xff]
    %v2994 = vld [vmem:[#allocation5 + $0xf0] sm:$0xff]
    %v2995 = vld [vmem:[#allocation5 + $0xf8] sm:$0xff]
    %v2996 = vld [vmem:[#allocation5 + $0x100] sm:$0xff]
    %v2997 = vld [vmem:[#allocation5 + $0x108] sm:$0xff]
    %v2998 = vld [vmem:[#allocation5 + $0x110] sm:$0xff]
    %v2999 = vld [vmem:[#allocation5 + $0x118] sm:$0xff]
    %v3000 = vld [vmem:[#allocation5 + $0x120] sm:$0xff]
    %v3001 = vld [vmem:[#allocation5 + $0x128] sm:$0xff]
    %v3002 = vld [vmem:[#allocation5 + $0x130] sm:$0xff]
    %v3003 = vld [vmem:[#allocation5 + $0x138] sm:$0xff]
    %v3004 = vld [vmem:[#allocation5 + $0x140] sm:$0xff]
    %v3005 = vld [vmem:[#allocation5 + $0x148] sm:$0xff]
    %v3006 = vld [vmem:[#allocation5 + $0x150] sm:$0xff]
    %v3007 = vld [vmem:[#allocation5 + $0x158] sm:$0xff]
    %v3008 = vld [vmem:[#allocation5 + $0x160] sm:$0xff]
    %v3009 = vld [vmem:[#allocation5 + $0x168] sm:$0xff]
    %v3010 = vld [vmem:[#allocation5 + $0x170] sm:$0xff]
    %v3011 = vld [vmem:[#allocation5 + $0x178] sm:$0xff]
    %v3012 = vld [vmem:[#allocation5 + $0x180] sm:$0xff]
    %v3013 = vld [vmem:[#allocation5 + $0x188] sm:$0xff]
    %v3014 = vld [vmem:[#allocation5 + $0x190] sm:$0xff]
    %v3015 = vld [vmem:[#allocation5 + $0x198] sm:$0xff]
    %v3016 = vld [vmem:[#allocation5 + $0x1a0] sm:$0xff]
    %v3017 = vld [vmem:[#allocation5 + $0x1a8] sm:$0xff]
    %v3018 = vld [vmem:[#allocation5 + $0x1b0] sm:$0xff]
    %v3019 = vld [vmem:[#allocation5 + $0x1b8] sm:$0xff]
    %v3020 = vld [vmem:[#allocation5 + $0x1c0] sm:$0xff]
    %v3021 = vld [vmem:[#allocation5 + $0x1c8] sm:$0xff]
    %v3022 = vld [vmem:[#allocation5 + $0x1d0] sm:$0xff]
    %v3023 = vld [vmem:[#allocation5 + $0x1d8] sm:$0xff]
    %v3024 = vld [vmem:[#allocation5 + $0x1e0] sm:$0xff]
    %v3025 = vld [vmem:[#allocation5 + $0x1e8] sm:$0xff]
    %v3026 = vld [vmem:[#allocation5 + $0x1f0] sm:$0xff]
    %v3027 = vld [vmem:[#allocation5 + $0x1f8] sm:$0xff]
    %v3028 = vld [vmem:[%s8] sm:$0xff]
    %v3030 = vlaneseq
    %v3031 = vshrl.u32 %v3030, 7
    %v3032 = vsub.s32 0, %v3031
    %v3033 = vrot.slane %v3028, %v3032
    %v3034 = vlaneseq
    %v3035 = vshrl.u32 %v3034, 7
    %v3036 = vsub.s32 1, %v3035
    %v3037 = vrot.slane %v3028, %v3036
    %v3038 = vlaneseq
    %v3039 = vshrl.u32 %v3038, 7
    %v3040 = vsub.s32 2, %v3039
    %v3041 = vrot.slane %v3028, %v3040
    %v3042 = vlaneseq
    %v3043 = vshrl.u32 %v3042, 7
    %v3044 = vsub.s32 3, %v3043
    %v3045 = vrot.slane %v3028, %v3044
    %v3046 = vlaneseq
    %v3047 = vshrl.u32 %v3046, 7
    %v3048 = vsub.s32 4, %v3047
    %v3049 = vrot.slane %v3028, %v3048
    %v3050 = vlaneseq
    %v3051 = vshrl.u32 %v3050, 7
    %v3052 = vsub.s32 5, %v3051
    %v3053 = vrot.slane %v3028, %v3052
    %v3054 = vlaneseq
    %v3055 = vshrl.u32 %v3054, 7
    %v3056 = vsub.s32 6, %v3055
    %v3057 = vrot.slane %v3028, %v3056
    %v3058 = vlaneseq
    %v3059 = vshrl.u32 %v3058, 7
    %v3060 = vsub.s32 7, %v3059
    %v3061 = vrot.slane %v3028, %v3060
    %v3071 = vsel %vm1409, %v2959, 0
    %3073 = vmatprep.subr.mxu0 0.0
    %3074 = vmatpush1.msra.mxu0 0.0
    %3075 = vmatprep.subr.mxu0 0.0
    %3076 = vmatpush1.msra.mxu0 0.0
    %3077 = vmatprep.subr.mxu0 0.0
    %3078 = vmatpush1.msra.mxu0 0.0
    %3079 = vmatprep.subr.mxu0 0.0
    %3080 = vmatpush1.msra.mxu0 0.0
    %3081 = vmatprep.subr.mxu0 0.0
    %3082 = vmatpush1.msra.mxu0 0.0
    %3083 = vmatprep.subr.mxu0 0.0
    %3084 = vmatpush1.msra.mxu0 0.0
    %3085 = vmatprep.subr.mxu0 0.0
    %3086 = vmatpush1.msra.mxu0 0.0
    %3087 = vmatprep.subr.mxu0 0.0
    %3088 = vmatpush1.msra.mxu0 0.0
    %3089 = vmatprep.subr.mxu0 %v3021
    %3090 = vmatpush1.msra.mxu0 %v3020
    %3091 = vmatprep.subr.mxu0 %v3013
    %3092 = vmatpush1.msra.mxu0 %v3012
    %3093 = vmatprep.subr.mxu0 %v3005
    %3094 = vmatpush1.msra.mxu0 %v3004
    %3095 = vmatprep.subr.mxu0 %v2997
    %3096 = vmatpush1.msra.mxu0 %v2996
    %3097 = vmatprep.subr.mxu0 %v2989
    %3098 = vmatpush1.msra.mxu0 %v2988
    %3099 = vmatprep.subr.mxu0 %v2981
    %3100 = vmatpush1.msra.mxu0 %v2980
    %3101 = vmatprep.subr.mxu0 %v2973
    %3102 = vmatpush1.msra.mxu0 %v2972
    %3103 = vmatprep.subr.mxu0 %v2965
    %3104 = vmatpush1.msra.mxu0 %v2964
    %3105 = vmatprep.subr.mxu0 0.0
    %3106 = vmatpush2.msra.mxu0 0.0
    %3107 = vmatprep.subr.mxu0 0.0
    %3108 = vmatpush2.msra.mxu0 0.0
    %3109 = vmatprep.subr.mxu0 0.0
    %3110 = vmatpush2.msra.mxu0 0.0
    %3111 = vmatprep.subr.mxu0 0.0
    %3112 = vmatpush2.msra.mxu0 0.0
    %3113 = vmatprep.subr.mxu0 0.0
    %3114 = vmatpush2.msra.mxu0 0.0
    %3115 = vmatprep.subr.mxu0 0.0
    %3116 = vmatpush2.msra.mxu0 0.0
    %3117 = vmatprep.subr.mxu0 0.0
    %3118 = vmatpush2.msra.mxu0 0.0
    %3119 = vmatprep.subr.mxu0 0.0
    %3120 = vmatpush2.msra.mxu0 0.0
    %3121 = vmatprep.subr.mxu0 0.0
    %3122 = vmatpush2.msra.mxu0 0.0
    %3123 = vmatprep.subr.mxu0 0.0
    %3124 = vmatpush2.msra.mxu0 0.0
    %3125 = vmatprep.subr.mxu0 0.0
    %3126 = vmatpush2.msra.mxu0 0.0
    %3127 = vmatprep.subr.mxu0 0.0
    %3128 = vmatpush2.msra.mxu0 0.0
    %3129 = vmatprep.subr.mxu0 0.0
    %3130 = vmatpush2.msra.mxu0 0.0
    %3131 = vmatprep.subr.mxu0 0.0
    %3132 = vmatpush2.msra.mxu0 0.0
    %3133 = vmatprep.subr.mxu0 0.0
    %3134 = vmatpush2.msra.mxu0 0.0
    %3135 = vmatprep.subr.mxu0 0.0
    %3136 = vmatpush2.msra.mxu0 0.0
    %3137 = vmatprep.mubr.f32.mxu0 0.0
    %3138 = vmatmul.mubr.f32.gmra.mxu0 %v3071
    %v3139 = vpop.f32.mrf.mxu0
    %v3140 = vadd.f32 %v3033, %v3139
    %v3141 = vpop.f32.mrf.mxu0
    %v3142 = vadd.f32 %v3037, %v3141
    %3143 = vdwg.mxu0
    %3144 = vmatprep.subr.mxu0 0.0
    %3145 = vmatpush1.msra.mxu0 0.0
    %3146 = vmatprep.subr.mxu0 0.0
    %3147 = vmatpush1.msra.mxu0 0.0
    %3148 = vmatprep.subr.mxu0 0.0
    %3149 = vmatpush1.msra.mxu0 0.0
    %3150 = vmatprep.subr.mxu0 0.0
    %3151 = vmatpush1.msra.mxu0 0.0
    %3152 = vmatprep.subr.mxu0 0.0
    %3153 = vmatpush1.msra.mxu0 0.0
    %3154 = vmatprep.subr.mxu0 0.0
    %3155 = vmatpush1.msra.mxu0 0.0
    %3156 = vmatprep.subr.mxu0 0.0
    %3157 = vmatpush1.msra.mxu0 0.0
    %3158 = vmatprep.subr.mxu0 0.0
    %3159 = vmatpush1.msra.mxu0 0.0
    %3160 = vmatprep.subr.mxu0 %v3023
    %3161 = vmatpush1.msra.mxu0 %v3022
    %3162 = vmatprep.subr.mxu0 %v3015
    %3163 = vmatpush1.msra.mxu0 %v3014
    %3164 = vmatprep.subr.mxu0 %v3007
    %3165 = vmatpush1.msra.mxu0 %v3006
    %3166 = vmatprep.subr.mxu0 %v2999
    %3167 = vmatpush1.msra.mxu0 %v2998
    %3168 = vmatprep.subr.mxu0 %v2991
    %3169 = vmatpush1.msra.mxu0 %v2990
    %3170 = vmatprep.subr.mxu0 %v2983
    %3171 = vmatpush1.msra.mxu0 %v2982
    %3172 = vmatprep.subr.mxu0 %v2975
    %3173 = vmatpush1.msra.mxu0 %v2974
    %3174 = vmatprep.subr.mxu0 %v2967
    %3175 = vmatpush1.msra.mxu0 %v2966
    %3176 = vmatprep.subr.mxu0 0.0
    %3177 = vmatpush2.msra.mxu0 0.0
    %3178 = vmatprep.subr.mxu0 0.0
    %3179 = vmatpush2.msra.mxu0 0.0
    %3180 = vmatprep.subr.mxu0 0.0
    %3181 = vmatpush2.msra.mxu0 0.0
    %3182 = vmatprep.subr.mxu0 0.0
    %3183 = vmatpush2.msra.mxu0 0.0
    %3184 = vmatprep.subr.mxu0 0.0
    %3185 = vmatpush2.msra.mxu0 0.0
    %3186 = vmatprep.subr.mxu0 0.0
    %3187 = vmatpush2.msra.mxu0 0.0
    %3188 = vmatprep.subr.mxu0 0.0
    %3189 = vmatpush2.msra.mxu0 0.0
    %3190 = vmatprep.subr.mxu0 0.0
    %3191 = vmatpush2.msra.mxu0 0.0
    %3192 = vmatprep.subr.mxu0 0.0
    %3193 = vmatpush2.msra.mxu0 0.0
    %3194 = vmatprep.subr.mxu0 0.0
    %3195 = vmatpush2.msra.mxu0 0.0
    %3196 = vmatprep.subr.mxu0 0.0
    %3197 = vmatpush2.msra.mxu0 0.0
    %3198 = vmatprep.subr.mxu0 0.0
    %3199 = vmatpush2.msra.mxu0 0.0
    %3200 = vmatprep.subr.mxu0 0.0
    %3201 = vmatpush2.msra.mxu0 0.0
    %3202 = vmatprep.subr.mxu0 0.0
    %3203 = vmatpush2.msra.mxu0 0.0
    %3204 = vmatprep.subr.mxu0 0.0
    %3205 = vmatpush2.msra.mxu0 0.0
    %3206 = vmatprep.subr.mxu0 0.0
    %3207 = vmatpush2.msra.mxu0 0.0
    %3208 = vmatprep.mubr.f32.mxu0 0.0
    %3209 = vmatmul.mubr.f32.gmra.mxu0 %v3071
    %v3210 = vpop.f32.mrf.mxu0
    %v3211 = vadd.f32 %v3041, %v3210
    %v3212 = vpop.f32.mrf.mxu0
    %v3213 = vadd.f32 %v3045, %v3212
    %3214 = vdwg.mxu0
    %3215 = vmatprep.subr.mxu0 0.0
    %3216 = vmatpush1.msra.mxu0 0.0
    %3217 = vmatprep.subr.mxu0 0.0
    %3218 = vmatpush1.msra.mxu0 0.0
    %3219 = vmatprep.subr.mxu0 0.0
    %3220 = vmatpush1.msra.mxu0 0.0
    %3221 = vmatprep.subr.mxu0 0.0
    %3222 = vmatpush1.msra.mxu0 0.0
    %3223 = vmatprep.subr.mxu0 0.0
    %3224 = vmatpush1.msra.mxu0 0.0
    %3225 = vmatprep.subr.mxu0 0.0
    %3226 = vmatpush1.msra.mxu0 0.0
    %3227 = vmatprep.subr.mxu0 0.0
    %3228 = vmatpush1.msra.mxu0 0.0
    %3229 = vmatprep.subr.mxu0 0.0
    %3230 = vmatpush1.msra.mxu0 0.0
    %3231 = vmatprep.subr.mxu0 %v3025
    %3232 = vmatpush1.msra.mxu0 %v3024
    %3233 = vmatprep.subr.mxu0 %v3017
    %3234 = vmatpush1.msra.mxu0 %v3016
    %3235 = vmatprep.subr.mxu0 %v3009
    %3236 = vmatpush1.msra.mxu0 %v3008
    %3237 = vmatprep.subr.mxu0 %v3001
    %3238 = vmatpush1.msra.mxu0 %v3000
    %3239 = vmatprep.subr.mxu0 %v2993
    %3240 = vmatpush1.msra.mxu0 %v2992
    %3241 = vmatprep.subr.mxu0 %v2985
    %3242 = vmatpush1.msra.mxu0 %v2984
    %3243 = vmatprep.subr.mxu0 %v2977
    %3244 = vmatpush1.msra.mxu0 %v2976
    %3245 = vmatprep.subr.mxu0 %v2969
    %3246 = vmatpush1.msra.mxu0 %v2968
    %3247 = vmatprep.subr.mxu0 0.0
    %3248 = vmatpush2.msra.mxu0 0.0
    %3249 = vmatprep.subr.mxu0 0.0
    %3250 = vmatpush2.msra.mxu0 0.0
    %3251 = vmatprep.subr.mxu0 0.0
    %3252 = vmatpush2.msra.mxu0 0.0
    %3253 = vmatprep.subr.mxu0 0.0
    %3254 = vmatpush2.msra.mxu0 0.0
    %3255 = vmatprep.subr.mxu0 0.0
    %3256 = vmatpush2.msra.mxu0 0.0
    %3257 = vmatprep.subr.mxu0 0.0
    %3258 = vmatpush2.msra.mxu0 0.0
    %3259 = vmatprep.subr.mxu0 0.0
    %3260 = vmatpush2.msra.mxu0 0.0
    %3261 = vmatprep.subr.mxu0 0.0
    %3262 = vmatpush2.msra.mxu0 0.0
    %3263 = vmatprep.subr.mxu0 0.0
    %3264 = vmatpush2.msra.mxu0 0.0
    %3265 = vmatprep.subr.mxu0 0.0
    %3266 = vmatpush2.msra.mxu0 0.0
    %3267 = vmatprep.subr.mxu0 0.0
    %3268 = vmatpush2.msra.mxu0 0.0
    %3269 = vmatprep.subr.mxu0 0.0
    %3270 = vmatpush2.msra.mxu0 0.0
    %3271 = vmatprep.subr.mxu0 0.0
    %3272 = vmatpush2.msra.mxu0 0.0
    %3273 = vmatprep.subr.mxu0 0.0
    %3274 = vmatpush2.msra.mxu0 0.0
    %3275 = vmatprep.subr.mxu0 0.0
    %3276 = vmatpush2.msra.mxu0 0.0
    %3277 = vmatprep.subr.mxu0 0.0
    %3278 = vmatpush2.msra.mxu0 0.0
    %3279 = vmatprep.mubr.f32.mxu0 0.0
    %3280 = vmatmul.mubr.f32.gmra.mxu0 %v3071
    %v3281 = vpop.f32.mrf.mxu0
    %v3282 = vadd.f32 %v3049, %v3281
    %v3283 = vpop.f32.mrf.mxu0
    %v3284 = vadd.f32 %v3053, %v3283
    %3285 = vdwg.mxu0
    %3286 = vmatprep.subr.mxu0 0.0
    %3287 = vmatpush1.msra.mxu0 0.0
    %3288 = vmatprep.subr.mxu0 0.0
    %3289 = vmatpush1.msra.mxu0 0.0
    %3290 = vmatprep.subr.mxu0 0.0
    %3291 = vmatpush1.msra.mxu0 0.0
    %3292 = vmatprep.subr.mxu0 0.0
    %3293 = vmatpush1.msra.mxu0 0.0
    %3294 = vmatprep.subr.mxu0 0.0
    %3295 = vmatpush1.msra.mxu0 0.0
    %3296 = vmatprep.subr.mxu0 0.0
    %3297 = vmatpush1.msra.mxu0 0.0
    %3298 = vmatprep.subr.mxu0 0.0
    %3299 = vmatpush1.msra.mxu0 0.0
    %3300 = vmatprep.subr.mxu0 0.0
    %3301 = vmatpush1.msra.mxu0 0.0
    %3302 = vmatprep.subr.mxu0 %v3027
    %3303 = vmatpush1.msra.mxu0 %v3026
    %3304 = vmatprep.subr.mxu0 %v3019
    %3305 = vmatpush1.msra.mxu0 %v3018
    %3306 = vmatprep.subr.mxu0 %v3011
    %3307 = vmatpush1.msra.mxu0 %v3010
    %3308 = vmatprep.subr.mxu0 %v3003
    %3309 = vmatpush1.msra.mxu0 %v3002
    %3310 = vmatprep.subr.mxu0 %v2995
    %3311 = vmatpush1.msra.mxu0 %v2994
    %3312 = vmatprep.subr.mxu0 %v2987
    %3313 = vmatpush1.msra.mxu0 %v2986
    %3314 = vmatprep.subr.mxu0 %v2979
    %3315 = vmatpush1.msra.mxu0 %v2978
    %3316 = vmatprep.subr.mxu0 %v2971
    %3317 = vmatpush1.msra.mxu0 %v2970
    %3318 = vmatprep.subr.mxu0 0.0
    %3319 = vmatpush2.msra.mxu0 0.0
    %3320 = vmatprep.subr.mxu0 0.0
    %3321 = vmatpush2.msra.mxu0 0.0
    %3322 = vmatprep.subr.mxu0 0.0
    %3323 = vmatpush2.msra.mxu0 0.0
    %3324 = vmatprep.subr.mxu0 0.0
    %3325 = vmatpush2.msra.mxu0 0.0
    %3326 = vmatprep.subr.mxu0 0.0
    %3327 = vmatpush2.msra.mxu0 0.0
    %3328 = vmatprep.subr.mxu0 0.0
    %3329 = vmatpush2.msra.mxu0 0.0
    %3330 = vmatprep.subr.mxu0 0.0
    %3331 = vmatpush2.msra.mxu0 0.0
    %3332 = vmatprep.subr.mxu0 0.0
    %3333 = vmatpush2.msra.mxu0 0.0
    %3334 = vmatprep.subr.mxu0 0.0
    %3335 = vmatpush2.msra.mxu0 0.0
    %3336 = vmatprep.subr.mxu0 0.0
    %3337 = vmatpush2.msra.mxu0 0.0
    %3338 = vmatprep.subr.mxu0 0.0
    %3339 = vmatpush2.msra.mxu0 0.0
    %3340 = vmatprep.subr.mxu0 0.0
    %3341 = vmatpush2.msra.mxu0 0.0
    %3342 = vmatprep.subr.mxu0 0.0
    %3343 = vmatpush2.msra.mxu0 0.0
    %3344 = vmatprep.subr.mxu0 0.0
    %3345 = vmatpush2.msra.mxu0 0.0
    %3346 = vmatprep.subr.mxu0 0.0
    %3347 = vmatpush2.msra.mxu0 0.0
    %3348 = vmatprep.subr.mxu0 0.0
    %3349 = vmatpush2.msra.mxu0 0.0
    %3350 = vmatprep.mubr.f32.mxu0 0.0
    %3351 = vmatmul.mubr.f32.gmra.mxu0 %v3071
    %v3352 = vpop.f32.mrf.mxu0
    %v3353 = vadd.f32 %v3057, %v3352
    %v3354 = vpop.f32.mrf.mxu0
    %v3355 = vadd.f32 %v3061, %v3354
    %3356 = vdwg.mxu0
    %v3357 = vmax.f32 %v3140, 0.0
    %v3358 = vmax.f32 %v3142, 0.0
    %v3359 = vmax.f32 %v3211, 0.0
    %v3360 = vmax.f32 %v3213, 0.0
    %v3361 = vmax.f32 %v3282, 0.0
    %v3362 = vmax.f32 %v3284, 0.0
    %v3363 = vmax.f32 %v3353, 0.0
    %v3364 = vmax.f32 %v3355, 0.0
    %s3365 = smul.u32 1024, 1
    %s3366 = sshll.u32 %s3365, 4
    %3367 = dma.done %s565, %s3366
    %v3368 = vld [vmem:[#allocation6] sm:$0xff]
    %v3369 = vld [vmem:[#allocation6 + $0x8] sm:$0xff]
    %v3370 = vld [vmem:[#allocation6 + $0x10] sm:$0xff]
    %v3371 = vld [vmem:[#allocation6 + $0x18] sm:$0xff]
    %v3372 = vld [vmem:[#allocation6 + $0x20] sm:$0xff]
    %v3373 = vld [vmem:[#allocation6 + $0x28] sm:$0xff]
    %v3374 = vld [vmem:[#allocation6 + $0x30] sm:$0xff]
    %v3375 = vld [vmem:[#allocation6 + $0x38] sm:$0xff]
    %v3376 = vld [vmem:[#allocation6 + $0x40] sm:$0xff]
    %v3377 = vld [vmem:[#allocation6 + $0x48] sm:$0xff]
    %v3378 = vld [vmem:[#allocation6 + $0x50] sm:$0xff]
    %v3379 = vld [vmem:[#allocation6 + $0x58] sm:$0xff]
    %v3380 = vld [vmem:[#allocation6 + $0x60] sm:$0xff]
    %v3381 = vld [vmem:[#allocation6 + $0x68] sm:$0xff]
    %v3382 = vld [vmem:[#allocation6 + $0x70] sm:$0xff]
    %v3383 = vld [vmem:[#allocation6 + $0x78] sm:$0xff]
    %v3384 = vld [vmem:[#allocation6 + $0x80] sm:$0xff]
    %v3385 = vld [vmem:[#allocation6 + $0x88] sm:$0xff]
    %v3386 = vld [vmem:[#allocation6 + $0x90] sm:$0xff]
    %v3387 = vld [vmem:[#allocation6 + $0x98] sm:$0xff]
    %v3388 = vld [vmem:[#allocation6 + $0xa0] sm:$0xff]
    %v3389 = vld [vmem:[#allocation6 + $0xa8] sm:$0xff]
    %v3390 = vld [vmem:[#allocation6 + $0xb0] sm:$0xff]
    %v3391 = vld [vmem:[#allocation6 + $0xb8] sm:$0xff]
    %v3392 = vld [vmem:[#allocation6 + $0xc0] sm:$0xff]
    %v3393 = vld [vmem:[#allocation6 + $0xc8] sm:$0xff]
    %v3394 = vld [vmem:[#allocation6 + $0xd0] sm:$0xff]
    %v3395 = vld [vmem:[#allocation6 + $0xd8] sm:$0xff]
    %v3396 = vld [vmem:[#allocation6 + $0xe0] sm:$0xff]
    %v3397 = vld [vmem:[#allocation6 + $0xe8] sm:$0xff]
    %v3398 = vld [vmem:[#allocation6 + $0xf0] sm:$0xff]
    %v3399 = vld [vmem:[#allocation6 + $0xf8] sm:$0xff]
    %v3400 = vld [vmem:[#allocation6 + $0x100] sm:$0xff]
    %v3401 = vld [vmem:[#allocation6 + $0x108] sm:$0xff]
    %v3402 = vld [vmem:[#allocation6 + $0x110] sm:$0xff]
    %v3403 = vld [vmem:[#allocation6 + $0x118] sm:$0xff]
    %v3404 = vld [vmem:[#allocation6 + $0x120] sm:$0xff]
    %v3405 = vld [vmem:[#allocation6 + $0x128] sm:$0xff]
    %v3406 = vld [vmem:[#allocation6 + $0x130] sm:$0xff]
    %v3407 = vld [vmem:[#allocation6 + $0x138] sm:$0xff]
    %v3408 = vld [vmem:[#allocation6 + $0x140] sm:$0xff]
    %v3409 = vld [vmem:[#allocation6 + $0x148] sm:$0xff]
    %v3410 = vld [vmem:[#allocation6 + $0x150] sm:$0xff]
    %v3411 = vld [vmem:[#allocation6 + $0x158] sm:$0xff]
    %v3412 = vld [vmem:[#allocation6 + $0x160] sm:$0xff]
    %v3413 = vld [vmem:[#allocation6 + $0x168] sm:$0xff]
    %v3414 = vld [vmem:[#allocation6 + $0x170] sm:$0xff]
    %v3415 = vld [vmem:[#allocation6 + $0x178] sm:$0xff]
    %v3416 = vld [vmem:[#allocation6 + $0x180] sm:$0xff]
    %v3417 = vld [vmem:[#allocation6 + $0x188] sm:$0xff]
    %v3418 = vld [vmem:[#allocation6 + $0x190] sm:$0xff]
    %v3419 = vld [vmem:[#allocation6 + $0x198] sm:$0xff]
    %v3420 = vld [vmem:[#allocation6 + $0x1a0] sm:$0xff]
    %v3421 = vld [vmem:[#allocation6 + $0x1a8] sm:$0xff]
    %v3422 = vld [vmem:[#allocation6 + $0x1b0] sm:$0xff]
    %v3423 = vld [vmem:[#allocation6 + $0x1b8] sm:$0xff]
    %v3424 = vld [vmem:[#allocation6 + $0x1c0] sm:$0xff]
    %v3425 = vld [vmem:[#allocation6 + $0x1c8] sm:$0xff]
    %v3426 = vld [vmem:[#allocation6 + $0x1d0] sm:$0xff]
    %v3427 = vld [vmem:[#allocation6 + $0x1d8] sm:$0xff]
    %v3428 = vld [vmem:[#allocation6 + $0x1e0] sm:$0xff]
    %v3429 = vld [vmem:[#allocation6 + $0x1e8] sm:$0xff]
    %v3430 = vld [vmem:[#allocation6 + $0x1f0] sm:$0xff]
    %v3431 = vld [vmem:[#allocation6 + $0x1f8] sm:$0xff]
    %v3432 = vld [vmem:[#allocation6 + $0x200] sm:$0xff]
    %v3433 = vld [vmem:[#allocation6 + $0x208] sm:$0xff]
    %v3434 = vld [vmem:[#allocation6 + $0x210] sm:$0xff]
    %v3435 = vld [vmem:[#allocation6 + $0x218] sm:$0xff]
    %v3436 = vld [vmem:[#allocation6 + $0x220] sm:$0xff]
    %v3437 = vld [vmem:[#allocation6 + $0x228] sm:$0xff]
    %v3438 = vld [vmem:[#allocation6 + $0x230] sm:$0xff]
    %v3439 = vld [vmem:[#allocation6 + $0x238] sm:$0xff]
    %v3440 = vld [vmem:[#allocation6 + $0x240] sm:$0xff]
    %v3441 = vld [vmem:[#allocation6 + $0x248] sm:$0xff]
    %v3442 = vld [vmem:[#allocation6 + $0x250] sm:$0xff]
    %v3443 = vld [vmem:[#allocation6 + $0x258] sm:$0xff]
    %v3444 = vld [vmem:[#allocation6 + $0x260] sm:$0xff]
    %v3445 = vld [vmem:[#allocation6 + $0x268] sm:$0xff]
    %v3446 = vld [vmem:[#allocation6 + $0x270] sm:$0xff]
    %v3447 = vld [vmem:[#allocation6 + $0x278] sm:$0xff]
    %v3448 = vld [vmem:[#allocation6 + $0x280] sm:$0xff]
    %v3449 = vld [vmem:[#allocation6 + $0x288] sm:$0xff]
    %v3450 = vld [vmem:[#allocation6 + $0x290] sm:$0xff]
    %v3451 = vld [vmem:[#allocation6 + $0x298] sm:$0xff]
    %v3452 = vld [vmem:[#allocation6 + $0x2a0] sm:$0xff]
    %v3453 = vld [vmem:[#allocation6 + $0x2a8] sm:$0xff]
    %v3454 = vld [vmem:[#allocation6 + $0x2b0] sm:$0xff]
    %v3455 = vld [vmem:[#allocation6 + $0x2b8] sm:$0xff]
    %v3456 = vld [vmem:[#allocation6 + $0x2c0] sm:$0xff]
    %v3457 = vld [vmem:[#allocation6 + $0x2c8] sm:$0xff]
    %v3458 = vld [vmem:[#allocation6 + $0x2d0] sm:$0xff]
    %v3459 = vld [vmem:[#allocation6 + $0x2d8] sm:$0xff]
    %v3460 = vld [vmem:[#allocation6 + $0x2e0] sm:$0xff]
    %v3461 = vld [vmem:[#allocation6 + $0x2e8] sm:$0xff]
    %v3462 = vld [vmem:[#allocation6 + $0x2f0] sm:$0xff]
    %v3463 = vld [vmem:[#allocation6 + $0x2f8] sm:$0xff]
    %v3464 = vld [vmem:[#allocation6 + $0x300] sm:$0xff]
    %v3465 = vld [vmem:[#allocation6 + $0x308] sm:$0xff]
    %v3466 = vld [vmem:[#allocation6 + $0x310] sm:$0xff]
    %v3467 = vld [vmem:[#allocation6 + $0x318] sm:$0xff]
    %v3468 = vld [vmem:[#allocation6 + $0x320] sm:$0xff]
    %v3469 = vld [vmem:[#allocation6 + $0x328] sm:$0xff]
    %v3470 = vld [vmem:[#allocation6 + $0x330] sm:$0xff]
    %v3471 = vld [vmem:[#allocation6 + $0x338] sm:$0xff]
    %v3472 = vld [vmem:[#allocation6 + $0x340] sm:$0xff]
    %v3473 = vld [vmem:[#allocation6 + $0x348] sm:$0xff]
    %v3474 = vld [vmem:[#allocation6 + $0x350] sm:$0xff]
    %v3475 = vld [vmem:[#allocation6 + $0x358] sm:$0xff]
    %v3476 = vld [vmem:[#allocation6 + $0x360] sm:$0xff]
    %v3477 = vld [vmem:[#allocation6 + $0x368] sm:$0xff]
    %v3478 = vld [vmem:[#allocation6 + $0x370] sm:$0xff]
    %v3479 = vld [vmem:[#allocation6 + $0x378] sm:$0xff]
    %v3480 = vld [vmem:[#allocation6 + $0x380] sm:$0xff]
    %v3481 = vld [vmem:[#allocation6 + $0x388] sm:$0xff]
    %v3482 = vld [vmem:[#allocation6 + $0x390] sm:$0xff]
    %v3483 = vld [vmem:[#allocation6 + $0x398] sm:$0xff]
    %v3484 = vld [vmem:[#allocation6 + $0x3a0] sm:$0xff]
    %v3485 = vld [vmem:[#allocation6 + $0x3a8] sm:$0xff]
    %v3486 = vld [vmem:[#allocation6 + $0x3b0] sm:$0xff]
    %v3487 = vld [vmem:[#allocation6 + $0x3b8] sm:$0xff]
    %v3488 = vld [vmem:[#allocation6 + $0x3c0] sm:$0xff]
    %v3489 = vld [vmem:[#allocation6 + $0x3c8] sm:$0xff]
    %v3490 = vld [vmem:[#allocation6 + $0x3d0] sm:$0xff]
    %v3491 = vld [vmem:[#allocation6 + $0x3d8] sm:$0xff]
    %v3492 = vld [vmem:[#allocation6 + $0x3e0] sm:$0xff]
    %v3493 = vld [vmem:[#allocation6 + $0x3e8] sm:$0xff]
    %v3494 = vld [vmem:[#allocation6 + $0x3f0] sm:$0xff]
    %v3495 = vld [vmem:[#allocation6 + $0x3f8] sm:$0xff]
    %v3496 = vld [vmem:[%s9] sm:$0x1]
    %v3498 = vlaneseq
    %v3499 = vshrl.u32 %v3498, 7
    %v3500 = vsub.s32 0, %v3499
    %v3501 = vrot.slane %v3496, %v3500
    %3503 = vmatprep.subr.mxu0 0.0
    %3504 = vmatpush1.msra.mxu0 %v3383
    %3505 = vmatprep.subr.mxu0 0.0
    %3506 = vmatpush1.msra.mxu0 %v3382
    %3507 = vmatprep.subr.mxu0 0.0
    %3508 = vmatpush1.msra.mxu0 %v3381
    %3509 = vmatprep.subr.mxu0 0.0
    %3510 = vmatpush1.msra.mxu0 %v3380
    %3511 = vmatprep.subr.mxu0 0.0
    %3512 = vmatpush1.msra.mxu0 %v3379
    %3513 = vmatprep.subr.mxu0 0.0
    %3514 = vmatpush1.msra.mxu0 %v3378
    %3515 = vmatprep.subr.mxu0 0.0
    %3516 = vmatpush1.msra.mxu0 %v3377
    %3517 = vmatprep.subr.mxu0 0.0
    %3518 = vmatpush1.msra.mxu0 %v3376
    %3519 = vmatprep.subr.mxu0 0.0
    %3520 = vmatpush1.msra.mxu0 %v3375
    %3521 = vmatprep.subr.mxu0 0.0
    %3522 = vmatpush1.msra.mxu0 %v3374
    %3523 = vmatprep.subr.mxu0 0.0
    %3524 = vmatpush1.msra.mxu0 %v3373
    %3525 = vmatprep.subr.mxu0 0.0
    %3526 = vmatpush1.msra.mxu0 %v3372
    %3527 = vmatprep.subr.mxu0 0.0
    %3528 = vmatpush1.msra.mxu0 %v3371
    %3529 = vmatprep.subr.mxu0 0.0
    %3530 = vmatpush1.msra.mxu0 %v3370
    %3531 = vmatprep.subr.mxu0 0.0
    %3532 = vmatpush1.msra.mxu0 %v3369
    %3533 = vmatprep.subr.mxu0 0.0
    %3534 = vmatpush1.msra.mxu0 %v3368
    %3535 = vmatprep.subr.mxu0 0.0
    %3536 = vmatpush2.msra.mxu0 %v3399
    %3537 = vmatprep.subr.mxu0 0.0
    %3538 = vmatpush2.msra.mxu0 %v3398
    %3539 = vmatprep.subr.mxu0 0.0
    %3540 = vmatpush2.msra.mxu0 %v3397
    %3541 = vmatprep.subr.mxu0 0.0
    %3542 = vmatpush2.msra.mxu0 %v3396
    %3543 = vmatprep.subr.mxu0 0.0
    %3544 = vmatpush2.msra.mxu0 %v3395
    %3545 = vmatprep.subr.mxu0 0.0
    %3546 = vmatpush2.msra.mxu0 %v3394
    %3547 = vmatprep.subr.mxu0 0.0
    %3548 = vmatpush2.msra.mxu0 %v3393
    %3549 = vmatprep.subr.mxu0 0.0
    %3550 = vmatpush2.msra.mxu0 %v3392
    %3551 = vmatprep.subr.mxu0 0.0
    %3552 = vmatpush2.msra.mxu0 %v3391
    %3553 = vmatprep.subr.mxu0 0.0
    %3554 = vmatpush2.msra.mxu0 %v3390
    %3555 = vmatprep.subr.mxu0 0.0
    %3556 = vmatpush2.msra.mxu0 %v3389
    %3557 = vmatprep.subr.mxu0 0.0
    %3558 = vmatpush2.msra.mxu0 %v3388
    %3559 = vmatprep.subr.mxu0 0.0
    %3560 = vmatpush2.msra.mxu0 %v3387
    %3561 = vmatprep.subr.mxu0 0.0
    %3562 = vmatpush2.msra.mxu0 %v3386
    %3563 = vmatprep.subr.mxu0 0.0
    %3564 = vmatpush2.msra.mxu0 %v3385
    %3565 = vmatprep.subr.mxu0 0.0
    %3566 = vmatpush2.msra.mxu0 %v3384
    %3567 = vmatprep.mubr.f32.mxu0 %v3358
    %3568 = vmatmul.mubr.f32.gmra.mxu0 %v3357
    %v3569 = vpop.f32.mrf.mxu0
    %v3570 = vadd.f32 %v3501, %v3569
    %v3571 = vpop.f32.mrf.mxu0
    %3572 = vdwg.mxu0
    %3573 = vmatprep.subr.mxu0 0.0
    %3574 = vmatpush1.msra.mxu0 %v3415
    %3575 = vmatprep.subr.mxu0 0.0
    %3576 = vmatpush1.msra.mxu0 %v3414
    %3577 = vmatprep.subr.mxu0 0.0
    %3578 = vmatpush1.msra.mxu0 %v3413
    %3579 = vmatprep.subr.mxu0 0.0
    %3580 = vmatpush1.msra.mxu0 %v3412
    %3581 = vmatprep.subr.mxu0 0.0
    %3582 = vmatpush1.msra.mxu0 %v3411
    %3583 = vmatprep.subr.mxu0 0.0
    %3584 = vmatpush1.msra.mxu0 %v3410
    %3585 = vmatprep.subr.mxu0 0.0
    %3586 = vmatpush1.msra.mxu0 %v3409
    %3587 = vmatprep.subr.mxu0 0.0
    %3588 = vmatpush1.msra.mxu0 %v3408
    %3589 = vmatprep.subr.mxu0 0.0
    %3590 = vmatpush1.msra.mxu0 %v3407
    %3591 = vmatprep.subr.mxu0 0.0
    %3592 = vmatpush1.msra.mxu0 %v3406
    %3593 = vmatprep.subr.mxu0 0.0
    %3594 = vmatpush1.msra.mxu0 %v3405
    %3595 = vmatprep.subr.mxu0 0.0
    %3596 = vmatpush1.msra.mxu0 %v3404
    %3597 = vmatprep.subr.mxu0 0.0
    %3598 = vmatpush1.msra.mxu0 %v3403
    %3599 = vmatprep.subr.mxu0 0.0
    %3600 = vmatpush1.msra.mxu0 %v3402
    %3601 = vmatprep.subr.mxu0 0.0
    %3602 = vmatpush1.msra.mxu0 %v3401
    %3603 = vmatprep.subr.mxu0 0.0
    %3604 = vmatpush1.msra.mxu0 %v3400
    %3605 = vmatprep.subr.mxu0 0.0
    %3606 = vmatpush2.msra.mxu0 %v3431
    %3607 = vmatprep.subr.mxu0 0.0
    %3608 = vmatpush2.msra.mxu0 %v3430
    %3609 = vmatprep.subr.mxu0 0.0
    %3610 = vmatpush2.msra.mxu0 %v3429
    %3611 = vmatprep.subr.mxu0 0.0
    %3612 = vmatpush2.msra.mxu0 %v3428
    %3613 = vmatprep.subr.mxu0 0.0
    %3614 = vmatpush2.msra.mxu0 %v3427
    %3615 = vmatprep.subr.mxu0 0.0
    %3616 = vmatpush2.msra.mxu0 %v3426
    %3617 = vmatprep.subr.mxu0 0.0
    %3618 = vmatpush2.msra.mxu0 %v3425
    %3619 = vmatprep.subr.mxu0 0.0
    %3620 = vmatpush2.msra.mxu0 %v3424
    %3621 = vmatprep.subr.mxu0 0.0
    %3622 = vmatpush2.msra.mxu0 %v3423
    %3623 = vmatprep.subr.mxu0 0.0
    %3624 = vmatpush2.msra.mxu0 %v3422
    %3625 = vmatprep.subr.mxu0 0.0
    %3626 = vmatpush2.msra.mxu0 %v3421
    %3627 = vmatprep.subr.mxu0 0.0
    %3628 = vmatpush2.msra.mxu0 %v3420
    %3629 = vmatprep.subr.mxu0 0.0
    %3630 = vmatpush2.msra.mxu0 %v3419
    %3631 = vmatprep.subr.mxu0 0.0
    %3632 = vmatpush2.msra.mxu0 %v3418
    %3633 = vmatprep.subr.mxu0 0.0
    %3634 = vmatpush2.msra.mxu0 %v3417
    %3635 = vmatprep.subr.mxu0 0.0
    %3636 = vmatpush2.msra.mxu0 %v3416
    %3637 = vmatprep.mubr.f32.mxu0 %v3360
    %3638 = vmatmul.mubr.f32.gmra.mxu0 %v3359
    %v3639 = vpop.f32.mrf.mxu0
    %v3640 = vadd.f32 %v3570, %v3639
    %v3641 = vpop.f32.mrf.mxu0
    %3642 = vdwg.mxu0
    %3643 = vmatprep.subr.mxu0 0.0
    %3644 = vmatpush1.msra.mxu0 %v3447
    %3645 = vmatprep.subr.mxu0 0.0
    %3646 = vmatpush1.msra.mxu0 %v3446
    %3647 = vmatprep.subr.mxu0 0.0
    %3648 = vmatpush1.msra.mxu0 %v3445
    %3649 = vmatprep.subr.mxu0 0.0
    %3650 = vmatpush1.msra.mxu0 %v3444
    %3651 = vmatprep.subr.mxu0 0.0
    %3652 = vmatpush1.msra.mxu0 %v3443
    %3653 = vmatprep.subr.mxu0 0.0
    %3654 = vmatpush1.msra.mxu0 %v3442
    %3655 = vmatprep.subr.mxu0 0.0
    %3656 = vmatpush1.msra.mxu0 %v3441
    %3657 = vmatprep.subr.mxu0 0.0
    %3658 = vmatpush1.msra.mxu0 %v3440
    %3659 = vmatprep.subr.mxu0 0.0
    %3660 = vmatpush1.msra.mxu0 %v3439
    %3661 = vmatprep.subr.mxu0 0.0
    %3662 = vmatpush1.msra.mxu0 %v3438
    %3663 = vmatprep.subr.mxu0 0.0
    %3664 = vmatpush1.msra.mxu0 %v3437
    %3665 = vmatprep.subr.mxu0 0.0
    %3666 = vmatpush1.msra.mxu0 %v3436
    %3667 = vmatprep.subr.mxu0 0.0
    %3668 = vmatpush1.msra.mxu0 %v3435
    %3669 = vmatprep.subr.mxu0 0.0
    %3670 = vmatpush1.msra.mxu0 %v3434
    %3671 = vmatprep.subr.mxu0 0.0
    %3672 = vmatpush1.msra.mxu0 %v3433
    %3673 = vmatprep.subr.mxu0 0.0
    %3674 = vmatpush1.msra.mxu0 %v3432
    %3675 = vmatprep.subr.mxu0 0.0
    %3676 = vmatpush2.msra.mxu0 %v3463
    %3677 = vmatprep.subr.mxu0 0.0
    %3678 = vmatpush2.msra.mxu0 %v3462
    %3679 = vmatprep.subr.mxu0 0.0
    %3680 = vmatpush2.msra.mxu0 %v3461
    %3681 = vmatprep.subr.mxu0 0.0
    %3682 = vmatpush2.msra.mxu0 %v3460
    %3683 = vmatprep.subr.mxu0 0.0
    %3684 = vmatpush2.msra.mxu0 %v3459
    %3685 = vmatprep.subr.mxu0 0.0
    %3686 = vmatpush2.msra.mxu0 %v3458
    %3687 = vmatprep.subr.mxu0 0.0
    %3688 = vmatpush2.msra.mxu0 %v3457
    %3689 = vmatprep.subr.mxu0 0.0
    %3690 = vmatpush2.msra.mxu0 %v3456
    %3691 = vmatprep.subr.mxu0 0.0
    %3692 = vmatpush2.msra.mxu0 %v3455
    %3693 = vmatprep.subr.mxu0 0.0
    %3694 = vmatpush2.msra.mxu0 %v3454
    %3695 = vmatprep.subr.mxu0 0.0
    %3696 = vmatpush2.msra.mxu0 %v3453
    %3697 = vmatprep.subr.mxu0 0.0
    %3698 = vmatpush2.msra.mxu0 %v3452
    %3699 = vmatprep.subr.mxu0 0.0
    %3700 = vmatpush2.msra.mxu0 %v3451
    %3701 = vmatprep.subr.mxu0 0.0
    %3702 = vmatpush2.msra.mxu0 %v3450
    %3703 = vmatprep.subr.mxu0 0.0
    %3704 = vmatpush2.msra.mxu0 %v3449
    %3705 = vmatprep.subr.mxu0 0.0
    %3706 = vmatpush2.msra.mxu0 %v3448
    %3707 = vmatprep.mubr.f32.mxu0 %v3362
    %3708 = vmatmul.mubr.f32.gmra.mxu0 %v3361
    %v3709 = vpop.f32.mrf.mxu0
    %v3710 = vadd.f32 %v3640, %v3709
    %v3711 = vpop.f32.mrf.mxu0
    %3712 = vdwg.mxu0
    %3713 = vmatprep.subr.mxu0 0.0
    %3714 = vmatpush1.msra.mxu0 %v3479
    %3715 = vmatprep.subr.mxu0 0.0
    %3716 = vmatpush1.msra.mxu0 %v3478
    %3717 = vmatprep.subr.mxu0 0.0
    %3718 = vmatpush1.msra.mxu0 %v3477
    %3719 = vmatprep.subr.mxu0 0.0
    %3720 = vmatpush1.msra.mxu0 %v3476
    %3721 = vmatprep.subr.mxu0 0.0
    %3722 = vmatpush1.msra.mxu0 %v3475
    %3723 = vmatprep.subr.mxu0 0.0
    %3724 = vmatpush1.msra.mxu0 %v3474
    %3725 = vmatprep.subr.mxu0 0.0
    %3726 = vmatpush1.msra.mxu0 %v3473
    %3727 = vmatprep.subr.mxu0 0.0
    %3728 = vmatpush1.msra.mxu0 %v3472
    %3729 = vmatprep.subr.mxu0 0.0
    %3730 = vmatpush1.msra.mxu0 %v3471
    %3731 = vmatprep.subr.mxu0 0.0
    %3732 = vmatpush1.msra.mxu0 %v3470
    %3733 = vmatprep.subr.mxu0 0.0
    %3734 = vmatpush1.msra.mxu0 %v3469
    %3735 = vmatprep.subr.mxu0 0.0
    %3736 = vmatpush1.msra.mxu0 %v3468
    %3737 = vmatprep.subr.mxu0 0.0
    %3738 = vmatpush1.msra.mxu0 %v3467
    %3739 = vmatprep.subr.mxu0 0.0
    %3740 = vmatpush1.msra.mxu0 %v3466
    %3741 = vmatprep.subr.mxu0 0.0
    %3742 = vmatpush1.msra.mxu0 %v3465
    %3743 = vmatprep.subr.mxu0 0.0
    %3744 = vmatpush1.msra.mxu0 %v3464
    %3745 = vmatprep.subr.mxu0 0.0
    %3746 = vmatpush2.msra.mxu0 %v3495
    %3747 = vmatprep.subr.mxu0 0.0
    %3748 = vmatpush2.msra.mxu0 %v3494
    %3749 = vmatprep.subr.mxu0 0.0
    %3750 = vmatpush2.msra.mxu0 %v3493
    %3751 = vmatprep.subr.mxu0 0.0
    %3752 = vmatpush2.msra.mxu0 %v3492
    %3753 = vmatprep.subr.mxu0 0.0
    %3754 = vmatpush2.msra.mxu0 %v3491
    %3755 = vmatprep.subr.mxu0 0.0
    %3756 = vmatpush2.msra.mxu0 %v3490
    %3757 = vmatprep.subr.mxu0 0.0
    %3758 = vmatpush2.msra.mxu0 %v3489
    %3759 = vmatprep.subr.mxu0 0.0
    %3760 = vmatpush2.msra.mxu0 %v3488
    %3761 = vmatprep.subr.mxu0 0.0
    %3762 = vmatpush2.msra.mxu0 %v3487
    %3763 = vmatprep.subr.mxu0 0.0
    %3764 = vmatpush2.msra.mxu0 %v3486
    %3765 = vmatprep.subr.mxu0 0.0
    %3766 = vmatpush2.msra.mxu0 %v3485
    %3767 = vmatprep.subr.mxu0 0.0
    %3768 = vmatpush2.msra.mxu0 %v3484
    %3769 = vmatprep.subr.mxu0 0.0
    %3770 = vmatpush2.msra.mxu0 %v3483
    %3771 = vmatprep.subr.mxu0 0.0
    %3772 = vmatpush2.msra.mxu0 %v3482
    %3773 = vmatprep.subr.mxu0 0.0
    %3774 = vmatpush2.msra.mxu0 %v3481
    %3775 = vmatprep.subr.mxu0 0.0
    %3776 = vmatpush2.msra.mxu0 %v3480
    %3777 = vmatprep.mubr.f32.mxu0 %v3364
    %3778 = vmatmul.mubr.f32.gmra.mxu0 %v3363
    %v3779 = vpop.f32.mrf.mxu0
    %v3780 = vadd.f32 %v3710, %v3779
    %v3781 = vpop.f32.mrf.mxu0
    %3782 = vdwg.mxu0
    %vm3783 = vcmask 41984
    %v3784 = vsel %vm3783, %v3780, 0.0
    %3785 = vadd.xlane.f32.xlu0 %v3784
    %v3786 = vpop.xlane.xlu0 %3785
    %v3787 = vmul.f32 %v3786, 0.16666667
    %v3788 = vsub.f32 %v3780, %v3787
    %3790 = vset.pattern.permute.xlu0 6
    %3791 = vperm.xlu0 %3790, %v3788
    %v3792 = vpop.permute.xlu0 %3791
    %v3794 = vadd.f32 %v3780, %v3792
    %3795 = vst [vmem:[#allocation8] sm:$0x3] %v3794
    // Predicated region
    $region178: #{dueling_dqn_forward.1} parent=1 // pred_check
      _
    $region179: #{dueling_dqn_forward.1} parent=1 // pred_check_branch
      %3797 = sbr.rel (0) target = $region181
    $region180: #{dueling_dqn_forward.1} parent=1 // pred_region
      %s3799 = ssub.s32 32, 32
      %3800 = vsyncadd [#allocation9], %s3799
      %s3802 = sshll.u32 [#allocation8], 4
      %s3803 = int_to_ptr.vmem [resolvable:$true] %s3802
      %3805 = dma.vmem_to_hbm [thread:$0]  %s3803, 32, %s14, [#allocation9]
    $region181: #{dueling_dqn_forward.1} parent=1 // pred_fallthru
      _
    // Predicated region
    $region182: #{dueling_dqn_forward.1} parent=1 // pred_check
      _
    $region183: #{dueling_dqn_forward.1} parent=1 // pred_check_branch
      %3807 = sbr.rel (0) target = $region185
    $region184: #{dueling_dqn_forward.1} parent=1 // pred_region
      %3808 = dma.done [#allocation9], 32
    $region185: #{dueling_dqn_forward.1} parent=1 // pred_fallthru
      _
    %3809 = vsyncpa [#allocation9], 1
  %3810 = vsyncmov [#allocation7]
  %s3811 = vpop.sfrf %3810
  %p3812 = scmp.eq.s32.totalorder %s3811, 0
  %p3813 = pneg %p3812
  %3815 = shalt.err (%p3813)
  %s3816 = scalar_lea.sflag [#allocation7], 1
  %3817 = vsyncmov %s3816
  %s3818 = vpop.sfrf %3817
  %p3819 = scmp.eq.s32.totalorder %s3818, 0
  %p3820 = pneg %p3819
  %3822 = shalt.err (%p3820)
  %s3823 = scalar_lea.sflag [#allocation7], 2
  %3824 = vsyncmov %s3823
  %s3825 = vpop.sfrf %3824
  %p3826 = scmp.eq.s32.totalorder %s3825, 0
  %p3827 = pneg %p3826
  %3829 = shalt.err (%p3827)
  %s3830 = scalar_lea.sflag [#allocation7], 3
  %3831 = vsyncmov %s3830
  %s3832 = vpop.sfrf %3831
  %p3833 = scmp.eq.s32.totalorder %s3832, 0
  %p3834 = pneg %p3833
  %3836 = shalt.err (%p3834)

</llo_original>
